<compile_context>
chip_gen: v5e
topology: v5e:2x2
jax: 0.10.0
libtpu: 0.0.40
codegen_flags: <defaults>
</compile_context>

<pallas_src>
import functools

import numpy as np
import jax
import jax.numpy as jnp
from jax.experimental import pallas as pl
from jax.experimental.pallas import tpu as pltpu

GP = 32                      # lanes per gate inside the compact gate slab (>= H)
NGATES = 4
GATE_LANES = NGATES * GP     # = 128: one vreg / one MXU weight tile wide
BATCH_PAD = 8                # f32 sublane quantum


def _sigmoid(z):
    # tanh-based sigmoid: lives on the EUP, no VPU divide, stable for large |z|.
    return 0.5 * (jnp.tanh(0.5 * z) + 1.0)


def make_lstm_kernel(batch: int, batch_pad: int, seq_len: int, gp: int):
    B, BP, S = batch, batch_pad, seq_len

    def kernel(tok_ref,                      # SMEM (B, S) int32 token ids
               embed_ref,                    # HBM  (vocab, E) f32 (pl.ANY)
               wih0_ref, whh0_ref, b0_ref,   # (E,128) bf16, (32,128) bf16, (1,128) f32
               wih1_ref, whh1_ref, b1_ref,   # (32,128) bf16, (32,128) bf16, (1,128) f32
               wlin_ref, blin_ref,           # (32,C) bf16, (1,C) f32
               out_ref,                      # (BP, C) f32
               x_buf,                        # VMEM scratch (S*BP, E) f32
               h0_buf,                       # VMEM scratch (S*BP, GP) f32
               sems):                        # DMA sems (S*B,)
        # ---- Fused embedding gather: DMA only the S*B needed rows from HBM,
        #      laid out time-major so each step's BP rows are one aligned block.
        copies = []
        for t in range(S):
            for b in range(B):
                tok = tok_ref[b, t]
                row = t * BP + b
                cp = pltpu.make_async_copy(
                    embed_ref.at[pl.ds(tok, 1), :],
                    x_buf.at[pl.ds(row, 1), :],
                    sems.at[t * B + b])
                cp.start()
                copies.append(cp)
        for cp in copies:
            cp.wait()
        # Rows t*BP + b for b in [B, BP) are never written (stale VMEM): every
        # op below is row-wise independent, and the wrapper slices them away.

        whh0 = whh0_ref[...]
        whh1 = whh1_ref[...]

        # ---- Hoisted, batched input projection for layer 0 (bias folded once).
        gin0 = jnp.dot(x_buf[...].astype(jnp.bfloat16), wih0_ref[...],
                       preferred_element_type=jnp.float32) + b0_ref[...]  # (S*BP,128)

        def gates(g):
            # compact gate slabs, torch gate order i, f, g, o (gp lanes each)
            i_g = _sigmoid(g[:, 0 * gp:1 * gp])
            f_g = _sigmoid(g[:, 1 * gp:2 * gp])
            g_g = jnp.tanh(g[:, 2 * gp:3 * gp])
            o_g = _sigmoid(g[:, 3 * gp:4 * gp])
            return i_g, f_g, g_g, o_g

        # ---- Layer 0 recurrence: only the (BP,32)@(32,128) recurrent matmul
        #      stays on the serialized path; hidden states go straight into a
        #      pre-shaped VMEM scratch (no concatenate).
        h = jnp.zeros((BP, gp), jnp.float32)
        c = jnp.zeros((BP, gp), jnp.float32)
        for t in range(S):
            g = gin0[t * BP:(t + 1) * BP, :] + jnp.dot(
                h.astype(jnp.bfloat16), whh0, preferred_element_type=jnp.float32)
            i_g, f_g, g_g, o_g = gates(g)
            c = f_g * c + i_g * g_g
            h = o_g * jnp.tanh(c)
            h0_buf[t * BP:(t + 1) * BP, :] = h

        # ---- Hoisted, batched input projection for layer 1.
        gin1 = jnp.dot(h0_buf[...].astype(jnp.bfloat16), wih1_ref[...],
                       preferred_element_type=jnp.float32) + b1_ref[...]  # (S*BP,128)

        # ---- Layer 1 recurrence; only the last timestep's hidden state is used.
        h = jnp.zeros((BP, gp), jnp.float32)
        c = jnp.zeros((BP, gp), jnp.float32)
        for t in range(S):
            g = gin1[t * BP:(t + 1) * BP, :] + jnp.dot(
                h.astype(jnp.bfloat16), whh1, preferred_element_type=jnp.float32)
            i_g, f_g, g_g, o_g = gates(g)
            c = f_g * c + i_g * g_g
            h = o_g * jnp.tanh(c)

        # ---- out[:, -1] -> (Dropout no-op) -> Linear -> LogSoftmax(dim=1)
        logits = jnp.dot(h.astype(jnp.bfloat16), wlin_ref[...],
                         preferred_element_type=jnp.float32) + blin_ref[...]  # (BP,C)
        m = jnp.max(logits, axis=1, keepdims=True)
        z = logits - m
        lse = jnp.log(jnp.sum(jnp.exp(z), axis=1, keepdims=True))
        out_ref[...] = z - lse

    return kernel


# ---------------------------------------------------------------------------
# Parameter construction / packing (wrapper-side layout plumbing, done once)
# ---------------------------------------------------------------------------
def init_params(key, vocab_size, E, H, C):
    ks = jax.random.split(key, 12)

    def u(k, shape, scale=0.1):
        return jax.random.uniform(k, shape, jnp.float32, -scale, scale)

    return {
        "embed": u(ks[0], (vocab_size, E), 1.0),
        # stored input-major (in_features, 4H) i.e. the transpose of torch's
        # weight_ih_l*/weight_hh_l*; gate order i, f, g, o
        "wih0": u(ks[1], (E, 4 * H)),
        "whh0": u(ks[2], (H, 4 * H)),
        "b0":   u(ks[3], (1, 4 * H)) + u(ks[4], (1, 4 * H)),   # b_ih + b_hh
        "wih1": u(ks[5], (H, 4 * H)),
        "whh1": u(ks[6], (H, 4 * H)),
        "b1":   u(ks[7], (1, 4 * H)) + u(ks[8], (1, 4 * H)),
        "wlin": u(ks[9], (H, C)),
        "blin": u(ks[10], (1, C)),
    }


def _pack_gate_cols(w, H):
    # (din, 4H) -> (din, 128): gate k placed at lanes [k*GP, k*GP + H), rest 0
    out = jnp.zeros((w.shape[0], GATE_LANES), w.dtype)
    for k in range(NGATES):
        out = out.at[:, k * GP:k * GP + H].set(w[:, k * H:(k + 1) * H])
    return out


def _pad_rows(w, rows):
    out = jnp.zeros((rows, w.shape[1]), w.dtype)
    return out.at[:w.shape[0]].set(w)


def pack_params(p, H):
    bf = lambda x: x.astype(jnp.bfloat16)   # weights in bf16, biases stay f32
    return {
        "wih0": bf(_pack_gate_cols(p["wih0"], H)),                   # (E, 128)
        "whh0": bf(_pack_gate_cols(_pad_rows(p["whh0"], GP), H)),    # (32, 128)
        "b0":   _pack_gate_cols(p["b0"], H),                         # (1, 128)
        "wih1": bf(_pack_gate_cols(_pad_rows(p["wih1"], GP), H)),    # (32, 128)
        "whh1": bf(_pack_gate_cols(_pad_rows(p["whh1"], GP), H)),    # (32, 128)
        "b1":   _pack_gate_cols(p["b1"], H),                         # (1, 128)
        "wlin": bf(_pad_rows(p["wlin"], GP)),                        # (32, C)
        "blin": p["blin"],                                           # (1, C)
    }


@functools.partial(jax.jit, static_argnames=("pad_size", "batch_size"))
def lstm_forward(tokens, embed_table, packed, pad_size, batch_size):
    S, B, BP = pad_size, batch_size, BATCH_PAD
    E = embed_table.shape[1]
    C = packed["blin"].shape[1]

    kernel = make_lstm_kernel(B, BP, S, GP)
    args = [
        tokens, embed_table,
        packed["wih0"], packed["whh0"], packed["b0"],
        packed["wih1"], packed["whh1"], packed["b1"],
        packed["wlin"], packed["blin"],
    ]
    in_specs = (
        [pl.BlockSpec(memory_space=pltpu.MemorySpace.SMEM),   # tokens -> SMEM
         pl.BlockSpec(memory_space=pl.ANY)]                   # embed table stays in HBM
        + [pl.BlockSpec(memory_space=pltpu.MemorySpace.VMEM)] * 8
    )

    # Advisory cost so XLA schedules surrounding work around this latency-bound call.
    sb = S * BP
    flops = (2 * sb * E * GATE_LANES          # layer-0 input projection
             + 2 * sb * GP * GATE_LANES       # layer-0 recurrence (all steps)
             + 2 * sb * GP * GATE_LANES       # layer-1 input projection
             + 2 * sb * GP * GATE_LANES       # layer-1 recurrence (all steps)
             + 2 * BP * GP * C)               # classifier
    transcendentals = 2 * S * BP * 5 * GP + BP * C
    weight_bytes = sum(int(np.prod(v.shape)) * v.dtype.itemsize for v in packed.values())
    bytes_accessed = (weight_bytes
                      + B * S * (E * 4 + 4)   # gathered embedding rows + token ids
                      + BP * C * 4)

    out = pl.pallas_call(
        kernel,
        out_shape=jax.ShapeDtypeStruct((BP, C), jnp.float32),
        in_specs=in_specs,
        out_specs=pl.BlockSpec(memory_space=pltpu.MemorySpace.VMEM),
        scratch_shapes=[
            pltpu.VMEM((S * BP, E), jnp.float32),    # gathered, time-major embeddings
            pltpu.VMEM((S * BP, GP), jnp.float32),   # layer-0 hidden states
            pltpu.SemaphoreType.DMA((S * B,)),       # one sem per gather DMA
        ],
        compiler_params=pltpu.CompilerParams(vmem_limit_bytes=4 * 1024 * 1024),
        cost_estimate=pl.CostEstimate(flops=flops,
                                      transcendentals=transcendentals,
                                      bytes_accessed=bytes_accessed),
    )(*args)
    return out[:batch_size]   # drop the sublane-padding rows


if __name__ == "__main__":
    BATCH, PAD = 2, 8
    EMB, HID, CLASSES = 64, 10, 8
    VOCAB = 26 ** 3 + 2

    key = jax.random.PRNGKey(0)
    k_in, k_par = jax.random.split(key)

    tokens = jax.random.randint(k_in, (BATCH, PAD), 0, VOCAB, dtype=jnp.int32)
    params = init_params(k_par, VOCAB, EMB, HID, CLASSES)
    packed = pack_params(params, HID)

    out = lstm_forward(tokens, params["embed"], packed, PAD, BATCH)
    out = jax.block_until_ready(out)

    assert out.shape == (BATCH, CLASSES), out.shape
    row_prob_sums = np.exp(np.asarray(out)).sum(axis=1)
    assert np.allclose(row_prob_sums, 1.0, atol=1e-3), row_prob_sums
    print("KERNEL_OK")
</pallas_src>

<mosaic_0001>
module attributes {stable_mosaic.version = 11 : i64} {
  func.func @kernel(%arg0: memref<2x8xi32, #tpu.memory_space<smem>>, %arg1: memref<17578x64xf32, #tpu.memory_space<any>>, %arg2: memref<64x128xbf16, #tpu.memory_space<vmem>>, %arg3: memref<32x128xbf16, #tpu.memory_space<vmem>>, %arg4: memref<1x128xf32, #tpu.memory_space<vmem>>, %arg5: memref<32x128xbf16, #tpu.memory_space<vmem>>, %arg6: memref<32x128xbf16, #tpu.memory_space<vmem>>, %arg7: memref<1x128xf32, #tpu.memory_space<vmem>>, %arg8: memref<32x8xbf16, #tpu.memory_space<vmem>>, %arg9: memref<1x8xf32, #tpu.memory_space<vmem>>, %arg10: memref<8x8xf32, #tpu.memory_space<vmem>>, %arg11: memref<64x64xf32, #tpu.memory_space<vmem>>, %arg12: memref<64x32xf32, #tpu.memory_space<vmem>>, %arg13: memref<16x!tpu.dma_semaphore, #tpu.memory_space<semaphore_mem>>) attributes {dimension_semantics = [], scalar_prefetch = 0 : i64, scratch_operands = 3 : i64, tpu.core_type = #tpu.core_type<tc>} {
    %c0 = arith.constant 0 : index
    %c0_0 = arith.constant 0 : index
    %0 = memref.load %arg0[%c0, %c0_0] : memref<2x8xi32, #tpu.memory_space<smem>>
    %c0_i32 = arith.constant 0 : i32
    %c0_i32_1 = arith.constant 0 : i32
    %1 = tpu.memref_slice %arg1[%0, %c0_i32_1] : memref<17578x64xf32, #tpu.memory_space<any>> -> memref<1x64xf32, #tpu.memory_space<any>>
    %c0_i32_2 = arith.constant 0 : i32
    %c0_i32_3 = arith.constant 0 : i32
    %2 = tpu.memref_slice %arg11[%c0_i32_2, %c0_i32_3] : memref<64x64xf32, #tpu.memory_space<vmem>> -> memref<1x64xf32, #tpu.memory_space<vmem>>
    %3 = tpu.memref_slice %arg13[%c0_i32] : memref<16x!tpu.dma_semaphore, #tpu.memory_space<semaphore_mem>> -> memref<1x!tpu.dma_semaphore, #tpu.memory_space<semaphore_mem>>
    %4 = tpu.memref_squeeze %3 : memref<1x!tpu.dma_semaphore, #tpu.memory_space<semaphore_mem>> -> memref<!tpu.dma_semaphore, #tpu.memory_space<semaphore_mem>>
    tpu.enqueue_dma source(%1 : memref<1x64xf32, #tpu.memory_space<any>>) target(%2 : memref<1x64xf32, #tpu.memory_space<vmem>>) target_semaphore(%4 : memref<!tpu.dma_semaphore, #tpu.memory_space<semaphore_mem>>)
    %c1 = arith.constant 1 : index
    %c0_4 = arith.constant 0 : index
    %5 = memref.load %arg0[%c1, %c0_4] : memref<2x8xi32, #tpu.memory_space<smem>>
    %c1_i32 = arith.constant 1 : i32
    %c0_i32_5 = arith.constant 0 : i32
    %6 = tpu.memref_slice %arg1[%5, %c0_i32_5] : memref<17578x64xf32, #tpu.memory_space<any>> -> memref<1x64xf32, #tpu.memory_space<any>>
    %c1_i32_6 = arith.constant 1 : i32
    %c0_i32_7 = arith.constant 0 : i32
    %7 = tpu.memref_slice %arg11[%c1_i32_6, %c0_i32_7] : memref<64x64xf32, #tpu.memory_space<vmem>> -> memref<1x64xf32, #tpu.memory_space<vmem>>
    %8 = tpu.memref_slice %arg13[%c1_i32] : memref<16x!tpu.dma_semaphore, #tpu.memory_space<semaphore_mem>> -> memref<1x!tpu.dma_semaphore, #tpu.memory_space<semaphore_mem>>
    %9 = tpu.memref_squeeze %8 : memref<1x!tpu.dma_semaphore, #tpu.memory_space<semaphore_mem>> -> memref<!tpu.dma_semaphore, #tpu.memory_space<semaphore_mem>>
    tpu.enqueue_dma source(%6 : memref<1x64xf32, #tpu.memory_space<any>>) target(%7 : memref<1x64xf32, #tpu.memory_space<vmem>>) target_semaphore(%9 : memref<!tpu.dma_semaphore, #tpu.memory_space<semaphore_mem>>)
    %c0_8 = arith.constant 0 : index
    %c1_9 = arith.constant 1 : index
    %10 = memref.load %arg0[%c0_8, %c1_9] : memref<2x8xi32, #tpu.memory_space<smem>>
    %c2_i32 = arith.constant 2 : i32
    %c0_i32_10 = arith.constant 0 : i32
    %11 = tpu.memref_slice %arg1[%10, %c0_i32_10] : memref<17578x64xf32, #tpu.memory_space<any>> -> memref<1x64xf32, #tpu.memory_space<any>>
    %c8_i32 = arith.constant 8 : i32
    %c0_i32_11 = arith.constant 0 : i32
    %12 = tpu.memref_slice %arg11[%c8_i32, %c0_i32_11] : memref<64x64xf32, #tpu.memory_space<vmem>> -> memref<1x64xf32, #tpu.memory_space<vmem>>
    %13 = tpu.memref_slice %arg13[%c2_i32] : memref<16x!tpu.dma_semaphore, #tpu.memory_space<semaphore_mem>> -> memref<1x!tpu.dma_semaphore, #tpu.memory_space<semaphore_mem>>
    %14 = tpu.memref_squeeze %13 : memref<1x!tpu.dma_semaphore, #tpu.memory_space<semaphore_mem>> -> memref<!tpu.dma_semaphore, #tpu.memory_space<semaphore_mem>>
    tpu.enqueue_dma source(%11 : memref<1x64xf32, #tpu.memory_space<any>>) target(%12 : memref<1x64xf32, #tpu.memory_space<vmem>>) target_semaphore(%14 : memref<!tpu.dma_semaphore, #tpu.memory_space<semaphore_mem>>)
    %c1_12 = arith.constant 1 : index
    %c1_13 = arith.constant 1 : index
    %15 = memref.load %arg0[%c1_12, %c1_13] : memref<2x8xi32, #tpu.memory_space<smem>>
    %c3_i32 = arith.constant 3 : i32
    %c0_i32_14 = arith.constant 0 : i32
    %16 = tpu.memref_slice %arg1[%15, %c0_i32_14] : memref<17578x64xf32, #tpu.memory_space<any>> -> memref<1x64xf32, #tpu.memory_space<any>>
    %c9_i32 = arith.constant 9 : i32
    %c0_i32_15 = arith.constant 0 : i32
    %17 = tpu.memref_slice %arg11[%c9_i32, %c0_i32_15] : memref<64x64xf32, #tpu.memory_space<vmem>> -> memref<1x64xf32, #tpu.memory_space<vmem>>
    %18 = tpu.memref_slice %arg13[%c3_i32] : memref<16x!tpu.dma_semaphore, #tpu.memory_space<semaphore_mem>> -> memref<1x!tpu.dma_semaphore, #tpu.memory_space<semaphore_mem>>
    %19 = tpu.memref_squeeze %18 : memref<1x!tpu.dma_semaphore, #tpu.memory_space<semaphore_mem>> -> memref<!tpu.dma_semaphore, #tpu.memory_space<semaphore_mem>>
    tpu.enqueue_dma source(%16 : memref<1x64xf32, #tpu.memory_space<any>>) target(%17 : memref<1x64xf32, #tpu.memory_space<vmem>>) target_semaphore(%19 : memref<!tpu.dma_semaphore, #tpu.memory_space<semaphore_mem>>)
    %c0_16 = arith.constant 0 : index
    %c2 = arith.constant 2 : index
    %20 = memref.load %arg0[%c0_16, %c2] : memref<2x8xi32, #tpu.memory_space<smem>>
    %c4_i32 = arith.constant 4 : i32
    %c0_i32_17 = arith.constant 0 : i32
    %21 = tpu.memref_slice %arg1[%20, %c0_i32_17] : memref<17578x64xf32, #tpu.memory_space<any>> -> memref<1x64xf32, #tpu.memory_space<any>>
    %c16_i32 = arith.constant 16 : i32
    %c0_i32_18 = arith.constant 0 : i32
    %22 = tpu.memref_slice %arg11[%c16_i32, %c0_i32_18] : memref<64x64xf32, #tpu.memory_space<vmem>> -> memref<1x64xf32, #tpu.memory_space<vmem>>
    %23 = tpu.memref_slice %arg13[%c4_i32] : memref<16x!tpu.dma_semaphore, #tpu.memory_space<semaphore_mem>> -> memref<1x!tpu.dma_semaphore, #tpu.memory_space<semaphore_mem>>
    %24 = tpu.memref_squeeze %23 : memref<1x!tpu.dma_semaphore, #tpu.memory_space<semaphore_mem>> -> memref<!tpu.dma_semaphore, #tpu.memory_space<semaphore_mem>>
    tpu.enqueue_dma source(%21 : memref<1x64xf32, #tpu.memory_space<any>>) target(%22 : memref<1x64xf32, #tpu.memory_space<vmem>>) target_semaphore(%24 : memref<!tpu.dma_semaphore, #tpu.memory_space<semaphore_mem>>)
    %c1_19 = arith.constant 1 : index
    %c2_20 = arith.constant 2 : index
    %25 = memref.load %arg0[%c1_19, %c2_20] : memref<2x8xi32, #tpu.memory_space<smem>>
    %c5_i32 = arith.constant 5 : i32
    %c0_i32_21 = arith.constant 0 : i32
    %26 = tpu.memref_slice %arg1[%25, %c0_i32_21] : memref<17578x64xf32, #tpu.memory_space<any>> -> memref<1x64xf32, #tpu.memory_space<any>>
    %c17_i32 = arith.constant 17 : i32
    %c0_i32_22 = arith.constant 0 : i32
    %27 = tpu.memref_slice %arg11[%c17_i32, %c0_i32_22] : memref<64x64xf32, #tpu.memory_space<vmem>> -> memref<1x64xf32, #tpu.memory_space<vmem>>
    %28 = tpu.memref_slice %arg13[%c5_i32] : memref<16x!tpu.dma_semaphore, #tpu.memory_space<semaphore_mem>> -> memref<1x!tpu.dma_semaphore, #tpu.memory_space<semaphore_mem>>
    %29 = tpu.memref_squeeze %28 : memref<1x!tpu.dma_semaphore, #tpu.memory_space<semaphore_mem>> -> memref<!tpu.dma_semaphore, #tpu.memory_space<semaphore_mem>>
    tpu.enqueue_dma source(%26 : memref<1x64xf32, #tpu.memory_space<any>>) target(%27 : memref<1x64xf32, #tpu.memory_space<vmem>>) target_semaphore(%29 : memref<!tpu.dma_semaphore, #tpu.memory_space<semaphore_mem>>)
    %c0_23 = arith.constant 0 : index
    %c3 = arith.constant 3 : index
    %30 = memref.load %arg0[%c0_23, %c3] : memref<2x8xi32, #tpu.memory_space<smem>>
    %c6_i32 = arith.constant 6 : i32
    %c0_i32_24 = arith.constant 0 : i32
    %31 = tpu.memref_slice %arg1[%30, %c0_i32_24] : memref<17578x64xf32, #tpu.memory_space<any>> -> memref<1x64xf32, #tpu.memory_space<any>>
    %c24_i32 = arith.constant 24 : i32
    %c0_i32_25 = arith.constant 0 : i32
    %32 = tpu.memref_slice %arg11[%c24_i32, %c0_i32_25] : memref<64x64xf32, #tpu.memory_space<vmem>> -> memref<1x64xf32, #tpu.memory_space<vmem>>
    %33 = tpu.memref_slice %arg13[%c6_i32] : memref<16x!tpu.dma_semaphore, #tpu.memory_space<semaphore_mem>> -> memref<1x!tpu.dma_semaphore, #tpu.memory_space<semaphore_mem>>
    %34 = tpu.memref_squeeze %33 : memref<1x!tpu.dma_semaphore, #tpu.memory_space<semaphore_mem>> -> memref<!tpu.dma_semaphore, #tpu.memory_space<semaphore_mem>>
    tpu.enqueue_dma source(%31 : memref<1x64xf32, #tpu.memory_space<any>>) target(%32 : memref<1x64xf32, #tpu.memory_space<vmem>>) target_semaphore(%34 : memref<!tpu.dma_semaphore, #tpu.memory_space<semaphore_mem>>)
    %c1_26 = arith.constant 1 : index
    %c3_27 = arith.constant 3 : index
    %35 = memref.load %arg0[%c1_26, %c3_27] : memref<2x8xi32, #tpu.memory_space<smem>>
    %c7_i32 = arith.constant 7 : i32
    %c0_i32_28 = arith.constant 0 : i32
    %36 = tpu.memref_slice %arg1[%35, %c0_i32_28] : memref<17578x64xf32, #tpu.memory_space<any>> -> memref<1x64xf32, #tpu.memory_space<any>>
    %c25_i32 = arith.constant 25 : i32
    %c0_i32_29 = arith.constant 0 : i32
    %37 = tpu.memref_slice %arg11[%c25_i32, %c0_i32_29] : memref<64x64xf32, #tpu.memory_space<vmem>> -> memref<1x64xf32, #tpu.memory_space<vmem>>
    %38 = tpu.memref_slice %arg13[%c7_i32] : memref<16x!tpu.dma_semaphore, #tpu.memory_space<semaphore_mem>> -> memref<1x!tpu.dma_semaphore, #tpu.memory_space<semaphore_mem>>
    %39 = tpu.memref_squeeze %38 : memref<1x!tpu.dma_semaphore, #tpu.memory_space<semaphore_mem>> -> memref<!tpu.dma_semaphore, #tpu.memory_space<semaphore_mem>>
    tpu.enqueue_dma source(%36 : memref<1x64xf32, #tpu.memory_space<any>>) target(%37 : memref<1x64xf32, #tpu.memory_space<vmem>>) target_semaphore(%39 : memref<!tpu.dma_semaphore, #tpu.memory_space<semaphore_mem>>)
    %c0_30 = arith.constant 0 : index
    %c4 = arith.constant 4 : index
    %40 = memref.load %arg0[%c0_30, %c4] : memref<2x8xi32, #tpu.memory_space<smem>>
    %c8_i32_31 = arith.constant 8 : i32
    %c0_i32_32 = arith.constant 0 : i32
    %41 = tpu.memref_slice %arg1[%40, %c0_i32_32] : memref<17578x64xf32, #tpu.memory_space<any>> -> memref<1x64xf32, #tpu.memory_space<any>>
    %c32_i32 = arith.constant 32 : i32
    %c0_i32_33 = arith.constant 0 : i32
    %42 = tpu.memref_slice %arg11[%c32_i32, %c0_i32_33] : memref<64x64xf32, #tpu.memory_space<vmem>> -> memref<1x64xf32, #tpu.memory_space<vmem>>
    %43 = tpu.memref_slice %arg13[%c8_i32_31] : memref<16x!tpu.dma_semaphore, #tpu.memory_space<semaphore_mem>> -> memref<1x!tpu.dma_semaphore, #tpu.memory_space<semaphore_mem>>
    %44 = tpu.memref_squeeze %43 : memref<1x!tpu.dma_semaphore, #tpu.memory_space<semaphore_mem>> -> memref<!tpu.dma_semaphore, #tpu.memory_space<semaphore_mem>>
    tpu.enqueue_dma source(%41 : memref<1x64xf32, #tpu.memory_space<any>>) target(%42 : memref<1x64xf32, #tpu.memory_space<vmem>>) target_semaphore(%44 : memref<!tpu.dma_semaphore, #tpu.memory_space<semaphore_mem>>)
    %c1_34 = arith.constant 1 : index
    %c4_35 = arith.constant 4 : index
    %45 = memref.load %arg0[%c1_34, %c4_35] : memref<2x8xi32, #tpu.memory_space<smem>>
    %c9_i32_36 = arith.constant 9 : i32
    %c0_i32_37 = arith.constant 0 : i32
    %46 = tpu.memref_slice %arg1[%45, %c0_i32_37] : memref<17578x64xf32, #tpu.memory_space<any>> -> memref<1x64xf32, #tpu.memory_space<any>>
    %c33_i32 = arith.constant 33 : i32
    %c0_i32_38 = arith.constant 0 : i32
    %47 = tpu.memref_slice %arg11[%c33_i32, %c0_i32_38] : memref<64x64xf32, #tpu.memory_space<vmem>> -> memref<1x64xf32, #tpu.memory_space<vmem>>
    %48 = tpu.memref_slice %arg13[%c9_i32_36] : memref<16x!tpu.dma_semaphore, #tpu.memory_space<semaphore_mem>> -> memref<1x!tpu.dma_semaphore, #tpu.memory_space<semaphore_mem>>
    %49 = tpu.memref_squeeze %48 : memref<1x!tpu.dma_semaphore, #tpu.memory_space<semaphore_mem>> -> memref<!tpu.dma_semaphore, #tpu.memory_space<semaphore_mem>>
    tpu.enqueue_dma source(%46 : memref<1x64xf32, #tpu.memory_space<any>>) target(%47 : memref<1x64xf32, #tpu.memory_space<vmem>>) target_semaphore(%49 : memref<!tpu.dma_semaphore, #tpu.memory_space<semaphore_mem>>)
    %c0_39 = arith.constant 0 : index
    %c5 = arith.constant 5 : index
    %50 = memref.load %arg0[%c0_39, %c5] : memref<2x8xi32, #tpu.memory_space<smem>>
    %c10_i32 = arith.constant 10 : i32
    %c0_i32_40 = arith.constant 0 : i32
    %51 = tpu.memref_slice %arg1[%50, %c0_i32_40] : memref<17578x64xf32, #tpu.memory_space<any>> -> memref<1x64xf32, #tpu.memory_space<any>>
    %c40_i32 = arith.constant 40 : i32
    %c0_i32_41 = arith.constant 0 : i32
    %52 = tpu.memref_slice %arg11[%c40_i32, %c0_i32_41] : memref<64x64xf32, #tpu.memory_space<vmem>> -> memref<1x64xf32, #tpu.memory_space<vmem>>
    %53 = tpu.memref_slice %arg13[%c10_i32] : memref<16x!tpu.dma_semaphore, #tpu.memory_space<semaphore_mem>> -> memref<1x!tpu.dma_semaphore, #tpu.memory_space<semaphore_mem>>
    %54 = tpu.memref_squeeze %53 : memref<1x!tpu.dma_semaphore, #tpu.memory_space<semaphore_mem>> -> memref<!tpu.dma_semaphore, #tpu.memory_space<semaphore_mem>>
    tpu.enqueue_dma source(%51 : memref<1x64xf32, #tpu.memory_space<any>>) target(%52 : memref<1x64xf32, #tpu.memory_space<vmem>>) target_semaphore(%54 : memref<!tpu.dma_semaphore, #tpu.memory_space<semaphore_mem>>)
    %c1_42 = arith.constant 1 : index
    %c5_43 = arith.constant 5 : index
    %55 = memref.load %arg0[%c1_42, %c5_43] : memref<2x8xi32, #tpu.memory_space<smem>>
    %c11_i32 = arith.constant 11 : i32
    %c0_i32_44 = arith.constant 0 : i32
    %56 = tpu.memref_slice %arg1[%55, %c0_i32_44] : memref<17578x64xf32, #tpu.memory_space<any>> -> memref<1x64xf32, #tpu.memory_space<any>>
    %c41_i32 = arith.constant 41 : i32
    %c0_i32_45 = arith.constant 0 : i32
    %57 = tpu.memref_slice %arg11[%c41_i32, %c0_i32_45] : memref<64x64xf32, #tpu.memory_space<vmem>> -> memref<1x64xf32, #tpu.memory_space<vmem>>
    %58 = tpu.memref_slice %arg13[%c11_i32] : memref<16x!tpu.dma_semaphore, #tpu.memory_space<semaphore_mem>> -> memref<1x!tpu.dma_semaphore, #tpu.memory_space<semaphore_mem>>
    %59 = tpu.memref_squeeze %58 : memref<1x!tpu.dma_semaphore, #tpu.memory_space<semaphore_mem>> -> memref<!tpu.dma_semaphore, #tpu.memory_space<semaphore_mem>>
    tpu.enqueue_dma source(%56 : memref<1x64xf32, #tpu.memory_space<any>>) target(%57 : memref<1x64xf32, #tpu.memory_space<vmem>>) target_semaphore(%59 : memref<!tpu.dma_semaphore, #tpu.memory_space<semaphore_mem>>)
    %c0_46 = arith.constant 0 : index
    %c6 = arith.constant 6 : index
    %60 = memref.load %arg0[%c0_46, %c6] : memref<2x8xi32, #tpu.memory_space<smem>>
    %c12_i32 = arith.constant 12 : i32
    %c0_i32_47 = arith.constant 0 : i32
    %61 = tpu.memref_slice %arg1[%60, %c0_i32_47] : memref<17578x64xf32, #tpu.memory_space<any>> -> memref<1x64xf32, #tpu.memory_space<any>>
    %c48_i32 = arith.constant 48 : i32
    %c0_i32_48 = arith.constant 0 : i32
    %62 = tpu.memref_slice %arg11[%c48_i32, %c0_i32_48] : memref<64x64xf32, #tpu.memory_space<vmem>> -> memref<1x64xf32, #tpu.memory_space<vmem>>
    %63 = tpu.memref_slice %arg13[%c12_i32] : memref<16x!tpu.dma_semaphore, #tpu.memory_space<semaphore_mem>> -> memref<1x!tpu.dma_semaphore, #tpu.memory_space<semaphore_mem>>
    %64 = tpu.memref_squeeze %63 : memref<1x!tpu.dma_semaphore, #tpu.memory_space<semaphore_mem>> -> memref<!tpu.dma_semaphore, #tpu.memory_space<semaphore_mem>>
    tpu.enqueue_dma source(%61 : memref<1x64xf32, #tpu.memory_space<any>>) target(%62 : memref<1x64xf32, #tpu.memory_space<vmem>>) target_semaphore(%64 : memref<!tpu.dma_semaphore, #tpu.memory_space<semaphore_mem>>)
    %c1_49 = arith.constant 1 : index
    %c6_50 = arith.constant 6 : index
    %65 = memref.load %arg0[%c1_49, %c6_50] : memref<2x8xi32, #tpu.memory_space<smem>>
    %c13_i32 = arith.constant 13 : i32
    %c0_i32_51 = arith.constant 0 : i32
    %66 = tpu.memref_slice %arg1[%65, %c0_i32_51] : memref<17578x64xf32, #tpu.memory_space<any>> -> memref<1x64xf32, #tpu.memory_space<any>>
    %c49_i32 = arith.constant 49 : i32
    %c0_i32_52 = arith.constant 0 : i32
    %67 = tpu.memref_slice %arg11[%c49_i32, %c0_i32_52] : memref<64x64xf32, #tpu.memory_space<vmem>> -> memref<1x64xf32, #tpu.memory_space<vmem>>
    %68 = tpu.memref_slice %arg13[%c13_i32] : memref<16x!tpu.dma_semaphore, #tpu.memory_space<semaphore_mem>> -> memref<1x!tpu.dma_semaphore, #tpu.memory_space<semaphore_mem>>
    %69 = tpu.memref_squeeze %68 : memref<1x!tpu.dma_semaphore, #tpu.memory_space<semaphore_mem>> -> memref<!tpu.dma_semaphore, #tpu.memory_space<semaphore_mem>>
    tpu.enqueue_dma source(%66 : memref<1x64xf32, #tpu.memory_space<any>>) target(%67 : memref<1x64xf32, #tpu.memory_space<vmem>>) target_semaphore(%69 : memref<!tpu.dma_semaphore, #tpu.memory_space<semaphore_mem>>)
    %c0_53 = arith.constant 0 : index
    %c7 = arith.constant 7 : index
    %70 = memref.load %arg0[%c0_53, %c7] : memref<2x8xi32, #tpu.memory_space<smem>>
    %c14_i32 = arith.constant 14 : i32
    %c0_i32_54 = arith.constant 0 : i32
    %71 = tpu.memref_slice %arg1[%70, %c0_i32_54] : memref<17578x64xf32, #tpu.memory_space<any>> -> memref<1x64xf32, #tpu.memory_space<any>>
    %c56_i32 = arith.constant 56 : i32
    %c0_i32_55 = arith.constant 0 : i32
    %72 = tpu.memref_slice %arg11[%c56_i32, %c0_i32_55] : memref<64x64xf32, #tpu.memory_space<vmem>> -> memref<1x64xf32, #tpu.memory_space<vmem>>
    %73 = tpu.memref_slice %arg13[%c14_i32] : memref<16x!tpu.dma_semaphore, #tpu.memory_space<semaphore_mem>> -> memref<1x!tpu.dma_semaphore, #tpu.memory_space<semaphore_mem>>
    %74 = tpu.memref_squeeze %73 : memref<1x!tpu.dma_semaphore, #tpu.memory_space<semaphore_mem>> -> memref<!tpu.dma_semaphore, #tpu.memory_space<semaphore_mem>>
    tpu.enqueue_dma source(%71 : memref<1x64xf32, #tpu.memory_space<any>>) target(%72 : memref<1x64xf32, #tpu.memory_space<vmem>>) target_semaphore(%74 : memref<!tpu.dma_semaphore, #tpu.memory_space<semaphore_mem>>)
    %c1_56 = arith.constant 1 : index
    %c7_57 = arith.constant 7 : index
    %75 = memref.load %arg0[%c1_56, %c7_57] : memref<2x8xi32, #tpu.memory_space<smem>>
    %c15_i32 = arith.constant 15 : i32
    %c0_i32_58 = arith.constant 0 : i32
    %76 = tpu.memref_slice %arg1[%75, %c0_i32_58] : memref<17578x64xf32, #tpu.memory_space<any>> -> memref<1x64xf32, #tpu.memory_space<any>>
    %c57_i32 = arith.constant 57 : i32
    %c0_i32_59 = arith.constant 0 : i32
    %77 = tpu.memref_slice %arg11[%c57_i32, %c0_i32_59] : memref<64x64xf32, #tpu.memory_space<vmem>> -> memref<1x64xf32, #tpu.memory_space<vmem>>
    %78 = tpu.memref_slice %arg13[%c15_i32] : memref<16x!tpu.dma_semaphore, #tpu.memory_space<semaphore_mem>> -> memref<1x!tpu.dma_semaphore, #tpu.memory_space<semaphore_mem>>
    %79 = tpu.memref_squeeze %78 : memref<1x!tpu.dma_semaphore, #tpu.memory_space<semaphore_mem>> -> memref<!tpu.dma_semaphore, #tpu.memory_space<semaphore_mem>>
    tpu.enqueue_dma source(%76 : memref<1x64xf32, #tpu.memory_space<any>>) target(%77 : memref<1x64xf32, #tpu.memory_space<vmem>>) target_semaphore(%79 : memref<!tpu.dma_semaphore, #tpu.memory_space<semaphore_mem>>)
    %c0_i32_60 = arith.constant 0 : i32
    %c0_i32_61 = arith.constant 0 : i32
    %80 = tpu.memref_slice %arg1[%0, %c0_i32_61] : memref<17578x64xf32, #tpu.memory_space<any>> -> memref<1x64xf32, #tpu.memory_space<any>>
    %c0_i32_62 = arith.constant 0 : i32
    %c0_i32_63 = arith.constant 0 : i32
    %81 = tpu.memref_slice %arg11[%c0_i32_62, %c0_i32_63] : memref<64x64xf32, #tpu.memory_space<vmem>> -> memref<1x64xf32, #tpu.memory_space<vmem>>
    %82 = tpu.memref_slice %arg13[%c0_i32_60] : memref<16x!tpu.dma_semaphore, #tpu.memory_space<semaphore_mem>> -> memref<1x!tpu.dma_semaphore, #tpu.memory_space<semaphore_mem>>
    %83 = tpu.memref_squeeze %82 : memref<1x!tpu.dma_semaphore, #tpu.memory_space<semaphore_mem>> -> memref<!tpu.dma_semaphore, #tpu.memory_space<semaphore_mem>>
    tpu.wait_dma2 semaphore(%83 : memref<!tpu.dma_semaphore, #tpu.memory_space<semaphore_mem>>) src(%80 : memref<1x64xf32, #tpu.memory_space<any>>) dst(%81 : memref<1x64xf32, #tpu.memory_space<vmem>>)
    %c1_i32_64 = arith.constant 1 : i32
    %c0_i32_65 = arith.constant 0 : i32
    %84 = tpu.memref_slice %arg1[%5, %c0_i32_65] : memref<17578x64xf32, #tpu.memory_space<any>> -> memref<1x64xf32, #tpu.memory_space<any>>
    %c1_i32_66 = arith.constant 1 : i32
    %c0_i32_67 = arith.constant 0 : i32
    %85 = tpu.memref_slice %arg11[%c1_i32_66, %c0_i32_67] : memref<64x64xf32, #tpu.memory_space<vmem>> -> memref<1x64xf32, #tpu.memory_space<vmem>>
    %86 = tpu.memref_slice %arg13[%c1_i32_64] : memref<16x!tpu.dma_semaphore, #tpu.memory_space<semaphore_mem>> -> memref<1x!tpu.dma_semaphore, #tpu.memory_space<semaphore_mem>>
    %87 = tpu.memref_squeeze %86 : memref<1x!tpu.dma_semaphore, #tpu.memory_space<semaphore_mem>> -> memref<!tpu.dma_semaphore, #tpu.memory_space<semaphore_mem>>
    tpu.wait_dma2 semaphore(%87 : memref<!tpu.dma_semaphore, #tpu.memory_space<semaphore_mem>>) src(%84 : memref<1x64xf32, #tpu.memory_space<any>>) dst(%85 : memref<1x64xf32, #tpu.memory_space<vmem>>)
    %c2_i32_68 = arith.constant 2 : i32
    %c0_i32_69 = arith.constant 0 : i32
    %88 = tpu.memref_slice %arg1[%10, %c0_i32_69] : memref<17578x64xf32, #tpu.memory_space<any>> -> memref<1x64xf32, #tpu.memory_space<any>>
    %c8_i32_70 = arith.constant 8 : i32
    %c0_i32_71 = arith.constant 0 : i32
    %89 = tpu.memref_slice %arg11[%c8_i32_70, %c0_i32_71] : memref<64x64xf32, #tpu.memory_space<vmem>> -> memref<1x64xf32, #tpu.memory_space<vmem>>
    %90 = tpu.memref_slice %arg13[%c2_i32_68] : memref<16x!tpu.dma_semaphore, #tpu.memory_space<semaphore_mem>> -> memref<1x!tpu.dma_semaphore, #tpu.memory_space<semaphore_mem>>
    %91 = tpu.memref_squeeze %90 : memref<1x!tpu.dma_semaphore, #tpu.memory_space<semaphore_mem>> -> memref<!tpu.dma_semaphore, #tpu.memory_space<semaphore_mem>>
    tpu.wait_dma2 semaphore(%91 : memref<!tpu.dma_semaphore, #tpu.memory_space<semaphore_mem>>) src(%88 : memref<1x64xf32, #tpu.memory_space<any>>) dst(%89 : memref<1x64xf32, #tpu.memory_space<vmem>>)
    %c3_i32_72 = arith.constant 3 : i32
    %c0_i32_73 = arith.constant 0 : i32
    %92 = tpu.memref_slice %arg1[%15, %c0_i32_73] : memref<17578x64xf32, #tpu.memory_space<any>> -> memref<1x64xf32, #tpu.memory_space<any>>
    %c9_i32_74 = arith.constant 9 : i32
    %c0_i32_75 = arith.constant 0 : i32
    %93 = tpu.memref_slice %arg11[%c9_i32_74, %c0_i32_75] : memref<64x64xf32, #tpu.memory_space<vmem>> -> memref<1x64xf32, #tpu.memory_space<vmem>>
    %94 = tpu.memref_slice %arg13[%c3_i32_72] : memref<16x!tpu.dma_semaphore, #tpu.memory_space<semaphore_mem>> -> memref<1x!tpu.dma_semaphore, #tpu.memory_space<semaphore_mem>>
    %95 = tpu.memref_squeeze %94 : memref<1x!tpu.dma_semaphore, #tpu.memory_space<semaphore_mem>> -> memref<!tpu.dma_semaphore, #tpu.memory_space<semaphore_mem>>
    tpu.wait_dma2 semaphore(%95 : memref<!tpu.dma_semaphore, #tpu.memory_space<semaphore_mem>>) src(%92 : memref<1x64xf32, #tpu.memory_space<any>>) dst(%93 : memref<1x64xf32, #tpu.memory_space<vmem>>)
    %c4_i32_76 = arith.constant 4 : i32
    %c0_i32_77 = arith.constant 0 : i32
    %96 = tpu.memref_slice %arg1[%20, %c0_i32_77] : memref<17578x64xf32, #tpu.memory_space<any>> -> memref<1x64xf32, #tpu.memory_space<any>>
    %c16_i32_78 = arith.constant 16 : i32
    %c0_i32_79 = arith.constant 0 : i32
    %97 = tpu.memref_slice %arg11[%c16_i32_78, %c0_i32_79] : memref<64x64xf32, #tpu.memory_space<vmem>> -> memref<1x64xf32, #tpu.memory_space<vmem>>
    %98 = tpu.memref_slice %arg13[%c4_i32_76] : memref<16x!tpu.dma_semaphore, #tpu.memory_space<semaphore_mem>> -> memref<1x!tpu.dma_semaphore, #tpu.memory_space<semaphore_mem>>
    %99 = tpu.memref_squeeze %98 : memref<1x!tpu.dma_semaphore, #tpu.memory_space<semaphore_mem>> -> memref<!tpu.dma_semaphore, #tpu.memory_space<semaphore_mem>>
    tpu.wait_dma2 semaphore(%99 : memref<!tpu.dma_semaphore, #tpu.memory_space<semaphore_mem>>) src(%96 : memref<1x64xf32, #tpu.memory_space<any>>) dst(%97 : memref<1x64xf32, #tpu.memory_space<vmem>>)
    %c5_i32_80 = arith.constant 5 : i32
    %c0_i32_81 = arith.constant 0 : i32
    %100 = tpu.memref_slice %arg1[%25, %c0_i32_81] : memref<17578x64xf32, #tpu.memory_space<any>> -> memref<1x64xf32, #tpu.memory_space<any>>
    %c17_i32_82 = arith.constant 17 : i32
    %c0_i32_83 = arith.constant 0 : i32
    %101 = tpu.memref_slice %arg11[%c17_i32_82, %c0_i32_83] : memref<64x64xf32, #tpu.memory_space<vmem>> -> memref<1x64xf32, #tpu.memory_space<vmem>>
    %102 = tpu.memref_slice %arg13[%c5_i32_80] : memref<16x!tpu.dma_semaphore, #tpu.memory_space<semaphore_mem>> -> memref<1x!tpu.dma_semaphore, #tpu.memory_space<semaphore_mem>>
    %103 = tpu.memref_squeeze %102 : memref<1x!tpu.dma_semaphore, #tpu.memory_space<semaphore_mem>> -> memref<!tpu.dma_semaphore, #tpu.memory_space<semaphore_mem>>
    tpu.wait_dma2 semaphore(%103 : memref<!tpu.dma_semaphore, #tpu.memory_space<semaphore_mem>>) src(%100 : memref<1x64xf32, #tpu.memory_space<any>>) dst(%101 : memref<1x64xf32, #tpu.memory_space<vmem>>)
    %c6_i32_84 = arith.constant 6 : i32
    %c0_i32_85 = arith.constant 0 : i32
    %104 = tpu.memref_slice %arg1[%30, %c0_i32_85] : memref<17578x64xf32, #tpu.memory_space<any>> -> memref<1x64xf32, #tpu.memory_space<any>>
    %c24_i32_86 = arith.constant 24 : i32
    %c0_i32_87 = arith.constant 0 : i32
    %105 = tpu.memref_slice %arg11[%c24_i32_86, %c0_i32_87] : memref<64x64xf32, #tpu.memory_space<vmem>> -> memref<1x64xf32, #tpu.memory_space<vmem>>
    %106 = tpu.memref_slice %arg13[%c6_i32_84] : memref<16x!tpu.dma_semaphore, #tpu.memory_space<semaphore_mem>> -> memref<1x!tpu.dma_semaphore, #tpu.memory_space<semaphore_mem>>
    %107 = tpu.memref_squeeze %106 : memref<1x!tpu.dma_semaphore, #tpu.memory_space<semaphore_mem>> -> memref<!tpu.dma_semaphore, #tpu.memory_space<semaphore_mem>>
    tpu.wait_dma2 semaphore(%107 : memref<!tpu.dma_semaphore, #tpu.memory_space<semaphore_mem>>) src(%104 : memref<1x64xf32, #tpu.memory_space<any>>) dst(%105 : memref<1x64xf32, #tpu.memory_space<vmem>>)
    %c7_i32_88 = arith.constant 7 : i32
    %c0_i32_89 = arith.constant 0 : i32
    %108 = tpu.memref_slice %arg1[%35, %c0_i32_89] : memref<17578x64xf32, #tpu.memory_space<any>> -> memref<1x64xf32, #tpu.memory_space<any>>
    %c25_i32_90 = arith.constant 25 : i32
    %c0_i32_91 = arith.constant 0 : i32
    %109 = tpu.memref_slice %arg11[%c25_i32_90, %c0_i32_91] : memref<64x64xf32, #tpu.memory_space<vmem>> -> memref<1x64xf32, #tpu.memory_space<vmem>>
    %110 = tpu.memref_slice %arg13[%c7_i32_88] : memref<16x!tpu.dma_semaphore, #tpu.memory_space<semaphore_mem>> -> memref<1x!tpu.dma_semaphore, #tpu.memory_space<semaphore_mem>>
    %111 = tpu.memref_squeeze %110 : memref<1x!tpu.dma_semaphore, #tpu.memory_space<semaphore_mem>> -> memref<!tpu.dma_semaphore, #tpu.memory_space<semaphore_mem>>
    tpu.wait_dma2 semaphore(%111 : memref<!tpu.dma_semaphore, #tpu.memory_space<semaphore_mem>>) src(%108 : memref<1x64xf32, #tpu.memory_space<any>>) dst(%109 : memref<1x64xf32, #tpu.memory_space<vmem>>)
    %c8_i32_92 = arith.constant 8 : i32
    %c0_i32_93 = arith.constant 0 : i32
    %112 = tpu.memref_slice %arg1[%40, %c0_i32_93] : memref<17578x64xf32, #tpu.memory_space<any>> -> memref<1x64xf32, #tpu.memory_space<any>>
    %c32_i32_94 = arith.constant 32 : i32
    %c0_i32_95 = arith.constant 0 : i32
    %113 = tpu.memref_slice %arg11[%c32_i32_94, %c0_i32_95] : memref<64x64xf32, #tpu.memory_space<vmem>> -> memref<1x64xf32, #tpu.memory_space<vmem>>
    %114 = tpu.memref_slice %arg13[%c8_i32_92] : memref<16x!tpu.dma_semaphore, #tpu.memory_space<semaphore_mem>> -> memref<1x!tpu.dma_semaphore, #tpu.memory_space<semaphore_mem>>
    %115 = tpu.memref_squeeze %114 : memref<1x!tpu.dma_semaphore, #tpu.memory_space<semaphore_mem>> -> memref<!tpu.dma_semaphore, #tpu.memory_space<semaphore_mem>>
    tpu.wait_dma2 semaphore(%115 : memref<!tpu.dma_semaphore, #tpu.memory_space<semaphore_mem>>) src(%112 : memref<1x64xf32, #tpu.memory_space<any>>) dst(%113 : memref<1x64xf32, #tpu.memory_space<vmem>>)
    %c9_i32_96 = arith.constant 9 : i32
    %c0_i32_97 = arith.constant 0 : i32
    %116 = tpu.memref_slice %arg1[%45, %c0_i32_97] : memref<17578x64xf32, #tpu.memory_space<any>> -> memref<1x64xf32, #tpu.memory_space<any>>
    %c33_i32_98 = arith.constant 33 : i32
    %c0_i32_99 = arith.constant 0 : i32
    %117 = tpu.memref_slice %arg11[%c33_i32_98, %c0_i32_99] : memref<64x64xf32, #tpu.memory_space<vmem>> -> memref<1x64xf32, #tpu.memory_space<vmem>>
    %118 = tpu.memref_slice %arg13[%c9_i32_96] : memref<16x!tpu.dma_semaphore, #tpu.memory_space<semaphore_mem>> -> memref<1x!tpu.dma_semaphore, #tpu.memory_space<semaphore_mem>>
    %119 = tpu.memref_squeeze %118 : memref<1x!tpu.dma_semaphore, #tpu.memory_space<semaphore_mem>> -> memref<!tpu.dma_semaphore, #tpu.memory_space<semaphore_mem>>
    tpu.wait_dma2 semaphore(%119 : memref<!tpu.dma_semaphore, #tpu.memory_space<semaphore_mem>>) src(%116 : memref<1x64xf32, #tpu.memory_space<any>>) dst(%117 : memref<1x64xf32, #tpu.memory_space<vmem>>)
    %c10_i32_100 = arith.constant 10 : i32
    %c0_i32_101 = arith.constant 0 : i32
    %120 = tpu.memref_slice %arg1[%50, %c0_i32_101] : memref<17578x64xf32, #tpu.memory_space<any>> -> memref<1x64xf32, #tpu.memory_space<any>>
    %c40_i32_102 = arith.constant 40 : i32
    %c0_i32_103 = arith.constant 0 : i32
    %121 = tpu.memref_slice %arg11[%c40_i32_102, %c0_i32_103] : memref<64x64xf32, #tpu.memory_space<vmem>> -> memref<1x64xf32, #tpu.memory_space<vmem>>
    %122 = tpu.memref_slice %arg13[%c10_i32_100] : memref<16x!tpu.dma_semaphore, #tpu.memory_space<semaphore_mem>> -> memref<1x!tpu.dma_semaphore, #tpu.memory_space<semaphore_mem>>
    %123 = tpu.memref_squeeze %122 : memref<1x!tpu.dma_semaphore, #tpu.memory_space<semaphore_mem>> -> memref<!tpu.dma_semaphore, #tpu.memory_space<semaphore_mem>>
    tpu.wait_dma2 semaphore(%123 : memref<!tpu.dma_semaphore, #tpu.memory_space<semaphore_mem>>) src(%120 : memref<1x64xf32, #tpu.memory_space<any>>) dst(%121 : memref<1x64xf32, #tpu.memory_space<vmem>>)
    %c11_i32_104 = arith.constant 11 : i32
    %c0_i32_105 = arith.constant 0 : i32
    %124 = tpu.memref_slice %arg1[%55, %c0_i32_105] : memref<17578x64xf32, #tpu.memory_space<any>> -> memref<1x64xf32, #tpu.memory_space<any>>
    %c41_i32_106 = arith.constant 41 : i32
    %c0_i32_107 = arith.constant 0 : i32
    %125 = tpu.memref_slice %arg11[%c41_i32_106, %c0_i32_107] : memref<64x64xf32, #tpu.memory_space<vmem>> -> memref<1x64xf32, #tpu.memory_space<vmem>>
    %126 = tpu.memref_slice %arg13[%c11_i32_104] : memref<16x!tpu.dma_semaphore, #tpu.memory_space<semaphore_mem>> -> memref<1x!tpu.dma_semaphore, #tpu.memory_space<semaphore_mem>>
    %127 = tpu.memref_squeeze %126 : memref<1x!tpu.dma_semaphore, #tpu.memory_space<semaphore_mem>> -> memref<!tpu.dma_semaphore, #tpu.memory_space<semaphore_mem>>
    tpu.wait_dma2 semaphore(%127 : memref<!tpu.dma_semaphore, #tpu.memory_space<semaphore_mem>>) src(%124 : memref<1x64xf32, #tpu.memory_space<any>>) dst(%125 : memref<1x64xf32, #tpu.memory_space<vmem>>)
    %c12_i32_108 = arith.constant 12 : i32
    %c0_i32_109 = arith.constant 0 : i32
    %128 = tpu.memref_slice %arg1[%60, %c0_i32_109] : memref<17578x64xf32, #tpu.memory_space<any>> -> memref<1x64xf32, #tpu.memory_space<any>>
    %c48_i32_110 = arith.constant 48 : i32
    %c0_i32_111 = arith.constant 0 : i32
    %129 = tpu.memref_slice %arg11[%c48_i32_110, %c0_i32_111] : memref<64x64xf32, #tpu.memory_space<vmem>> -> memref<1x64xf32, #tpu.memory_space<vmem>>
    %130 = tpu.memref_slice %arg13[%c12_i32_108] : memref<16x!tpu.dma_semaphore, #tpu.memory_space<semaphore_mem>> -> memref<1x!tpu.dma_semaphore, #tpu.memory_space<semaphore_mem>>
    %131 = tpu.memref_squeeze %130 : memref<1x!tpu.dma_semaphore, #tpu.memory_space<semaphore_mem>> -> memref<!tpu.dma_semaphore, #tpu.memory_space<semaphore_mem>>
    tpu.wait_dma2 semaphore(%131 : memref<!tpu.dma_semaphore, #tpu.memory_space<semaphore_mem>>) src(%128 : memref<1x64xf32, #tpu.memory_space<any>>) dst(%129 : memref<1x64xf32, #tpu.memory_space<vmem>>)
    %c13_i32_112 = arith.constant 13 : i32
    %c0_i32_113 = arith.constant 0 : i32
    %132 = tpu.memref_slice %arg1[%65, %c0_i32_113] : memref<17578x64xf32, #tpu.memory_space<any>> -> memref<1x64xf32, #tpu.memory_space<any>>
    %c49_i32_114 = arith.constant 49 : i32
    %c0_i32_115 = arith.constant 0 : i32
    %133 = tpu.memref_slice %arg11[%c49_i32_114, %c0_i32_115] : memref<64x64xf32, #tpu.memory_space<vmem>> -> memref<1x64xf32, #tpu.memory_space<vmem>>
    %134 = tpu.memref_slice %arg13[%c13_i32_112] : memref<16x!tpu.dma_semaphore, #tpu.memory_space<semaphore_mem>> -> memref<1x!tpu.dma_semaphore, #tpu.memory_space<semaphore_mem>>
    %135 = tpu.memref_squeeze %134 : memref<1x!tpu.dma_semaphore, #tpu.memory_space<semaphore_mem>> -> memref<!tpu.dma_semaphore, #tpu.memory_space<semaphore_mem>>
    tpu.wait_dma2 semaphore(%135 : memref<!tpu.dma_semaphore, #tpu.memory_space<semaphore_mem>>) src(%132 : memref<1x64xf32, #tpu.memory_space<any>>) dst(%133 : memref<1x64xf32, #tpu.memory_space<vmem>>)
    %c14_i32_116 = arith.constant 14 : i32
    %c0_i32_117 = arith.constant 0 : i32
    %136 = tpu.memref_slice %arg1[%70, %c0_i32_117] : memref<17578x64xf32, #tpu.memory_space<any>> -> memref<1x64xf32, #tpu.memory_space<any>>
    %c56_i32_118 = arith.constant 56 : i32
    %c0_i32_119 = arith.constant 0 : i32
    %137 = tpu.memref_slice %arg11[%c56_i32_118, %c0_i32_119] : memref<64x64xf32, #tpu.memory_space<vmem>> -> memref<1x64xf32, #tpu.memory_space<vmem>>
    %138 = tpu.memref_slice %arg13[%c14_i32_116] : memref<16x!tpu.dma_semaphore, #tpu.memory_space<semaphore_mem>> -> memref<1x!tpu.dma_semaphore, #tpu.memory_space<semaphore_mem>>
    %139 = tpu.memref_squeeze %138 : memref<1x!tpu.dma_semaphore, #tpu.memory_space<semaphore_mem>> -> memref<!tpu.dma_semaphore, #tpu.memory_space<semaphore_mem>>
    tpu.wait_dma2 semaphore(%139 : memref<!tpu.dma_semaphore, #tpu.memory_space<semaphore_mem>>) src(%136 : memref<1x64xf32, #tpu.memory_space<any>>) dst(%137 : memref<1x64xf32, #tpu.memory_space<vmem>>)
    %c15_i32_120 = arith.constant 15 : i32
    %c0_i32_121 = arith.constant 0 : i32
    %140 = tpu.memref_slice %arg1[%75, %c0_i32_121] : memref<17578x64xf32, #tpu.memory_space<any>> -> memref<1x64xf32, #tpu.memory_space<any>>
    %c57_i32_122 = arith.constant 57 : i32
    %c0_i32_123 = arith.constant 0 : i32
    %141 = tpu.memref_slice %arg11[%c57_i32_122, %c0_i32_123] : memref<64x64xf32, #tpu.memory_space<vmem>> -> memref<1x64xf32, #tpu.memory_space<vmem>>
    %142 = tpu.memref_slice %arg13[%c15_i32_120] : memref<16x!tpu.dma_semaphore, #tpu.memory_space<semaphore_mem>> -> memref<1x!tpu.dma_semaphore, #tpu.memory_space<semaphore_mem>>
    %143 = tpu.memref_squeeze %142 : memref<1x!tpu.dma_semaphore, #tpu.memory_space<semaphore_mem>> -> memref<!tpu.dma_semaphore, #tpu.memory_space<semaphore_mem>>
    tpu.wait_dma2 semaphore(%143 : memref<!tpu.dma_semaphore, #tpu.memory_space<semaphore_mem>>) src(%140 : memref<1x64xf32, #tpu.memory_space<any>>) dst(%141 : memref<1x64xf32, #tpu.memory_space<vmem>>)
    %c0_124 = arith.constant 0 : index
    %c0_125 = arith.constant 0 : index
    %144 = vector.load %arg3[%c0_124, %c0_125] : memref<32x128xbf16, #tpu.memory_space<vmem>>, vector<32x128xbf16>
    %c0_126 = arith.constant 0 : index
    %c0_127 = arith.constant 0 : index
    %145 = vector.load %arg6[%c0_126, %c0_127] : memref<32x128xbf16, #tpu.memory_space<vmem>>, vector<32x128xbf16>
    %c0_128 = arith.constant 0 : index
    %c0_129 = arith.constant 0 : index
    %146 = vector.load %arg11[%c0_128, %c0_129] : memref<64x64xf32, #tpu.memory_space<vmem>>, vector<64x64xf32>
    %147 = arith.truncf %146 : vector<64x64xf32> to vector<64x64xbf16>
    %c0_130 = arith.constant 0 : index
    %c0_131 = arith.constant 0 : index
    %148 = vector.load %arg2[%c0_130, %c0_131] : memref<64x128xbf16, #tpu.memory_space<vmem>>, vector<64x128xbf16>
    %cst = arith.constant dense<0.000000e+00> : vector<64x128xf32>
    %149 = tpu.matmul %147, %148, %cst {dimension_numbers = #tpu.dot_dimension_numbers<[1], [0], [0], [1], [0, 0, 1, 1], [], []>} : vector<64x64xbf16>, vector<64x128xbf16>, vector<64x128xf32> -> vector<64x128xf32>
    %c0_132 = arith.constant 0 : index
    %c0_133 = arith.constant 0 : index
    %150 = vector.load %arg4[%c0_132, %c0_133] : memref<1x128xf32, #tpu.memory_space<vmem>>, vector<1x128xf32>
    %151 = vector.broadcast %150 : vector<1x128xf32> to vector<64x128xf32>
    %152 = arith.addf %149, %151 : vector<64x128xf32>
    %cst_134 = arith.constant 0.000000e+00 : f32
    %153 = vector.broadcast %cst_134 : f32 to vector<8x32xf32>
    %cst_135 = arith.constant 0.000000e+00 : f32
    %154 = vector.broadcast %cst_135 : f32 to vector<8x32xf32>
    %155 = vector.extract_strided_slice %152 {offsets = [0, 0], sizes = [8, 128], strides = [1, 1]} : vector<64x128xf32> to vector<8x128xf32>
    %156 = arith.truncf %153 : vector<8x32xf32> to vector<8x32xbf16>
    %cst_136 = arith.constant dense<0.000000e+00> : vector<8x128xf32>
    %157 = tpu.matmul %156, %144, %cst_136 {dimension_numbers = #tpu.dot_dimension_numbers<[1], [0], [0], [1], [0, 0, 1, 1], [], []>} : vector<8x32xbf16>, vector<32x128xbf16>, vector<8x128xf32> -> vector<8x128xf32>
    %158 = arith.addf %155, %157 : vector<8x128xf32>
    %159 = vector.extract_strided_slice %158 {offsets = [0, 0], sizes = [8, 32], strides = [1, 1]} : vector<8x128xf32> to vector<8x32xf32>
    %cst_137 = arith.constant 5.000000e-01 : f32
    %160 = vector.broadcast %cst_137 : f32 to vector<8x32xf32>
    %161 = arith.mulf %160, %159 : vector<8x32xf32>
    %162 = math.tanh %161 : vector<8x32xf32>
    %cst_138 = arith.constant 1.000000e+00 : f32
    %163 = vector.broadcast %cst_138 : f32 to vector<8x32xf32>
    %164 = arith.addf %162, %163 : vector<8x32xf32>
    %cst_139 = arith.constant 5.000000e-01 : f32
    %165 = vector.broadcast %cst_139 : f32 to vector<8x32xf32>
    %166 = arith.mulf %165, %164 : vector<8x32xf32>
    %167 = vector.extract_strided_slice %158 {offsets = [0, 32], sizes = [8, 32], strides = [1, 1]} : vector<8x128xf32> to vector<8x32xf32>
    %cst_140 = arith.constant 5.000000e-01 : f32
    %168 = vector.broadcast %cst_140 : f32 to vector<8x32xf32>
    %169 = arith.mulf %168, %167 : vector<8x32xf32>
    %170 = math.tanh %169 : vector<8x32xf32>
    %cst_141 = arith.constant 1.000000e+00 : f32
    %171 = vector.broadcast %cst_141 : f32 to vector<8x32xf32>
    %172 = arith.addf %170, %171 : vector<8x32xf32>
    %cst_142 = arith.constant 5.000000e-01 : f32
    %173 = vector.broadcast %cst_142 : f32 to vector<8x32xf32>
    %174 = arith.mulf %173, %172 : vector<8x32xf32>
    %175 = vector.extract_strided_slice %158 {offsets = [0, 64], sizes = [8, 32], strides = [1, 1]} : vector<8x128xf32> to vector<8x32xf32>
    %176 = math.tanh %175 : vector<8x32xf32>
    %177 = vector.extract_strided_slice %158 {offsets = [0, 96], sizes = [8, 32], strides = [1, 1]} : vector<8x128xf32> to vector<8x32xf32>
    %cst_143 = arith.constant 5.000000e-01 : f32
    %178 = vector.broadcast %cst_143 : f32 to vector<8x32xf32>
    %179 = arith.mulf %178, %177 : vector<8x32xf32>
    %180 = math.tanh %179 : vector<8x32xf32>
    %cst_144 = arith.constant 1.000000e+00 : f32
    %181 = vector.broadcast %cst_144 : f32 to vector<8x32xf32>
    %182 = arith.addf %180, %181 : vector<8x32xf32>
    %cst_145 = arith.constant 5.000000e-01 : f32
    %183 = vector.broadcast %cst_145 : f32 to vector<8x32xf32>
    %184 = arith.mulf %183, %182 : vector<8x32xf32>
    %185 = arith.mulf %174, %154 : vector<8x32xf32>
    %186 = arith.mulf %166, %176 : vector<8x32xf32>
    %187 = arith.addf %185, %186 : vector<8x32xf32>
    %188 = math.tanh %187 : vector<8x32xf32>
    %189 = arith.mulf %184, %188 : vector<8x32xf32>
    %c0_146 = arith.constant 0 : index
    %c0_147 = arith.constant 0 : index
    %190 = vector.load %arg12[%c0_146, %c0_147] : memref<64x32xf32, #tpu.memory_space<vmem>>, vector<8x32xf32>
    tpu.vector_store %arg12[%c0_146, %c0_147], %189 {strides = array<i32>} : memref<64x32xf32, #tpu.memory_space<vmem>>, vector<8x32xf32>,
    %191 = vector.extract_strided_slice %152 {offsets = [8, 0], sizes = [8, 128], strides = [1, 1]} : vector<64x128xf32> to vector<8x128xf32>
    %192 = arith.truncf %189 : vector<8x32xf32> to vector<8x32xbf16>
    %cst_148 = arith.constant dense<0.000000e+00> : vector<8x128xf32>
    %193 = tpu.matmul %192, %144, %cst_148 {dimension_numbers = #tpu.dot_dimension_numbers<[1], [0], [0], [1], [0, 0, 1, 1], [], []>} : vector<8x32xbf16>, vector<32x128xbf16>, vector<8x128xf32> -> vector<8x128xf32>
    %194 = arith.addf %191, %193 : vector<8x128xf32>
    %195 = vector.extract_strided_slice %194 {offsets = [0, 0], sizes = [8, 32], strides = [1, 1]} : vector<8x128xf32> to vector<8x32xf32>
    %cst_149 = arith.constant 5.000000e-01 : f32
    %196 = vector.broadcast %cst_149 : f32 to vector<8x32xf32>
    %197 = arith.mulf %196, %195 : vector<8x32xf32>
    %198 = math.tanh %197 : vector<8x32xf32>
    %cst_150 = arith.constant 1.000000e+00 : f32
    %199 = vector.broadcast %cst_150 : f32 to vector<8x32xf32>
    %200 = arith.addf %198, %199 : vector<8x32xf32>
    %cst_151 = arith.constant 5.000000e-01 : f32
    %201 = vector.broadcast %cst_151 : f32 to vector<8x32xf32>
    %202 = arith.mulf %201, %200 : vector<8x32xf32>
    %203 = vector.extract_strided_slice %194 {offsets = [0, 32], sizes = [8, 32], strides = [1, 1]} : vector<8x128xf32> to vector<8x32xf32>
    %cst_152 = arith.constant 5.000000e-01 : f32
    %204 = vector.broadcast %cst_152 : f32 to vector<8x32xf32>
    %205 = arith.mulf %204, %203 : vector<8x32xf32>
    %206 = math.tanh %205 : vector<8x32xf32>
    %cst_153 = arith.constant 1.000000e+00 : f32
    %207 = vector.broadcast %cst_153 : f32 to vector<8x32xf32>
    %208 = arith.addf %206, %207 : vector<8x32xf32>
    %cst_154 = arith.constant 5.000000e-01 : f32
    %209 = vector.broadcast %cst_154 : f32 to vector<8x32xf32>
    %210 = arith.mulf %209, %208 : vector<8x32xf32>
    %211 = vector.extract_strided_slice %194 {offsets = [0, 64], sizes = [8, 32], strides = [1, 1]} : vector<8x128xf32> to vector<8x32xf32>
    %212 = math.tanh %211 : vector<8x32xf32>
    %213 = vector.extract_strided_slice %194 {offsets = [0, 96], sizes = [8, 32], strides = [1, 1]} : vector<8x128xf32> to vector<8x32xf32>
    %cst_155 = arith.constant 5.000000e-01 : f32
    %214 = vector.broadcast %cst_155 : f32 to vector<8x32xf32>
    %215 = arith.mulf %214, %213 : vector<8x32xf32>
    %216 = math.tanh %215 : vector<8x32xf32>
    %cst_156 = arith.constant 1.000000e+00 : f32
    %217 = vector.broadcast %cst_156 : f32 to vector<8x32xf32>
    %218 = arith.addf %216, %217 : vector<8x32xf32>
    %cst_157 = arith.constant 5.000000e-01 : f32
    %219 = vector.broadcast %cst_157 : f32 to vector<8x32xf32>
    %220 = arith.mulf %219, %218 : vector<8x32xf32>
    %221 = arith.mulf %210, %187 : vector<8x32xf32>
    %222 = arith.mulf %202, %212 : vector<8x32xf32>
    %223 = arith.addf %221, %222 : vector<8x32xf32>
    %224 = math.tanh %223 : vector<8x32xf32>
    %225 = arith.mulf %220, %224 : vector<8x32xf32>
    %c8 = arith.constant 8 : index
    %c0_158 = arith.constant 0 : index
    %226 = vector.load %arg12[%c8, %c0_158] : memref<64x32xf32, #tpu.memory_space<vmem>>, vector<8x32xf32>
    tpu.vector_store %arg12[%c8, %c0_158], %225 {strides = array<i32>} : memref<64x32xf32, #tpu.memory_space<vmem>>, vector<8x32xf32>,
    %227 = vector.extract_strided_slice %152 {offsets = [16, 0], sizes = [8, 128], strides = [1, 1]} : vector<64x128xf32> to vector<8x128xf32>
    %228 = arith.truncf %225 : vector<8x32xf32> to vector<8x32xbf16>
    %cst_159 = arith.constant dense<0.000000e+00> : vector<8x128xf32>
    %229 = tpu.matmul %228, %144, %cst_159 {dimension_numbers = #tpu.dot_dimension_numbers<[1], [0], [0], [1], [0, 0, 1, 1], [], []>} : vector<8x32xbf16>, vector<32x128xbf16>, vector<8x128xf32> -> vector<8x128xf32>
    %230 = arith.addf %227, %229 : vector<8x128xf32>
    %231 = vector.extract_strided_slice %230 {offsets = [0, 0], sizes = [8, 32], strides = [1, 1]} : vector<8x128xf32> to vector<8x32xf32>
    %cst_160 = arith.constant 5.000000e-01 : f32
    %232 = vector.broadcast %cst_160 : f32 to vector<8x32xf32>
    %233 = arith.mulf %232, %231 : vector<8x32xf32>
    %234 = math.tanh %233 : vector<8x32xf32>
    %cst_161 = arith.constant 1.000000e+00 : f32
    %235 = vector.broadcast %cst_161 : f32 to vector<8x32xf32>
    %236 = arith.addf %234, %235 : vector<8x32xf32>
    %cst_162 = arith.constant 5.000000e-01 : f32
    %237 = vector.broadcast %cst_162 : f32 to vector<8x32xf32>
    %238 = arith.mulf %237, %236 : vector<8x32xf32>
    %239 = vector.extract_strided_slice %230 {offsets = [0, 32], sizes = [8, 32], strides = [1, 1]} : vector<8x128xf32> to vector<8x32xf32>
    %cst_163 = arith.constant 5.000000e-01 : f32
    %240 = vector.broadcast %cst_163 : f32 to vector<8x32xf32>
    %241 = arith.mulf %240, %239 : vector<8x32xf32>
    %242 = math.tanh %241 : vector<8x32xf32>
    %cst_164 = arith.constant 1.000000e+00 : f32
    %243 = vector.broadcast %cst_164 : f32 to vector<8x32xf32>
    %244 = arith.addf %242, %243 : vector<8x32xf32>
    %cst_165 = arith.constant 5.000000e-01 : f32
    %245 = vector.broadcast %cst_165 : f32 to vector<8x32xf32>
    %246 = arith.mulf %245, %244 : vector<8x32xf32>
    %247 = vector.extract_strided_slice %230 {offsets = [0, 64], sizes = [8, 32], strides = [1, 1]} : vector<8x128xf32> to vector<8x32xf32>
    %248 = math.tanh %247 : vector<8x32xf32>
    %249 = vector.extract_strided_slice %230 {offsets = [0, 96], sizes = [8, 32], strides = [1, 1]} : vector<8x128xf32> to vector<8x32xf32>
    %cst_166 = arith.constant 5.000000e-01 : f32
    %250 = vector.broadcast %cst_166 : f32 to vector<8x32xf32>
    %251 = arith.mulf %250, %249 : vector<8x32xf32>
    %252 = math.tanh %251 : vector<8x32xf32>
    %cst_167 = arith.constant 1.000000e+00 : f32
    %253 = vector.broadcast %cst_167 : f32 to vector<8x32xf32>
    %254 = arith.addf %252, %253 : vector<8x32xf32>
    %cst_168 = arith.constant 5.000000e-01 : f32
    %255 = vector.broadcast %cst_168 : f32 to vector<8x32xf32>
    %256 = arith.mulf %255, %254 : vector<8x32xf32>
    %257 = arith.mulf %246, %223 : vector<8x32xf32>
    %258 = arith.mulf %238, %248 : vector<8x32xf32>
    %259 = arith.addf %257, %258 : vector<8x32xf32>
    %260 = math.tanh %259 : vector<8x32xf32>
    %261 = arith.mulf %256, %260 : vector<8x32xf32>
    %c16 = arith.constant 16 : index
    %c0_169 = arith.constant 0 : index
    %262 = vector.load %arg12[%c16, %c0_169] : memref<64x32xf32, #tpu.memory_space<vmem>>, vector<8x32xf32>
    tpu.vector_store %arg12[%c16, %c0_169], %261 {strides = array<i32>} : memref<64x32xf32, #tpu.memory_space<vmem>>, vector<8x32xf32>,
    %263 = vector.extract_strided_slice %152 {offsets = [24, 0], sizes = [8, 128], strides = [1, 1]} : vector<64x128xf32> to vector<8x128xf32>
    %264 = arith.truncf %261 : vector<8x32xf32> to vector<8x32xbf16>
    %cst_170 = arith.constant dense<0.000000e+00> : vector<8x128xf32>
    %265 = tpu.matmul %264, %144, %cst_170 {dimension_numbers = #tpu.dot_dimension_numbers<[1], [0], [0], [1], [0, 0, 1, 1], [], []>} : vector<8x32xbf16>, vector<32x128xbf16>, vector<8x128xf32> -> vector<8x128xf32>
    %266 = arith.addf %263, %265 : vector<8x128xf32>
    %267 = vector.extract_strided_slice %266 {offsets = [0, 0], sizes = [8, 32], strides = [1, 1]} : vector<8x128xf32> to vector<8x32xf32>
    %cst_171 = arith.constant 5.000000e-01 : f32
    %268 = vector.broadcast %cst_171 : f32 to vector<8x32xf32>
    %269 = arith.mulf %268, %267 : vector<8x32xf32>
    %270 = math.tanh %269 : vector<8x32xf32>
    %cst_172 = arith.constant 1.000000e+00 : f32
    %271 = vector.broadcast %cst_172 : f32 to vector<8x32xf32>
    %272 = arith.addf %270, %271 : vector<8x32xf32>
    %cst_173 = arith.constant 5.000000e-01 : f32
    %273 = vector.broadcast %cst_173 : f32 to vector<8x32xf32>
    %274 = arith.mulf %273, %272 : vector<8x32xf32>
    %275 = vector.extract_strided_slice %266 {offsets = [0, 32], sizes = [8, 32], strides = [1, 1]} : vector<8x128xf32> to vector<8x32xf32>
    %cst_174 = arith.constant 5.000000e-01 : f32
    %276 = vector.broadcast %cst_174 : f32 to vector<8x32xf32>
    %277 = arith.mulf %276, %275 : vector<8x32xf32>
    %278 = math.tanh %277 : vector<8x32xf32>
    %cst_175 = arith.constant 1.000000e+00 : f32
    %279 = vector.broadcast %cst_175 : f32 to vector<8x32xf32>
    %280 = arith.addf %278, %279 : vector<8x32xf32>
    %cst_176 = arith.constant 5.000000e-01 : f32
    %281 = vector.broadcast %cst_176 : f32 to vector<8x32xf32>
    %282 = arith.mulf %281, %280 : vector<8x32xf32>
    %283 = vector.extract_strided_slice %266 {offsets = [0, 64], sizes = [8, 32], strides = [1, 1]} : vector<8x128xf32> to vector<8x32xf32>
    %284 = math.tanh %283 : vector<8x32xf32>
    %285 = vector.extract_strided_slice %266 {offsets = [0, 96], sizes = [8, 32], strides = [1, 1]} : vector<8x128xf32> to vector<8x32xf32>
    %cst_177 = arith.constant 5.000000e-01 : f32
    %286 = vector.broadcast %cst_177 : f32 to vector<8x32xf32>
    %287 = arith.mulf %286, %285 : vector<8x32xf32>
    %288 = math.tanh %287 : vector<8x32xf32>
    %cst_178 = arith.constant 1.000000e+00 : f32
    %289 = vector.broadcast %cst_178 : f32 to vector<8x32xf32>
    %290 = arith.addf %288, %289 : vector<8x32xf32>
    %cst_179 = arith.constant 5.000000e-01 : f32
    %291 = vector.broadcast %cst_179 : f32 to vector<8x32xf32>
    %292 = arith.mulf %291, %290 : vector<8x32xf32>
    %293 = arith.mulf %282, %259 : vector<8x32xf32>
    %294 = arith.mulf %274, %284 : vector<8x32xf32>
    %295 = arith.addf %293, %294 : vector<8x32xf32>
    %296 = math.tanh %295 : vector<8x32xf32>
    %297 = arith.mulf %292, %296 : vector<8x32xf32>
    %c24 = arith.constant 24 : index
    %c0_180 = arith.constant 0 : index
    %298 = vector.load %arg12[%c24, %c0_180] : memref<64x32xf32, #tpu.memory_space<vmem>>, vector<8x32xf32>
    tpu.vector_store %arg12[%c24, %c0_180], %297 {strides = array<i32>} : memref<64x32xf32, #tpu.memory_space<vmem>>, vector<8x32xf32>,
    %299 = vector.extract_strided_slice %152 {offsets = [32, 0], sizes = [8, 128], strides = [1, 1]} : vector<64x128xf32> to vector<8x128xf32>
    %300 = arith.truncf %297 : vector<8x32xf32> to vector<8x32xbf16>
    %cst_181 = arith.constant dense<0.000000e+00> : vector<8x128xf32>
    %301 = tpu.matmul %300, %144, %cst_181 {dimension_numbers = #tpu.dot_dimension_numbers<[1], [0], [0], [1], [0, 0, 1, 1], [], []>} : vector<8x32xbf16>, vector<32x128xbf16>, vector<8x128xf32> -> vector<8x128xf32>
    %302 = arith.addf %299, %301 : vector<8x128xf32>
    %303 = vector.extract_strided_slice %302 {offsets = [0, 0], sizes = [8, 32], strides = [1, 1]} : vector<8x128xf32> to vector<8x32xf32>
    %cst_182 = arith.constant 5.000000e-01 : f32
    %304 = vector.broadcast %cst_182 : f32 to vector<8x32xf32>
    %305 = arith.mulf %304, %303 : vector<8x32xf32>
    %306 = math.tanh %305 : vector<8x32xf32>
    %cst_183 = arith.constant 1.000000e+00 : f32
    %307 = vector.broadcast %cst_183 : f32 to vector<8x32xf32>
    %308 = arith.addf %306, %307 : vector<8x32xf32>
    %cst_184 = arith.constant 5.000000e-01 : f32
    %309 = vector.broadcast %cst_184 : f32 to vector<8x32xf32>
    %310 = arith.mulf %309, %308 : vector<8x32xf32>
    %311 = vector.extract_strided_slice %302 {offsets = [0, 32], sizes = [8, 32], strides = [1, 1]} : vector<8x128xf32> to vector<8x32xf32>
    %cst_185 = arith.constant 5.000000e-01 : f32
    %312 = vector.broadcast %cst_185 : f32 to vector<8x32xf32>
    %313 = arith.mulf %312, %311 : vector<8x32xf32>
    %314 = math.tanh %313 : vector<8x32xf32>
    %cst_186 = arith.constant 1.000000e+00 : f32
    %315 = vector.broadcast %cst_186 : f32 to vector<8x32xf32>
    %316 = arith.addf %314, %315 : vector<8x32xf32>
    %cst_187 = arith.constant 5.000000e-01 : f32
    %317 = vector.broadcast %cst_187 : f32 to vector<8x32xf32>
    %318 = arith.mulf %317, %316 : vector<8x32xf32>
    %319 = vector.extract_strided_slice %302 {offsets = [0, 64], sizes = [8, 32], strides = [1, 1]} : vector<8x128xf32> to vector<8x32xf32>
    %320 = math.tanh %319 : vector<8x32xf32>
    %321 = vector.extract_strided_slice %302 {offsets = [0, 96], sizes = [8, 32], strides = [1, 1]} : vector<8x128xf32> to vector<8x32xf32>
    %cst_188 = arith.constant 5.000000e-01 : f32
    %322 = vector.broadcast %cst_188 : f32 to vector<8x32xf32>
    %323 = arith.mulf %322, %321 : vector<8x32xf32>
    %324 = math.tanh %323 : vector<8x32xf32>
    %cst_189 = arith.constant 1.000000e+00 : f32
    %325 = vector.broadcast %cst_189 : f32 to vector<8x32xf32>
    %326 = arith.addf %324, %325 : vector<8x32xf32>
    %cst_190 = arith.constant 5.000000e-01 : f32
    %327 = vector.broadcast %cst_190 : f32 to vector<8x32xf32>
    %328 = arith.mulf %327, %326 : vector<8x32xf32>
    %329 = arith.mulf %318, %295 : vector<8x32xf32>
    %330 = arith.mulf %310, %320 : vector<8x32xf32>
    %331 = arith.addf %329, %330 : vector<8x32xf32>
    %332 = math.tanh %331 : vector<8x32xf32>
    %333 = arith.mulf %328, %332 : vector<8x32xf32>
    %c32 = arith.constant 32 : index
    %c0_191 = arith.constant 0 : index
    %334 = vector.load %arg12[%c32, %c0_191] : memref<64x32xf32, #tpu.memory_space<vmem>>, vector<8x32xf32>
    tpu.vector_store %arg12[%c32, %c0_191], %333 {strides = array<i32>} : memref<64x32xf32, #tpu.memory_space<vmem>>, vector<8x32xf32>,
    %335 = vector.extract_strided_slice %152 {offsets = [40, 0], sizes = [8, 128], strides = [1, 1]} : vector<64x128xf32> to vector<8x128xf32>
    %336 = arith.truncf %333 : vector<8x32xf32> to vector<8x32xbf16>
    %cst_192 = arith.constant dense<0.000000e+00> : vector<8x128xf32>
    %337 = tpu.matmul %336, %144, %cst_192 {dimension_numbers = #tpu.dot_dimension_numbers<[1], [0], [0], [1], [0, 0, 1, 1], [], []>} : vector<8x32xbf16>, vector<32x128xbf16>, vector<8x128xf32> -> vector<8x128xf32>
    %338 = arith.addf %335, %337 : vector<8x128xf32>
    %339 = vector.extract_strided_slice %338 {offsets = [0, 0], sizes = [8, 32], strides = [1, 1]} : vector<8x128xf32> to vector<8x32xf32>
    %cst_193 = arith.constant 5.000000e-01 : f32
    %340 = vector.broadcast %cst_193 : f32 to vector<8x32xf32>
    %341 = arith.mulf %340, %339 : vector<8x32xf32>
    %342 = math.tanh %341 : vector<8x32xf32>
    %cst_194 = arith.constant 1.000000e+00 : f32
    %343 = vector.broadcast %cst_194 : f32 to vector<8x32xf32>
    %344 = arith.addf %342, %343 : vector<8x32xf32>
    %cst_195 = arith.constant 5.000000e-01 : f32
    %345 = vector.broadcast %cst_195 : f32 to vector<8x32xf32>
    %346 = arith.mulf %345, %344 : vector<8x32xf32>
    %347 = vector.extract_strided_slice %338 {offsets = [0, 32], sizes = [8, 32], strides = [1, 1]} : vector<8x128xf32> to vector<8x32xf32>
    %cst_196 = arith.constant 5.000000e-01 : f32
    %348 = vector.broadcast %cst_196 : f32 to vector<8x32xf32>
    %349 = arith.mulf %348, %347 : vector<8x32xf32>
    %350 = math.tanh %349 : vector<8x32xf32>
    %cst_197 = arith.constant 1.000000e+00 : f32
    %351 = vector.broadcast %cst_197 : f32 to vector<8x32xf32>
    %352 = arith.addf %350, %351 : vector<8x32xf32>
    %cst_198 = arith.constant 5.000000e-01 : f32
    %353 = vector.broadcast %cst_198 : f32 to vector<8x32xf32>
    %354 = arith.mulf %353, %352 : vector<8x32xf32>
    %355 = vector.extract_strided_slice %338 {offsets = [0, 64], sizes = [8, 32], strides = [1, 1]} : vector<8x128xf32> to vector<8x32xf32>
    %356 = math.tanh %355 : vector<8x32xf32>
    %357 = vector.extract_strided_slice %338 {offsets = [0, 96], sizes = [8, 32], strides = [1, 1]} : vector<8x128xf32> to vector<8x32xf32>
    %cst_199 = arith.constant 5.000000e-01 : f32
    %358 = vector.broadcast %cst_199 : f32 to vector<8x32xf32>
    %359 = arith.mulf %358, %357 : vector<8x32xf32>
    %360 = math.tanh %359 : vector<8x32xf32>
    %cst_200 = arith.constant 1.000000e+00 : f32
    %361 = vector.broadcast %cst_200 : f32 to vector<8x32xf32>
    %362 = arith.addf %360, %361 : vector<8x32xf32>
    %cst_201 = arith.constant 5.000000e-01 : f32
    %363 = vector.broadcast %cst_201 : f32 to vector<8x32xf32>
    %364 = arith.mulf %363, %362 : vector<8x32xf32>
    %365 = arith.mulf %354, %331 : vector<8x32xf32>
    %366 = arith.mulf %346, %356 : vector<8x32xf32>
    %367 = arith.addf %365, %366 : vector<8x32xf32>
    %368 = math.tanh %367 : vector<8x32xf32>
    %369 = arith.mulf %364, %368 : vector<8x32xf32>
    %c40 = arith.constant 40 : index
    %c0_202 = arith.constant 0 : index
    %370 = vector.load %arg12[%c40, %c0_202] : memref<64x32xf32, #tpu.memory_space<vmem>>, vector<8x32xf32>
    tpu.vector_store %arg12[%c40, %c0_202], %369 {strides = array<i32>} : memref<64x32xf32, #tpu.memory_space<vmem>>, vector<8x32xf32>,
    %371 = vector.extract_strided_slice %152 {offsets = [48, 0], sizes = [8, 128], strides = [1, 1]} : vector<64x128xf32> to vector<8x128xf32>
    %372 = arith.truncf %369 : vector<8x32xf32> to vector<8x32xbf16>
    %cst_203 = arith.constant dense<0.000000e+00> : vector<8x128xf32>
    %373 = tpu.matmul %372, %144, %cst_203 {dimension_numbers = #tpu.dot_dimension_numbers<[1], [0], [0], [1], [0, 0, 1, 1], [], []>} : vector<8x32xbf16>, vector<32x128xbf16>, vector<8x128xf32> -> vector<8x128xf32>
    %374 = arith.addf %371, %373 : vector<8x128xf32>
    %375 = vector.extract_strided_slice %374 {offsets = [0, 0], sizes = [8, 32], strides = [1, 1]} : vector<8x128xf32> to vector<8x32xf32>
    %cst_204 = arith.constant 5.000000e-01 : f32
    %376 = vector.broadcast %cst_204 : f32 to vector<8x32xf32>
    %377 = arith.mulf %376, %375 : vector<8x32xf32>
    %378 = math.tanh %377 : vector<8x32xf32>
    %cst_205 = arith.constant 1.000000e+00 : f32
    %379 = vector.broadcast %cst_205 : f32 to vector<8x32xf32>
    %380 = arith.addf %378, %379 : vector<8x32xf32>
    %cst_206 = arith.constant 5.000000e-01 : f32
    %381 = vector.broadcast %cst_206 : f32 to vector<8x32xf32>
    %382 = arith.mulf %381, %380 : vector<8x32xf32>
    %383 = vector.extract_strided_slice %374 {offsets = [0, 32], sizes = [8, 32], strides = [1, 1]} : vector<8x128xf32> to vector<8x32xf32>
    %cst_207 = arith.constant 5.000000e-01 : f32
    %384 = vector.broadcast %cst_207 : f32 to vector<8x32xf32>
    %385 = arith.mulf %384, %383 : vector<8x32xf32>
    %386 = math.tanh %385 : vector<8x32xf32>
    %cst_208 = arith.constant 1.000000e+00 : f32
    %387 = vector.broadcast %cst_208 : f32 to vector<8x32xf32>
    %388 = arith.addf %386, %387 : vector<8x32xf32>
    %cst_209 = arith.constant 5.000000e-01 : f32
    %389 = vector.broadcast %cst_209 : f32 to vector<8x32xf32>
    %390 = arith.mulf %389, %388 : vector<8x32xf32>
    %391 = vector.extract_strided_slice %374 {offsets = [0, 64], sizes = [8, 32], strides = [1, 1]} : vector<8x128xf32> to vector<8x32xf32>
    %392 = math.tanh %391 : vector<8x32xf32>
    %393 = vector.extract_strided_slice %374 {offsets = [0, 96], sizes = [8, 32], strides = [1, 1]} : vector<8x128xf32> to vector<8x32xf32>
    %cst_210 = arith.constant 5.000000e-01 : f32
    %394 = vector.broadcast %cst_210 : f32 to vector<8x32xf32>
    %395 = arith.mulf %394, %393 : vector<8x32xf32>
    %396 = math.tanh %395 : vector<8x32xf32>
    %cst_211 = arith.constant 1.000000e+00 : f32
    %397 = vector.broadcast %cst_211 : f32 to vector<8x32xf32>
    %398 = arith.addf %396, %397 : vector<8x32xf32>
    %cst_212 = arith.constant 5.000000e-01 : f32
    %399 = vector.broadcast %cst_212 : f32 to vector<8x32xf32>
    %400 = arith.mulf %399, %398 : vector<8x32xf32>
    %401 = arith.mulf %390, %367 : vector<8x32xf32>
    %402 = arith.mulf %382, %392 : vector<8x32xf32>
    %403 = arith.addf %401, %402 : vector<8x32xf32>
    %404 = math.tanh %403 : vector<8x32xf32>
    %405 = arith.mulf %400, %404 : vector<8x32xf32>
    %c48 = arith.constant 48 : index
    %c0_213 = arith.constant 0 : index
    %406 = vector.load %arg12[%c48, %c0_213] : memref<64x32xf32, #tpu.memory_space<vmem>>, vector<8x32xf32>
    tpu.vector_store %arg12[%c48, %c0_213], %405 {strides = array<i32>} : memref<64x32xf32, #tpu.memory_space<vmem>>, vector<8x32xf32>,
    %407 = vector.extract_strided_slice %152 {offsets = [56, 0], sizes = [8, 128], strides = [1, 1]} : vector<64x128xf32> to vector<8x128xf32>
    %408 = arith.truncf %405 : vector<8x32xf32> to vector<8x32xbf16>
    %cst_214 = arith.constant dense<0.000000e+00> : vector<8x128xf32>
    %409 = tpu.matmul %408, %144, %cst_214 {dimension_numbers = #tpu.dot_dimension_numbers<[1], [0], [0], [1], [0, 0, 1, 1], [], []>} : vector<8x32xbf16>, vector<32x128xbf16>, vector<8x128xf32> -> vector<8x128xf32>
    %410 = arith.addf %407, %409 : vector<8x128xf32>
    %411 = vector.extract_strided_slice %410 {offsets = [0, 0], sizes = [8, 32], strides = [1, 1]} : vector<8x128xf32> to vector<8x32xf32>
    %cst_215 = arith.constant 5.000000e-01 : f32
    %412 = vector.broadcast %cst_215 : f32 to vector<8x32xf32>
    %413 = arith.mulf %412, %411 : vector<8x32xf32>
    %414 = math.tanh %413 : vector<8x32xf32>
    %cst_216 = arith.constant 1.000000e+00 : f32
    %415 = vector.broadcast %cst_216 : f32 to vector<8x32xf32>
    %416 = arith.addf %414, %415 : vector<8x32xf32>
    %cst_217 = arith.constant 5.000000e-01 : f32
    %417 = vector.broadcast %cst_217 : f32 to vector<8x32xf32>
    %418 = arith.mulf %417, %416 : vector<8x32xf32>
    %419 = vector.extract_strided_slice %410 {offsets = [0, 32], sizes = [8, 32], strides = [1, 1]} : vector<8x128xf32> to vector<8x32xf32>
    %cst_218 = arith.constant 5.000000e-01 : f32
    %420 = vector.broadcast %cst_218 : f32 to vector<8x32xf32>
    %421 = arith.mulf %420, %419 : vector<8x32xf32>
    %422 = math.tanh %421 : vector<8x32xf32>
    %cst_219 = arith.constant 1.000000e+00 : f32
    %423 = vector.broadcast %cst_219 : f32 to vector<8x32xf32>
    %424 = arith.addf %422, %423 : vector<8x32xf32>
    %cst_220 = arith.constant 5.000000e-01 : f32
    %425 = vector.broadcast %cst_220 : f32 to vector<8x32xf32>
    %426 = arith.mulf %425, %424 : vector<8x32xf32>
    %427 = vector.extract_strided_slice %410 {offsets = [0, 64], sizes = [8, 32], strides = [1, 1]} : vector<8x128xf32> to vector<8x32xf32>
    %428 = math.tanh %427 : vector<8x32xf32>
    %429 = vector.extract_strided_slice %410 {offsets = [0, 96], sizes = [8, 32], strides = [1, 1]} : vector<8x128xf32> to vector<8x32xf32>
    %cst_221 = arith.constant 5.000000e-01 : f32
    %430 = vector.broadcast %cst_221 : f32 to vector<8x32xf32>
    %431 = arith.mulf %430, %429 : vector<8x32xf32>
    %432 = math.tanh %431 : vector<8x32xf32>
    %cst_222 = arith.constant 1.000000e+00 : f32
    %433 = vector.broadcast %cst_222 : f32 to vector<8x32xf32>
    %434 = arith.addf %432, %433 : vector<8x32xf32>
    %cst_223 = arith.constant 5.000000e-01 : f32
    %435 = vector.broadcast %cst_223 : f32 to vector<8x32xf32>
    %436 = arith.mulf %435, %434 : vector<8x32xf32>
    %437 = arith.mulf %426, %403 : vector<8x32xf32>
    %438 = arith.mulf %418, %428 : vector<8x32xf32>
    %439 = arith.addf %437, %438 : vector<8x32xf32>
    %440 = math.tanh %439 : vector<8x32xf32>
    %441 = arith.mulf %436, %440 : vector<8x32xf32>
    %c56 = arith.constant 56 : index
    %c0_224 = arith.constant 0 : index
    %442 = vector.load %arg12[%c56, %c0_224] : memref<64x32xf32, #tpu.memory_space<vmem>>, vector<8x32xf32>
    tpu.vector_store %arg12[%c56, %c0_224], %441 {strides = array<i32>} : memref<64x32xf32, #tpu.memory_space<vmem>>, vector<8x32xf32>,
    %c0_225 = arith.constant 0 : index
    %c0_226 = arith.constant 0 : index
    %443 = vector.load %arg12[%c0_225, %c0_226] : memref<64x32xf32, #tpu.memory_space<vmem>>, vector<64x32xf32>
    %444 = arith.truncf %443 : vector<64x32xf32> to vector<64x32xbf16>
    %c0_227 = arith.constant 0 : index
    %c0_228 = arith.constant 0 : index
    %445 = vector.load %arg5[%c0_227, %c0_228] : memref<32x128xbf16, #tpu.memory_space<vmem>>, vector<32x128xbf16>
    %cst_229 = arith.constant dense<0.000000e+00> : vector<64x128xf32>
    %446 = tpu.matmul %444, %445, %cst_229 {dimension_numbers = #tpu.dot_dimension_numbers<[1], [0], [0], [1], [0, 0, 1, 1], [], []>} : vector<64x32xbf16>, vector<32x128xbf16>, vector<64x128xf32> -> vector<64x128xf32>
    %c0_230 = arith.constant 0 : index
    %c0_231 = arith.constant 0 : index
    %447 = vector.load %arg7[%c0_230, %c0_231] : memref<1x128xf32, #tpu.memory_space<vmem>>, vector<1x128xf32>
    %448 = vector.broadcast %447 : vector<1x128xf32> to vector<64x128xf32>
    %449 = arith.addf %446, %448 : vector<64x128xf32>
    %cst_232 = arith.constant 0.000000e+00 : f32
    %450 = vector.broadcast %cst_232 : f32 to vector<8x32xf32>
    %cst_233 = arith.constant 0.000000e+00 : f32
    %451 = vector.broadcast %cst_233 : f32 to vector<8x32xf32>
    %452 = vector.extract_strided_slice %449 {offsets = [0, 0], sizes = [8, 128], strides = [1, 1]} : vector<64x128xf32> to vector<8x128xf32>
    %453 = arith.truncf %450 : vector<8x32xf32> to vector<8x32xbf16>
    %cst_234 = arith.constant dense<0.000000e+00> : vector<8x128xf32>
    %454 = tpu.matmul %453, %145, %cst_234 {dimension_numbers = #tpu.dot_dimension_numbers<[1], [0], [0], [1], [0, 0, 1, 1], [], []>} : vector<8x32xbf16>, vector<32x128xbf16>, vector<8x128xf32> -> vector<8x128xf32>
    %455 = arith.addf %452, %454 : vector<8x128xf32>
    %456 = vector.extract_strided_slice %455 {offsets = [0, 0], sizes = [8, 32], strides = [1, 1]} : vector<8x128xf32> to vector<8x32xf32>
    %cst_235 = arith.constant 5.000000e-01 : f32
    %457 = vector.broadcast %cst_235 : f32 to vector<8x32xf32>
    %458 = arith.mulf %457, %456 : vector<8x32xf32>
    %459 = math.tanh %458 : vector<8x32xf32>
    %cst_236 = arith.constant 1.000000e+00 : f32
    %460 = vector.broadcast %cst_236 : f32 to vector<8x32xf32>
    %461 = arith.addf %459, %460 : vector<8x32xf32>
    %cst_237 = arith.constant 5.000000e-01 : f32
    %462 = vector.broadcast %cst_237 : f32 to vector<8x32xf32>
    %463 = arith.mulf %462, %461 : vector<8x32xf32>
    %464 = vector.extract_strided_slice %455 {offsets = [0, 32], sizes = [8, 32], strides = [1, 1]} : vector<8x128xf32> to vector<8x32xf32>
    %cst_238 = arith.constant 5.000000e-01 : f32
    %465 = vector.broadcast %cst_238 : f32 to vector<8x32xf32>
    %466 = arith.mulf %465, %464 : vector<8x32xf32>
    %467 = math.tanh %466 : vector<8x32xf32>
    %cst_239 = arith.constant 1.000000e+00 : f32
    %468 = vector.broadcast %cst_239 : f32 to vector<8x32xf32>
    %469 = arith.addf %467, %468 : vector<8x32xf32>
    %cst_240 = arith.constant 5.000000e-01 : f32
    %470 = vector.broadcast %cst_240 : f32 to vector<8x32xf32>
    %471 = arith.mulf %470, %469 : vector<8x32xf32>
    %472 = vector.extract_strided_slice %455 {offsets = [0, 64], sizes = [8, 32], strides = [1, 1]} : vector<8x128xf32> to vector<8x32xf32>
    %473 = math.tanh %472 : vector<8x32xf32>
    %474 = vector.extract_strided_slice %455 {offsets = [0, 96], sizes = [8, 32], strides = [1, 1]} : vector<8x128xf32> to vector<8x32xf32>
    %cst_241 = arith.constant 5.000000e-01 : f32
    %475 = vector.broadcast %cst_241 : f32 to vector<8x32xf32>
    %476 = arith.mulf %475, %474 : vector<8x32xf32>
    %477 = math.tanh %476 : vector<8x32xf32>
    %cst_242 = arith.constant 1.000000e+00 : f32
    %478 = vector.broadcast %cst_242 : f32 to vector<8x32xf32>
    %479 = arith.addf %477, %478 : vector<8x32xf32>
    %cst_243 = arith.constant 5.000000e-01 : f32
    %480 = vector.broadcast %cst_243 : f32 to vector<8x32xf32>
    %481 = arith.mulf %480, %479 : vector<8x32xf32>
    %482 = arith.mulf %471, %451 : vector<8x32xf32>
    %483 = arith.mulf %463, %473 : vector<8x32xf32>
    %484 = arith.addf %482, %483 : vector<8x32xf32>
    %485 = math.tanh %484 : vector<8x32xf32>
    %486 = arith.mulf %481, %485 : vector<8x32xf32>
    %487 = vector.extract_strided_slice %449 {offsets = [8, 0], sizes = [8, 128], strides = [1, 1]} : vector<64x128xf32> to vector<8x128xf32>
    %488 = arith.truncf %486 : vector<8x32xf32> to vector<8x32xbf16>
    %cst_244 = arith.constant dense<0.000000e+00> : vector<8x128xf32>
    %489 = tpu.matmul %488, %145, %cst_244 {dimension_numbers = #tpu.dot_dimension_numbers<[1], [0], [0], [1], [0, 0, 1, 1], [], []>} : vector<8x32xbf16>, vector<32x128xbf16>, vector<8x128xf32> -> vector<8x128xf32>
    %490 = arith.addf %487, %489 : vector<8x128xf32>
    %491 = vector.extract_strided_slice %490 {offsets = [0, 0], sizes = [8, 32], strides = [1, 1]} : vector<8x128xf32> to vector<8x32xf32>
    %cst_245 = arith.constant 5.000000e-01 : f32
    %492 = vector.broadcast %cst_245 : f32 to vector<8x32xf32>
    %493 = arith.mulf %492, %491 : vector<8x32xf32>
    %494 = math.tanh %493 : vector<8x32xf32>
    %cst_246 = arith.constant 1.000000e+00 : f32
    %495 = vector.broadcast %cst_246 : f32 to vector<8x32xf32>
    %496 = arith.addf %494, %495 : vector<8x32xf32>
    %cst_247 = arith.constant 5.000000e-01 : f32
    %497 = vector.broadcast %cst_247 : f32 to vector<8x32xf32>
    %498 = arith.mulf %497, %496 : vector<8x32xf32>
    %499 = vector.extract_strided_slice %490 {offsets = [0, 32], sizes = [8, 32], strides = [1, 1]} : vector<8x128xf32> to vector<8x32xf32>
    %cst_248 = arith.constant 5.000000e-01 : f32
    %500 = vector.broadcast %cst_248 : f32 to vector<8x32xf32>
    %501 = arith.mulf %500, %499 : vector<8x32xf32>
    %502 = math.tanh %501 : vector<8x32xf32>
    %cst_249 = arith.constant 1.000000e+00 : f32
    %503 = vector.broadcast %cst_249 : f32 to vector<8x32xf32>
    %504 = arith.addf %502, %503 : vector<8x32xf32>
    %cst_250 = arith.constant 5.000000e-01 : f32
    %505 = vector.broadcast %cst_250 : f32 to vector<8x32xf32>
    %506 = arith.mulf %505, %504 : vector<8x32xf32>
    %507 = vector.extract_strided_slice %490 {offsets = [0, 64], sizes = [8, 32], strides = [1, 1]} : vector<8x128xf32> to vector<8x32xf32>
    %508 = math.tanh %507 : vector<8x32xf32>
    %509 = vector.extract_strided_slice %490 {offsets = [0, 96], sizes = [8, 32], strides = [1, 1]} : vector<8x128xf32> to vector<8x32xf32>
    %cst_251 = arith.constant 5.000000e-01 : f32
    %510 = vector.broadcast %cst_251 : f32 to vector<8x32xf32>
    %511 = arith.mulf %510, %509 : vector<8x32xf32>
    %512 = math.tanh %511 : vector<8x32xf32>
    %cst_252 = arith.constant 1.000000e+00 : f32
    %513 = vector.broadcast %cst_252 : f32 to vector<8x32xf32>
    %514 = arith.addf %512, %513 : vector<8x32xf32>
    %cst_253 = arith.constant 5.000000e-01 : f32
    %515 = vector.broadcast %cst_253 : f32 to vector<8x32xf32>
    %516 = arith.mulf %515, %514 : vector<8x32xf32>
    %517 = arith.mulf %506, %484 : vector<8x32xf32>
    %518 = arith.mulf %498, %508 : vector<8x32xf32>
    %519 = arith.addf %517, %518 : vector<8x32xf32>
    %520 = math.tanh %519 : vector<8x32xf32>
    %521 = arith.mulf %516, %520 : vector<8x32xf32>
    %522 = vector.extract_strided_slice %449 {offsets = [16, 0], sizes = [8, 128], strides = [1, 1]} : vector<64x128xf32> to vector<8x128xf32>
    %523 = arith.truncf %521 : vector<8x32xf32> to vector<8x32xbf16>
    %cst_254 = arith.constant dense<0.000000e+00> : vector<8x128xf32>
    %524 = tpu.matmul %523, %145, %cst_254 {dimension_numbers = #tpu.dot_dimension_numbers<[1], [0], [0], [1], [0, 0, 1, 1], [], []>} : vector<8x32xbf16>, vector<32x128xbf16>, vector<8x128xf32> -> vector<8x128xf32>
    %525 = arith.addf %522, %524 : vector<8x128xf32>
    %526 = vector.extract_strided_slice %525 {offsets = [0, 0], sizes = [8, 32], strides = [1, 1]} : vector<8x128xf32> to vector<8x32xf32>
    %cst_255 = arith.constant 5.000000e-01 : f32
    %527 = vector.broadcast %cst_255 : f32 to vector<8x32xf32>
    %528 = arith.mulf %527, %526 : vector<8x32xf32>
    %529 = math.tanh %528 : vector<8x32xf32>
    %cst_256 = arith.constant 1.000000e+00 : f32
    %530 = vector.broadcast %cst_256 : f32 to vector<8x32xf32>
    %531 = arith.addf %529, %530 : vector<8x32xf32>
    %cst_257 = arith.constant 5.000000e-01 : f32
    %532 = vector.broadcast %cst_257 : f32 to vector<8x32xf32>
    %533 = arith.mulf %532, %531 : vector<8x32xf32>
    %534 = vector.extract_strided_slice %525 {offsets = [0, 32], sizes = [8, 32], strides = [1, 1]} : vector<8x128xf32> to vector<8x32xf32>
    %cst_258 = arith.constant 5.000000e-01 : f32
    %535 = vector.broadcast %cst_258 : f32 to vector<8x32xf32>
    %536 = arith.mulf %535, %534 : vector<8x32xf32>
    %537 = math.tanh %536 : vector<8x32xf32>
    %cst_259 = arith.constant 1.000000e+00 : f32
    %538 = vector.broadcast %cst_259 : f32 to vector<8x32xf32>
    %539 = arith.addf %537, %538 : vector<8x32xf32>
    %cst_260 = arith.constant 5.000000e-01 : f32
    %540 = vector.broadcast %cst_260 : f32 to vector<8x32xf32>
    %541 = arith.mulf %540, %539 : vector<8x32xf32>
    %542 = vector.extract_strided_slice %525 {offsets = [0, 64], sizes = [8, 32], strides = [1, 1]} : vector<8x128xf32> to vector<8x32xf32>
    %543 = math.tanh %542 : vector<8x32xf32>
    %544 = vector.extract_strided_slice %525 {offsets = [0, 96], sizes = [8, 32], strides = [1, 1]} : vector<8x128xf32> to vector<8x32xf32>
    %cst_261 = arith.constant 5.000000e-01 : f32
    %545 = vector.broadcast %cst_261 : f32 to vector<8x32xf32>
    %546 = arith.mulf %545, %544 : vector<8x32xf32>
    %547 = math.tanh %546 : vector<8x32xf32>
    %cst_262 = arith.constant 1.000000e+00 : f32
    %548 = vector.broadcast %cst_262 : f32 to vector<8x32xf32>
    %549 = arith.addf %547, %548 : vector<8x32xf32>
    %cst_263 = arith.constant 5.000000e-01 : f32
    %550 = vector.broadcast %cst_263 : f32 to vector<8x32xf32>
    %551 = arith.mulf %550, %549 : vector<8x32xf32>
    %552 = arith.mulf %541, %519 : vector<8x32xf32>
    %553 = arith.mulf %533, %543 : vector<8x32xf32>
    %554 = arith.addf %552, %553 : vector<8x32xf32>
    %555 = math.tanh %554 : vector<8x32xf32>
    %556 = arith.mulf %551, %555 : vector<8x32xf32>
    %557 = vector.extract_strided_slice %449 {offsets = [24, 0], sizes = [8, 128], strides = [1, 1]} : vector<64x128xf32> to vector<8x128xf32>
    %558 = arith.truncf %556 : vector<8x32xf32> to vector<8x32xbf16>
    %cst_264 = arith.constant dense<0.000000e+00> : vector<8x128xf32>
    %559 = tpu.matmul %558, %145, %cst_264 {dimension_numbers = #tpu.dot_dimension_numbers<[1], [0], [0], [1], [0, 0, 1, 1], [], []>} : vector<8x32xbf16>, vector<32x128xbf16>, vector<8x128xf32> -> vector<8x128xf32>
    %560 = arith.addf %557, %559 : vector<8x128xf32>
    %561 = vector.extract_strided_slice %560 {offsets = [0, 0], sizes = [8, 32], strides = [1, 1]} : vector<8x128xf32> to vector<8x32xf32>
    %cst_265 = arith.constant 5.000000e-01 : f32
    %562 = vector.broadcast %cst_265 : f32 to vector<8x32xf32>
    %563 = arith.mulf %562, %561 : vector<8x32xf32>
    %564 = math.tanh %563 : vector<8x32xf32>
    %cst_266 = arith.constant 1.000000e+00 : f32
    %565 = vector.broadcast %cst_266 : f32 to vector<8x32xf32>
    %566 = arith.addf %564, %565 : vector<8x32xf32>
    %cst_267 = arith.constant 5.000000e-01 : f32
    %567 = vector.broadcast %cst_267 : f32 to vector<8x32xf32>
    %568 = arith.mulf %567, %566 : vector<8x32xf32>
    %569 = vector.extract_strided_slice %560 {offsets = [0, 32], sizes = [8, 32], strides = [1, 1]} : vector<8x128xf32> to vector<8x32xf32>
    %cst_268 = arith.constant 5.000000e-01 : f32
    %570 = vector.broadcast %cst_268 : f32 to vector<8x32xf32>
    %571 = arith.mulf %570, %569 : vector<8x32xf32>
    %572 = math.tanh %571 : vector<8x32xf32>
    %cst_269 = arith.constant 1.000000e+00 : f32
    %573 = vector.broadcast %cst_269 : f32 to vector<8x32xf32>
    %574 = arith.addf %572, %573 : vector<8x32xf32>
    %cst_270 = arith.constant 5.000000e-01 : f32
    %575 = vector.broadcast %cst_270 : f32 to vector<8x32xf32>
    %576 = arith.mulf %575, %574 : vector<8x32xf32>
    %577 = vector.extract_strided_slice %560 {offsets = [0, 64], sizes = [8, 32], strides = [1, 1]} : vector<8x128xf32> to vector<8x32xf32>
    %578 = math.tanh %577 : vector<8x32xf32>
    %579 = vector.extract_strided_slice %560 {offsets = [0, 96], sizes = [8, 32], strides = [1, 1]} : vector<8x128xf32> to vector<8x32xf32>
    %cst_271 = arith.constant 5.000000e-01 : f32
    %580 = vector.broadcast %cst_271 : f32 to vector<8x32xf32>
    %581 = arith.mulf %580, %579 : vector<8x32xf32>
    %582 = math.tanh %581 : vector<8x32xf32>
    %cst_272 = arith.constant 1.000000e+00 : f32
    %583 = vector.broadcast %cst_272 : f32 to vector<8x32xf32>
    %584 = arith.addf %582, %583 : vector<8x32xf32>
    %cst_273 = arith.constant 5.000000e-01 : f32
    %585 = vector.broadcast %cst_273 : f32 to vector<8x32xf32>
    %586 = arith.mulf %585, %584 : vector<8x32xf32>
    %587 = arith.mulf %576, %554 : vector<8x32xf32>
    %588 = arith.mulf %568, %578 : vector<8x32xf32>
    %589 = arith.addf %587, %588 : vector<8x32xf32>
    %590 = math.tanh %589 : vector<8x32xf32>
    %591 = arith.mulf %586, %590 : vector<8x32xf32>
    %592 = vector.extract_strided_slice %449 {offsets = [32, 0], sizes = [8, 128], strides = [1, 1]} : vector<64x128xf32> to vector<8x128xf32>
    %593 = arith.truncf %591 : vector<8x32xf32> to vector<8x32xbf16>
    %cst_274 = arith.constant dense<0.000000e+00> : vector<8x128xf32>
    %594 = tpu.matmul %593, %145, %cst_274 {dimension_numbers = #tpu.dot_dimension_numbers<[1], [0], [0], [1], [0, 0, 1, 1], [], []>} : vector<8x32xbf16>, vector<32x128xbf16>, vector<8x128xf32> -> vector<8x128xf32>
    %595 = arith.addf %592, %594 : vector<8x128xf32>
    %596 = vector.extract_strided_slice %595 {offsets = [0, 0], sizes = [8, 32], strides = [1, 1]} : vector<8x128xf32> to vector<8x32xf32>
    %cst_275 = arith.constant 5.000000e-01 : f32
    %597 = vector.broadcast %cst_275 : f32 to vector<8x32xf32>
    %598 = arith.mulf %597, %596 : vector<8x32xf32>
    %599 = math.tanh %598 : vector<8x32xf32>
    %cst_276 = arith.constant 1.000000e+00 : f32
    %600 = vector.broadcast %cst_276 : f32 to vector<8x32xf32>
    %601 = arith.addf %599, %600 : vector<8x32xf32>
    %cst_277 = arith.constant 5.000000e-01 : f32
    %602 = vector.broadcast %cst_277 : f32 to vector<8x32xf32>
    %603 = arith.mulf %602, %601 : vector<8x32xf32>
    %604 = vector.extract_strided_slice %595 {offsets = [0, 32], sizes = [8, 32], strides = [1, 1]} : vector<8x128xf32> to vector<8x32xf32>
    %cst_278 = arith.constant 5.000000e-01 : f32
    %605 = vector.broadcast %cst_278 : f32 to vector<8x32xf32>
    %606 = arith.mulf %605, %604 : vector<8x32xf32>
    %607 = math.tanh %606 : vector<8x32xf32>
    %cst_279 = arith.constant 1.000000e+00 : f32
    %608 = vector.broadcast %cst_279 : f32 to vector<8x32xf32>
    %609 = arith.addf %607, %608 : vector<8x32xf32>
    %cst_280 = arith.constant 5.000000e-01 : f32
    %610 = vector.broadcast %cst_280 : f32 to vector<8x32xf32>
    %611 = arith.mulf %610, %609 : vector<8x32xf32>
    %612 = vector.extract_strided_slice %595 {offsets = [0, 64], sizes = [8, 32], strides = [1, 1]} : vector<8x128xf32> to vector<8x32xf32>
    %613 = math.tanh %612 : vector<8x32xf32>
    %614 = vector.extract_strided_slice %595 {offsets = [0, 96], sizes = [8, 32], strides = [1, 1]} : vector<8x128xf32> to vector<8x32xf32>
    %cst_281 = arith.constant 5.000000e-01 : f32
    %615 = vector.broadcast %cst_281 : f32 to vector<8x32xf32>
    %616 = arith.mulf %615, %614 : vector<8x32xf32>
    %617 = math.tanh %616 : vector<8x32xf32>
    %cst_282 = arith.constant 1.000000e+00 : f32
    %618 = vector.broadcast %cst_282 : f32 to vector<8x32xf32>
    %619 = arith.addf %617, %618 : vector<8x32xf32>
    %cst_283 = arith.constant 5.000000e-01 : f32
    %620 = vector.broadcast %cst_283 : f32 to vector<8x32xf32>
    %621 = arith.mulf %620, %619 : vector<8x32xf32>
    %622 = arith.mulf %611, %589 : vector<8x32xf32>
    %623 = arith.mulf %603, %613 : vector<8x32xf32>
    %624 = arith.addf %622, %623 : vector<8x32xf32>
    %625 = math.tanh %624 : vector<8x32xf32>
    %626 = arith.mulf %621, %625 : vector<8x32xf32>
    %627 = vector.extract_strided_slice %449 {offsets = [40, 0], sizes = [8, 128], strides = [1, 1]} : vector<64x128xf32> to vector<8x128xf32>
    %628 = arith.truncf %626 : vector<8x32xf32> to vector<8x32xbf16>
    %cst_284 = arith.constant dense<0.000000e+00> : vector<8x128xf32>
    %629 = tpu.matmul %628, %145, %cst_284 {dimension_numbers = #tpu.dot_dimension_numbers<[1], [0], [0], [1], [0, 0, 1, 1], [], []>} : vector<8x32xbf16>, vector<32x128xbf16>, vector<8x128xf32> -> vector<8x128xf32>
    %630 = arith.addf %627, %629 : vector<8x128xf32>
    %631 = vector.extract_strided_slice %630 {offsets = [0, 0], sizes = [8, 32], strides = [1, 1]} : vector<8x128xf32> to vector<8x32xf32>
    %cst_285 = arith.constant 5.000000e-01 : f32
    %632 = vector.broadcast %cst_285 : f32 to vector<8x32xf32>
    %633 = arith.mulf %632, %631 : vector<8x32xf32>
    %634 = math.tanh %633 : vector<8x32xf32>
    %cst_286 = arith.constant 1.000000e+00 : f32
    %635 = vector.broadcast %cst_286 : f32 to vector<8x32xf32>
    %636 = arith.addf %634, %635 : vector<8x32xf32>
    %cst_287 = arith.constant 5.000000e-01 : f32
    %637 = vector.broadcast %cst_287 : f32 to vector<8x32xf32>
    %638 = arith.mulf %637, %636 : vector<8x32xf32>
    %639 = vector.extract_strided_slice %630 {offsets = [0, 32], sizes = [8, 32], strides = [1, 1]} : vector<8x128xf32> to vector<8x32xf32>
    %cst_288 = arith.constant 5.000000e-01 : f32
    %640 = vector.broadcast %cst_288 : f32 to vector<8x32xf32>
    %641 = arith.mulf %640, %639 : vector<8x32xf32>
    %642 = math.tanh %641 : vector<8x32xf32>
    %cst_289 = arith.constant 1.000000e+00 : f32
    %643 = vector.broadcast %cst_289 : f32 to vector<8x32xf32>
    %644 = arith.addf %642, %643 : vector<8x32xf32>
    %cst_290 = arith.constant 5.000000e-01 : f32
    %645 = vector.broadcast %cst_290 : f32 to vector<8x32xf32>
    %646 = arith.mulf %645, %644 : vector<8x32xf32>
    %647 = vector.extract_strided_slice %630 {offsets = [0, 64], sizes = [8, 32], strides = [1, 1]} : vector<8x128xf32> to vector<8x32xf32>
    %648 = math.tanh %647 : vector<8x32xf32>
    %649 = vector.extract_strided_slice %630 {offsets = [0, 96], sizes = [8, 32], strides = [1, 1]} : vector<8x128xf32> to vector<8x32xf32>
    %cst_291 = arith.constant 5.000000e-01 : f32
    %650 = vector.broadcast %cst_291 : f32 to vector<8x32xf32>
    %651 = arith.mulf %650, %649 : vector<8x32xf32>
    %652 = math.tanh %651 : vector<8x32xf32>
    %cst_292 = arith.constant 1.000000e+00 : f32
    %653 = vector.broadcast %cst_292 : f32 to vector<8x32xf32>
    %654 = arith.addf %652, %653 : vector<8x32xf32>
    %cst_293 = arith.constant 5.000000e-01 : f32
    %655 = vector.broadcast %cst_293 : f32 to vector<8x32xf32>
    %656 = arith.mulf %655, %654 : vector<8x32xf32>
    %657 = arith.mulf %646, %624 : vector<8x32xf32>
    %658 = arith.mulf %638, %648 : vector<8x32xf32>
    %659 = arith.addf %657, %658 : vector<8x32xf32>
    %660 = math.tanh %659 : vector<8x32xf32>
    %661 = arith.mulf %656, %660 : vector<8x32xf32>
    %662 = vector.extract_strided_slice %449 {offsets = [48, 0], sizes = [8, 128], strides = [1, 1]} : vector<64x128xf32> to vector<8x128xf32>
    %663 = arith.truncf %661 : vector<8x32xf32> to vector<8x32xbf16>
    %cst_294 = arith.constant dense<0.000000e+00> : vector<8x128xf32>
    %664 = tpu.matmul %663, %145, %cst_294 {dimension_numbers = #tpu.dot_dimension_numbers<[1], [0], [0], [1], [0, 0, 1, 1], [], []>} : vector<8x32xbf16>, vector<32x128xbf16>, vector<8x128xf32> -> vector<8x128xf32>
    %665 = arith.addf %662, %664 : vector<8x128xf32>
    %666 = vector.extract_strided_slice %665 {offsets = [0, 0], sizes = [8, 32], strides = [1, 1]} : vector<8x128xf32> to vector<8x32xf32>
    %cst_295 = arith.constant 5.000000e-01 : f32
    %667 = vector.broadcast %cst_295 : f32 to vector<8x32xf32>
    %668 = arith.mulf %667, %666 : vector<8x32xf32>
    %669 = math.tanh %668 : vector<8x32xf32>
    %cst_296 = arith.constant 1.000000e+00 : f32
    %670 = vector.broadcast %cst_296 : f32 to vector<8x32xf32>
    %671 = arith.addf %669, %670 : vector<8x32xf32>
    %cst_297 = arith.constant 5.000000e-01 : f32
    %672 = vector.broadcast %cst_297 : f32 to vector<8x32xf32>
    %673 = arith.mulf %672, %671 : vector<8x32xf32>
    %674 = vector.extract_strided_slice %665 {offsets = [0, 32], sizes = [8, 32], strides = [1, 1]} : vector<8x128xf32> to vector<8x32xf32>
    %cst_298 = arith.constant 5.000000e-01 : f32
    %675 = vector.broadcast %cst_298 : f32 to vector<8x32xf32>
    %676 = arith.mulf %675, %674 : vector<8x32xf32>
    %677 = math.tanh %676 : vector<8x32xf32>
    %cst_299 = arith.constant 1.000000e+00 : f32
    %678 = vector.broadcast %cst_299 : f32 to vector<8x32xf32>
    %679 = arith.addf %677, %678 : vector<8x32xf32>
    %cst_300 = arith.constant 5.000000e-01 : f32
    %680 = vector.broadcast %cst_300 : f32 to vector<8x32xf32>
    %681 = arith.mulf %680, %679 : vector<8x32xf32>
    %682 = vector.extract_strided_slice %665 {offsets = [0, 64], sizes = [8, 32], strides = [1, 1]} : vector<8x128xf32> to vector<8x32xf32>
    %683 = math.tanh %682 : vector<8x32xf32>
    %684 = vector.extract_strided_slice %665 {offsets = [0, 96], sizes = [8, 32], strides = [1, 1]} : vector<8x128xf32> to vector<8x32xf32>
    %cst_301 = arith.constant 5.000000e-01 : f32
    %685 = vector.broadcast %cst_301 : f32 to vector<8x32xf32>
    %686 = arith.mulf %685, %684 : vector<8x32xf32>
    %687 = math.tanh %686 : vector<8x32xf32>
    %cst_302 = arith.constant 1.000000e+00 : f32
    %688 = vector.broadcast %cst_302 : f32 to vector<8x32xf32>
    %689 = arith.addf %687, %688 : vector<8x32xf32>
    %cst_303 = arith.constant 5.000000e-01 : f32
    %690 = vector.broadcast %cst_303 : f32 to vector<8x32xf32>
    %691 = arith.mulf %690, %689 : vector<8x32xf32>
    %692 = arith.mulf %681, %659 : vector<8x32xf32>
    %693 = arith.mulf %673, %683 : vector<8x32xf32>
    %694 = arith.addf %692, %693 : vector<8x32xf32>
    %695 = math.tanh %694 : vector<8x32xf32>
    %696 = arith.mulf %691, %695 : vector<8x32xf32>
    %697 = vector.extract_strided_slice %449 {offsets = [56, 0], sizes = [8, 128], strides = [1, 1]} : vector<64x128xf32> to vector<8x128xf32>
    %698 = arith.truncf %696 : vector<8x32xf32> to vector<8x32xbf16>
    %cst_304 = arith.constant dense<0.000000e+00> : vector<8x128xf32>
    %699 = tpu.matmul %698, %145, %cst_304 {dimension_numbers = #tpu.dot_dimension_numbers<[1], [0], [0], [1], [0, 0, 1, 1], [], []>} : vector<8x32xbf16>, vector<32x128xbf16>, vector<8x128xf32> -> vector<8x128xf32>
    %700 = arith.addf %697, %699 : vector<8x128xf32>
    %701 = vector.extract_strided_slice %700 {offsets = [0, 0], sizes = [8, 32], strides = [1, 1]} : vector<8x128xf32> to vector<8x32xf32>
    %cst_305 = arith.constant 5.000000e-01 : f32
    %702 = vector.broadcast %cst_305 : f32 to vector<8x32xf32>
    %703 = arith.mulf %702, %701 : vector<8x32xf32>
    %704 = math.tanh %703 : vector<8x32xf32>
    %cst_306 = arith.constant 1.000000e+00 : f32
    %705 = vector.broadcast %cst_306 : f32 to vector<8x32xf32>
    %706 = arith.addf %704, %705 : vector<8x32xf32>
    %cst_307 = arith.constant 5.000000e-01 : f32
    %707 = vector.broadcast %cst_307 : f32 to vector<8x32xf32>
    %708 = arith.mulf %707, %706 : vector<8x32xf32>
    %709 = vector.extract_strided_slice %700 {offsets = [0, 32], sizes = [8, 32], strides = [1, 1]} : vector<8x128xf32> to vector<8x32xf32>
    %cst_308 = arith.constant 5.000000e-01 : f32
    %710 = vector.broadcast %cst_308 : f32 to vector<8x32xf32>
    %711 = arith.mulf %710, %709 : vector<8x32xf32>
    %712 = math.tanh %711 : vector<8x32xf32>
    %cst_309 = arith.constant 1.000000e+00 : f32
    %713 = vector.broadcast %cst_309 : f32 to vector<8x32xf32>
    %714 = arith.addf %712, %713 : vector<8x32xf32>
    %cst_310 = arith.constant 5.000000e-01 : f32
    %715 = vector.broadcast %cst_310 : f32 to vector<8x32xf32>
    %716 = arith.mulf %715, %714 : vector<8x32xf32>
    %717 = vector.extract_strided_slice %700 {offsets = [0, 64], sizes = [8, 32], strides = [1, 1]} : vector<8x128xf32> to vector<8x32xf32>
    %718 = math.tanh %717 : vector<8x32xf32>
    %719 = vector.extract_strided_slice %700 {offsets = [0, 96], sizes = [8, 32], strides = [1, 1]} : vector<8x128xf32> to vector<8x32xf32>
    %cst_311 = arith.constant 5.000000e-01 : f32
    %720 = vector.broadcast %cst_311 : f32 to vector<8x32xf32>
    %721 = arith.mulf %720, %719 : vector<8x32xf32>
    %722 = math.tanh %721 : vector<8x32xf32>
    %cst_312 = arith.constant 1.000000e+00 : f32
    %723 = vector.broadcast %cst_312 : f32 to vector<8x32xf32>
    %724 = arith.addf %722, %723 : vector<8x32xf32>
    %cst_313 = arith.constant 5.000000e-01 : f32
    %725 = vector.broadcast %cst_313 : f32 to vector<8x32xf32>
    %726 = arith.mulf %725, %724 : vector<8x32xf32>
    %727 = arith.mulf %716, %694 : vector<8x32xf32>
    %728 = arith.mulf %708, %718 : vector<8x32xf32>
    %729 = arith.addf %727, %728 : vector<8x32xf32>
    %730 = math.tanh %729 : vector<8x32xf32>
    %731 = arith.mulf %726, %730 : vector<8x32xf32>
    %732 = arith.truncf %731 : vector<8x32xf32> to vector<8x32xbf16>
    %c0_314 = arith.constant 0 : index
    %c0_315 = arith.constant 0 : index
    %733 = vector.load %arg8[%c0_314, %c0_315] : memref<32x8xbf16, #tpu.memory_space<vmem>>, vector<32x8xbf16>
    %cst_316 = arith.constant dense<0.000000e+00> : vector<8x8xf32>
    %734 = tpu.matmul %732, %733, %cst_316 {dimension_numbers = #tpu.dot_dimension_numbers<[1], [0], [0], [1], [0, 0, 1, 1], [], []>} : vector<8x32xbf16>, vector<32x8xbf16>, vector<8x8xf32> -> vector<8x8xf32>
    %c0_317 = arith.constant 0 : index
    %c0_318 = arith.constant 0 : index
    %735 = vector.load %arg9[%c0_317, %c0_318] : memref<1x8xf32, #tpu.memory_space<vmem>>, vector<1x8xf32>
    %736 = vector.broadcast %735 : vector<1x8xf32> to vector<8x8xf32>
    %737 = arith.addf %734, %736 : vector<8x8xf32>
    %cst_319 = arith.constant dense<0xFF800000> : vector<8xf32>
    %738 = vector.multi_reduction <maximumf>, %737, %cst_319 [1] : vector<8x8xf32> to vector<8xf32>
    %739 = vector.shape_cast %738 : vector<8xf32> to vector<8x1xf32>
    %740 = vector.broadcast %739 : vector<8x1xf32> to vector<8x8xf32>
    %741 = arith.subf %737, %740 : vector<8x8xf32>
    %742 = math.exp %741 : vector<8x8xf32>
    %cst_320 = arith.constant dense<0.000000e+00> : vector<8xf32>
    %743 = vector.multi_reduction <add>, %742, %cst_320 [1] : vector<8x8xf32> to vector<8xf32>
    %744 = vector.shape_cast %743 : vector<8xf32> to vector<8x1xf32>
    %745 = math.log %744 : vector<8x1xf32>
    %746 = vector.broadcast %745 : vector<8x1xf32> to vector<8x8xf32>
    %747 = arith.subf %741, %746 : vector<8x8xf32>
    %c0_321 = arith.constant 0 : index
    %c0_322 = arith.constant 0 : index
    %748 = vector.load %arg10[%c0_321, %c0_322] : memref<8x8xf32, #tpu.memory_space<vmem>>, vector<8x8xf32>
    tpu.vector_store %arg10[%c0_321, %c0_322], %747 {strides = array<i32>} : memref<8x8xf32, #tpu.memory_space<vmem>>, vector<8x8xf32>,
    return
  }
}

</mosaic_0001>

<llo_original>
// kernel: lstm_forward.1
$region0: #{lstm_forward.1}
  #allocation0 [shape = 'u32[]', space=smem, size = 0x4, offset = 0x4, fixed_abs, tag = 'smem constant byte address 0x4 - core index']
  #allocation1 [shape = 'u32[72,128]{1,0:T(1,128)}', space=vmem, size = 0x9000, scoped, tag = 'internal scratch']
  #allocation2 [shape = 'f32[64,64]{1,0:T(8,128)}', space=vmem, size = 0x8000, scoped, tag = 'scratch operand']
  #allocation3 [shape = 'f32[64,32]{1,0:T(8,128)}', space=vmem, size = 0x8000, scoped, tag = 'scratch operand']
  #allocation4 [shape = 's32[16]{0}', space=sflag, size = 0x40, scoped, tag = 'scratch operand']
  #allocation7 [shape = 's32[]', space=sflag, size = 0x4, offset = 0, fixed_abs, tag = 'sflag constant byte address 0x0 - dummy sync flag']
  #allocation8 [shape = 's32[]', space=sflag, size = 0x4, offset = 0, fixed_abs, tag = 'sflag constant byte address 0x0 - dummy sync flag']
  #allocation9 [shape = 's32[]', space=sflag, size = 0x4, offset = 0, fixed_abs, tag = 'sflag constant byte address 0x0 - dummy sync flag']
  #allocation10 [shape = 's32[]', space=sflag, size = 0x4, offset = 0, fixed_abs, tag = 'sflag constant byte address 0x0 - dummy sync flag']
  #allocation11 [shape = 's32[]', space=sflag, size = 0x4, offset = 0, fixed_abs, tag = 'sflag constant byte address 0x0 - dummy sync flag']
  #allocation12 [shape = 's32[]', space=sflag, size = 0x4, offset = 0, fixed_abs, tag = 'sflag constant byte address 0x0 - dummy sync flag']
  #allocation13 [shape = 's32[]', space=sflag, size = 0x4, offset = 0, fixed_abs, tag = 'sflag constant byte address 0x0 - dummy sync flag']
  #allocation14 [shape = 's32[]', space=sflag, size = 0x4, offset = 0, fixed_abs, tag = 'sflag constant byte address 0x0 - dummy sync flag']
  #allocation15 [shape = 's32[]', space=sflag, size = 0x4, offset = 0, fixed_abs, tag = 'sflag constant byte address 0x0 - dummy sync flag']
  #allocation16 [shape = 's32[]', space=sflag, size = 0x4, offset = 0, fixed_abs, tag = 'sflag constant byte address 0x0 - dummy sync flag']
  #allocation17 [shape = 's32[]', space=sflag, size = 0x4, offset = 0, fixed_abs, tag = 'sflag constant byte address 0x0 - dummy sync flag']
  #allocation18 [shape = 's32[]', space=sflag, size = 0x4, offset = 0, fixed_abs, tag = 'sflag constant byte address 0x0 - dummy sync flag']
  #allocation19 [shape = 's32[]', space=sflag, size = 0x4, offset = 0, fixed_abs, tag = 'sflag constant byte address 0x0 - dummy sync flag']
  #allocation20 [shape = 's32[]', space=sflag, size = 0x4, offset = 0, fixed_abs, tag = 'sflag constant byte address 0x0 - dummy sync flag']
  #allocation21 [shape = 's32[]', space=sflag, size = 0x4, offset = 0, fixed_abs, tag = 'sflag constant byte address 0x0 - dummy sync flag']
  #allocation22 [shape = 's32[]', space=sflag, size = 0x4, offset = 0, fixed_abs, tag = 'sflag constant byte address 0x0 - dummy sync flag']
  %s0 = inlined_call_operand.vmem [shape: s32[2,8], index: 0, kind: input, shape index: {}]
  %s1 = inlined_call_operand.vmem [shape: f32[17578,64], index: 1, kind: input, shape index: {}]
  %s2 = inlined_call_operand.vmem [shape: bf16[64,128], index: 2, kind: input, shape index: {}]
  %s3 = inlined_call_operand.vmem [shape: bf16[32,128], index: 3, kind: input, shape index: {}]
  %s4 = inlined_call_operand.vmem [shape: f32[1,128], index: 4, kind: input, shape index: {}]
  %s5 = inlined_call_operand.vmem [shape: bf16[32,128], index: 5, kind: input, shape index: {}]
  %s6 = inlined_call_operand.vmem [shape: bf16[32,128], index: 6, kind: input, shape index: {}]
  %s7 = inlined_call_operand.vmem [shape: f32[1,128], index: 7, kind: input, shape index: {}]
  %s8 = inlined_call_operand.vmem [shape: bf16[32,8], index: 8, kind: input, shape index: {}]
  %s9 = inlined_call_operand.vmem [shape: f32[1,8], index: 9, kind: input, shape index: {}]
  %s10 = inlined_call_operand.vmem [shape: f32[8,8], index: 10, kind: output, shape index: {}]
  %s11 = sld [smem:[#allocation0]]
  $region530: #{lstm_forward.1} parent=0
    _
  %s13 = ssub.s32 1, %s11
  %s14 = scalar_select 0, %s13, %s11
  $region1: #{lstm_forward.1} parent=0
    #allocation5 [shape = 'u8[1024]{0}', space=smem, size = 0x400, scoped, tag = 'input window, operand 0, single buffered']
    #allocation6 [shape = 's32[1]{0}', space=sflag, size = 0x4, scoped, tag = 'scoped memory for lstm_forward.1']
    %15 = vsyncpa [#allocation6], 0
    // Predicated region
    $region2: #{lstm_forward.1} parent=1 // pred_check
      _
    $region3: #{lstm_forward.1} parent=1 // pred_check_branch
      %17 = sbr.rel (0) target = $region5
    $region4: #{lstm_forward.1} parent=1 // pred_region
      %19 = vsyncadd [#allocation6], 0
      %s21 = sshll.u32 %s0, 4
      %s22 = int_to_ptr.vmem [resolvable:$true] %s21
      %24 = dma.vmem_to_smem %s22, 32, [#allocation5], [#allocation6]
    $region5: #{lstm_forward.1} parent=1 // pred_fallthru
      _
    // Predicated region
    $region6: #{lstm_forward.1} parent=1 // pred_check
      _
    $region7: #{lstm_forward.1} parent=1 // pred_check_branch
      %26 = sbr.rel (0) target = $region9
    $region8: #{lstm_forward.1} parent=1 // pred_region
      _
    $region9: #{lstm_forward.1} parent=1 // pred_fallthru
      _
    // Predicated region
    $region10: #{lstm_forward.1} parent=1 // pred_check
      _
    $region11: #{lstm_forward.1} parent=1 // pred_check_branch
      %28 = sbr.rel (0) target = $region13
    $region12: #{lstm_forward.1} parent=1 // pred_region
      _
    $region13: #{lstm_forward.1} parent=1 // pred_fallthru
      _
    // Predicated region
    $region14: #{lstm_forward.1} parent=1 // pred_check
      _
    $region15: #{lstm_forward.1} parent=1 // pred_check_branch
      %30 = sbr.rel (0) target = $region17
    $region16: #{lstm_forward.1} parent=1 // pred_region
      _
    $region17: #{lstm_forward.1} parent=1 // pred_fallthru
      _
    // Predicated region
    $region18: #{lstm_forward.1} parent=1 // pred_check
      _
    $region19: #{lstm_forward.1} parent=1 // pred_check_branch
      %32 = sbr.rel (0) target = $region21
    $region20: #{lstm_forward.1} parent=1 // pred_region
      _
    $region21: #{lstm_forward.1} parent=1 // pred_fallthru
      _
    // Predicated region
    $region22: #{lstm_forward.1} parent=1 // pred_check
      _
    $region23: #{lstm_forward.1} parent=1 // pred_check_branch
      %34 = sbr.rel (0) target = $region25
    $region24: #{lstm_forward.1} parent=1 // pred_region
      _
    $region25: #{lstm_forward.1} parent=1 // pred_fallthru
      _
    // Predicated region
    $region26: #{lstm_forward.1} parent=1 // pred_check
      _
    $region27: #{lstm_forward.1} parent=1 // pred_check_branch
      %36 = sbr.rel (0) target = $region29
    $region28: #{lstm_forward.1} parent=1 // pred_region
      _
    $region29: #{lstm_forward.1} parent=1 // pred_fallthru
      _
    // Predicated region
    $region30: #{lstm_forward.1} parent=1 // pred_check
      _
    $region31: #{lstm_forward.1} parent=1 // pred_check_branch
      %38 = sbr.rel (0) target = $region33
    $region32: #{lstm_forward.1} parent=1 // pred_region
      _
    $region33: #{lstm_forward.1} parent=1 // pred_fallthru
      _
    // Predicated region
    $region34: #{lstm_forward.1} parent=1 // pred_check
      _
    $region35: #{lstm_forward.1} parent=1 // pred_check_branch
      %40 = sbr.rel (0) target = $region37
    $region36: #{lstm_forward.1} parent=1 // pred_region
      _
    $region37: #{lstm_forward.1} parent=1 // pred_fallthru
      _
    // Predicated region
    $region38: #{lstm_forward.1} parent=1 // pred_check
      _
    $region39: #{lstm_forward.1} parent=1 // pred_check_branch
      %42 = sbr.rel (0) target = $region41
    $region40: #{lstm_forward.1} parent=1 // pred_region
      %44 = dma.done [#allocation6], 32
    $region41: #{lstm_forward.1} parent=1 // pred_fallthru
      _
    %45 = sfence
    %s47 = sld [smem:[#allocation5]]
    %s48 = scalar_lea.vmem %s1, %s47
    // Predicated region
    $region42: #{lstm_forward.1} parent=1 // pred_check
      _
    $region43: #{lstm_forward.1} parent=1 // pred_check_branch
      %50 = sbr.rel target = $region45
    $region44: #{lstm_forward.1} parent=1 // pred_region
      // Predicated region
      $region57: #{lstm_forward.1} parent=44 // pred_check
        _
      $region58: #{lstm_forward.1} parent=44 // pred_check_branch
        %66 = sbr.rel (0) target = $region60
      $region59: #{lstm_forward.1} parent=44 // pred_region
        %s68 = ssub.s32 2, 1
        loop: start=0, step=1, limit=1
        $region61: #{lstm_forward.1} parent=59 // loop_pre_header
          _
        $region62: #{lstm_forward.1} parent=59 // loop_header
          %s70 = sphi 0, %s74
          %p71 = scmp.ge.s32.totalorder %s70, 1
          %s75 = sphi %s48, %s48
          %s76 = sphi [#allocation2], [#allocation2]
        $region63: #{lstm_forward.1} parent=59 // loop_header_branch
          %73 = sbr.rel (%p71) target = $region67
        $region64: #{lstm_forward.1} parent=59 // loop_body
          %v77 = vld [vmem:[%s75] sm:%s68]
          %78 = vst [vmem:[%s76] sm:%s68] %v77
        $region65: #{lstm_forward.1} parent=59 // loop_footer
          %s74 = sadd.s32 1, %s70
        $region66: #{lstm_forward.1} parent=59 // loop_footer_branch
          %69 = sbr.rel target = $region62
        $region67: #{lstm_forward.1} parent=59 // loop_exit
          _
      $region60: #{lstm_forward.1} parent=44 // pred_fallthru
        _
    $region45: #{lstm_forward.1} parent=1 // pred_fallthru
      _
    // Predicated region
    $region46: #{lstm_forward.1} parent=1 // pred_check
      _
    $region47: #{lstm_forward.1} parent=1 // pred_check_branch
      %52 = sbr.rel (0) target = $region49
    $region48: #{lstm_forward.1} parent=1 // pred_region
      %s54 = ssub.s32 2, 1
      loop: start=0, step=1, limit=1
      $region50: #{lstm_forward.1} parent=48 // loop_pre_header
        _
      $region51: #{lstm_forward.1} parent=48 // loop_header
        %s56 = sphi 0, %s60
        %p57 = scmp.ge.s32.totalorder %s56, 1
        %s61 = sphi %s48, %s48
        %s62 = sphi [#allocation2], [#allocation2]
      $region52: #{lstm_forward.1} parent=48 // loop_header_branch
        %59 = sbr.rel (%p57) target = $region56
      $region53: #{lstm_forward.1} parent=48 // loop_body
        %v63 = vld [vmem:[%s61] sm:%s54]
        %64 = vst [vmem:[%s62] sm:%s54] %v63
      $region54: #{lstm_forward.1} parent=48 // loop_footer
        %s60 = sadd.s32 1, %s56
      $region55: #{lstm_forward.1} parent=48 // loop_footer_branch
        %55 = sbr.rel target = $region51
      $region56: #{lstm_forward.1} parent=48 // loop_exit
        _
    $region49: #{lstm_forward.1} parent=1 // pred_fallthru
      _
    // Predicated region
    $region68: #{lstm_forward.1} parent=1 // pred_check
      _
    $region69: #{lstm_forward.1} parent=1 // pred_check_branch
      %81 = sbr.rel (0) target = $region71
    $region70: #{lstm_forward.1} parent=1 // pred_region
      %82 = vsyncadd [#allocation4], 16
    $region71: #{lstm_forward.1} parent=1 // pred_fallthru
      _
    %s83 = sld [smem:[#allocation5 + $0x80]]
    %s84 = scalar_lea.vmem %s1, %s83
    %s85 = scalar_lea.vmem [#allocation2], 1
    %s86 = scalar_lea.sflag [#allocation4], 1
    // Predicated region
    $region72: #{lstm_forward.1} parent=1 // pred_check
      _
    $region73: #{lstm_forward.1} parent=1 // pred_check_branch
      %88 = sbr.rel target = $region75
    $region74: #{lstm_forward.1} parent=1 // pred_region
      // Predicated region
      $region87: #{lstm_forward.1} parent=74 // pred_check
        _
      $region88: #{lstm_forward.1} parent=74 // pred_check_branch
        %104 = sbr.rel (0) target = $region90
      $region89: #{lstm_forward.1} parent=74 // pred_region
        %s106 = ssub.s32 2, 1
        loop: start=0, step=1, limit=1
        $region91: #{lstm_forward.1} parent=89 // loop_pre_header
          _
        $region92: #{lstm_forward.1} parent=89 // loop_header
          %s108 = sphi 0, %s112
          %p109 = scmp.ge.s32.totalorder %s108, 1
          %s113 = sphi %s84, %s84
          %s114 = sphi %s85, %s85
        $region93: #{lstm_forward.1} parent=89 // loop_header_branch
          %111 = sbr.rel (%p109) target = $region97
        $region94: #{lstm_forward.1} parent=89 // loop_body
          %v115 = vld [vmem:[%s113] sm:%s106]
          %116 = vst [vmem:[%s114] sm:%s106] %v115
        $region95: #{lstm_forward.1} parent=89 // loop_footer
          %s112 = sadd.s32 1, %s108
        $region96: #{lstm_forward.1} parent=89 // loop_footer_branch
          %107 = sbr.rel target = $region92
        $region97: #{lstm_forward.1} parent=89 // loop_exit
          _
      $region90: #{lstm_forward.1} parent=74 // pred_fallthru
        _
    $region75: #{lstm_forward.1} parent=1 // pred_fallthru
      _
    // Predicated region
    $region76: #{lstm_forward.1} parent=1 // pred_check
      _
    $region77: #{lstm_forward.1} parent=1 // pred_check_branch
      %90 = sbr.rel (0) target = $region79
    $region78: #{lstm_forward.1} parent=1 // pred_region
      %s92 = ssub.s32 2, 1
      loop: start=0, step=1, limit=1
      $region80: #{lstm_forward.1} parent=78 // loop_pre_header
        _
      $region81: #{lstm_forward.1} parent=78 // loop_header
        %s94 = sphi 0, %s98
        %p95 = scmp.ge.s32.totalorder %s94, 1
        %s99 = sphi %s84, %s84
        %s100 = sphi %s85, %s85
      $region82: #{lstm_forward.1} parent=78 // loop_header_branch
        %97 = sbr.rel (%p95) target = $region86
      $region83: #{lstm_forward.1} parent=78 // loop_body
        %v101 = vld [vmem:[%s99] sm:%s92]
        %102 = vst [vmem:[%s100] sm:%s92] %v101
      $region84: #{lstm_forward.1} parent=78 // loop_footer
        %s98 = sadd.s32 1, %s94
      $region85: #{lstm_forward.1} parent=78 // loop_footer_branch
        %93 = sbr.rel target = $region81
      $region86: #{lstm_forward.1} parent=78 // loop_exit
        _
    $region79: #{lstm_forward.1} parent=1 // pred_fallthru
      _
    // Predicated region
    $region98: #{lstm_forward.1} parent=1 // pred_check
      _
    $region99: #{lstm_forward.1} parent=1 // pred_check_branch
      %119 = sbr.rel (0) target = $region101
    $region100: #{lstm_forward.1} parent=1 // pred_region
      %120 = vsyncadd %s86, 16
    $region101: #{lstm_forward.1} parent=1 // pred_fallthru
      _
    %s121 = sld [smem:[#allocation5 + $0x1]]
    %s122 = scalar_lea.vmem %s1, %s121
    %s123 = scalar_lea.vmem [#allocation2], 8
    %s124 = scalar_lea.sflag [#allocation4], 2
    // Predicated region
    $region102: #{lstm_forward.1} parent=1 // pred_check
      _
    $region103: #{lstm_forward.1} parent=1 // pred_check_branch
      %126 = sbr.rel target = $region105
    $region104: #{lstm_forward.1} parent=1 // pred_region
      // Predicated region
      $region117: #{lstm_forward.1} parent=104 // pred_check
        _
      $region118: #{lstm_forward.1} parent=104 // pred_check_branch
        %142 = sbr.rel (0) target = $region120
      $region119: #{lstm_forward.1} parent=104 // pred_region
        %s144 = ssub.s32 2, 1
        loop: start=0, step=1, limit=1
        $region121: #{lstm_forward.1} parent=119 // loop_pre_header
          _
        $region122: #{lstm_forward.1} parent=119 // loop_header
          %s146 = sphi 0, %s150
          %p147 = scmp.ge.s32.totalorder %s146, 1
          %s151 = sphi %s122, %s122
          %s152 = sphi %s123, %s123
        $region123: #{lstm_forward.1} parent=119 // loop_header_branch
          %149 = sbr.rel (%p147) target = $region127
        $region124: #{lstm_forward.1} parent=119 // loop_body
          %v153 = vld [vmem:[%s151] sm:%s144]
          %154 = vst [vmem:[%s152] sm:%s144] %v153
        $region125: #{lstm_forward.1} parent=119 // loop_footer
          %s150 = sadd.s32 1, %s146
        $region126: #{lstm_forward.1} parent=119 // loop_footer_branch
          %145 = sbr.rel target = $region122
        $region127: #{lstm_forward.1} parent=119 // loop_exit
          _
      $region120: #{lstm_forward.1} parent=104 // pred_fallthru
        _
    $region105: #{lstm_forward.1} parent=1 // pred_fallthru
      _
    // Predicated region
    $region106: #{lstm_forward.1} parent=1 // pred_check
      _
    $region107: #{lstm_forward.1} parent=1 // pred_check_branch
      %128 = sbr.rel (0) target = $region109
    $region108: #{lstm_forward.1} parent=1 // pred_region
      %s130 = ssub.s32 2, 1
      loop: start=0, step=1, limit=1
      $region110: #{lstm_forward.1} parent=108 // loop_pre_header
        _
      $region111: #{lstm_forward.1} parent=108 // loop_header
        %s132 = sphi 0, %s136
        %p133 = scmp.ge.s32.totalorder %s132, 1
        %s137 = sphi %s122, %s122
        %s138 = sphi %s123, %s123
      $region112: #{lstm_forward.1} parent=108 // loop_header_branch
        %135 = sbr.rel (%p133) target = $region116
      $region113: #{lstm_forward.1} parent=108 // loop_body
        %v139 = vld [vmem:[%s137] sm:%s130]
        %140 = vst [vmem:[%s138] sm:%s130] %v139
      $region114: #{lstm_forward.1} parent=108 // loop_footer
        %s136 = sadd.s32 1, %s132
      $region115: #{lstm_forward.1} parent=108 // loop_footer_branch
        %131 = sbr.rel target = $region111
      $region116: #{lstm_forward.1} parent=108 // loop_exit
        _
    $region109: #{lstm_forward.1} parent=1 // pred_fallthru
      _
    // Predicated region
    $region128: #{lstm_forward.1} parent=1 // pred_check
      _
    $region129: #{lstm_forward.1} parent=1 // pred_check_branch
      %157 = sbr.rel (0) target = $region131
    $region130: #{lstm_forward.1} parent=1 // pred_region
      %158 = vsyncadd %s124, 16
    $region131: #{lstm_forward.1} parent=1 // pred_fallthru
      _
    %s159 = sld [smem:[#allocation5 + $0x81]]
    %s160 = scalar_lea.vmem %s1, %s159
    %s161 = scalar_lea.vmem [#allocation2], 9
    %s162 = scalar_lea.sflag [#allocation4], 3
    // Predicated region
    $region132: #{lstm_forward.1} parent=1 // pred_check
      _
    $region133: #{lstm_forward.1} parent=1 // pred_check_branch
      %164 = sbr.rel target = $region135
    $region134: #{lstm_forward.1} parent=1 // pred_region
      // Predicated region
      $region147: #{lstm_forward.1} parent=134 // pred_check
        _
      $region148: #{lstm_forward.1} parent=134 // pred_check_branch
        %180 = sbr.rel (0) target = $region150
      $region149: #{lstm_forward.1} parent=134 // pred_region
        %s182 = ssub.s32 2, 1
        loop: start=0, step=1, limit=1
        $region151: #{lstm_forward.1} parent=149 // loop_pre_header
          _
        $region152: #{lstm_forward.1} parent=149 // loop_header
          %s184 = sphi 0, %s188
          %p185 = scmp.ge.s32.totalorder %s184, 1
          %s189 = sphi %s160, %s160
          %s190 = sphi %s161, %s161
        $region153: #{lstm_forward.1} parent=149 // loop_header_branch
          %187 = sbr.rel (%p185) target = $region157
        $region154: #{lstm_forward.1} parent=149 // loop_body
          %v191 = vld [vmem:[%s189] sm:%s182]
          %192 = vst [vmem:[%s190] sm:%s182] %v191
        $region155: #{lstm_forward.1} parent=149 // loop_footer
          %s188 = sadd.s32 1, %s184
        $region156: #{lstm_forward.1} parent=149 // loop_footer_branch
          %183 = sbr.rel target = $region152
        $region157: #{lstm_forward.1} parent=149 // loop_exit
          _
      $region150: #{lstm_forward.1} parent=134 // pred_fallthru
        _
    $region135: #{lstm_forward.1} parent=1 // pred_fallthru
      _
    // Predicated region
    $region136: #{lstm_forward.1} parent=1 // pred_check
      _
    $region137: #{lstm_forward.1} parent=1 // pred_check_branch
      %166 = sbr.rel (0) target = $region139
    $region138: #{lstm_forward.1} parent=1 // pred_region
      %s168 = ssub.s32 2, 1
      loop: start=0, step=1, limit=1
      $region140: #{lstm_forward.1} parent=138 // loop_pre_header
        _
      $region141: #{lstm_forward.1} parent=138 // loop_header
        %s170 = sphi 0, %s174
        %p171 = scmp.ge.s32.totalorder %s170, 1
        %s175 = sphi %s160, %s160
        %s176 = sphi %s161, %s161
      $region142: #{lstm_forward.1} parent=138 // loop_header_branch
        %173 = sbr.rel (%p171) target = $region146
      $region143: #{lstm_forward.1} parent=138 // loop_body
        %v177 = vld [vmem:[%s175] sm:%s168]
        %178 = vst [vmem:[%s176] sm:%s168] %v177
      $region144: #{lstm_forward.1} parent=138 // loop_footer
        %s174 = sadd.s32 1, %s170
      $region145: #{lstm_forward.1} parent=138 // loop_footer_branch
        %169 = sbr.rel target = $region141
      $region146: #{lstm_forward.1} parent=138 // loop_exit
        _
    $region139: #{lstm_forward.1} parent=1 // pred_fallthru
      _
    // Predicated region
    $region158: #{lstm_forward.1} parent=1 // pred_check
      _
    $region159: #{lstm_forward.1} parent=1 // pred_check_branch
      %195 = sbr.rel (0) target = $region161
    $region160: #{lstm_forward.1} parent=1 // pred_region
      %196 = vsyncadd %s162, 16
    $region161: #{lstm_forward.1} parent=1 // pred_fallthru
      _
    %s197 = sld [smem:[#allocation5 + $0x2]]
    %s198 = scalar_lea.vmem %s1, %s197
    %s199 = scalar_lea.vmem [#allocation2], 16
    %s200 = scalar_lea.sflag [#allocation4], 4
    // Predicated region
    $region162: #{lstm_forward.1} parent=1 // pred_check
      _
    $region163: #{lstm_forward.1} parent=1 // pred_check_branch
      %202 = sbr.rel target = $region165
    $region164: #{lstm_forward.1} parent=1 // pred_region
      // Predicated region
      $region177: #{lstm_forward.1} parent=164 // pred_check
        _
      $region178: #{lstm_forward.1} parent=164 // pred_check_branch
        %218 = sbr.rel (0) target = $region180
      $region179: #{lstm_forward.1} parent=164 // pred_region
        %s220 = ssub.s32 2, 1
        loop: start=0, step=1, limit=1
        $region181: #{lstm_forward.1} parent=179 // loop_pre_header
          _
        $region182: #{lstm_forward.1} parent=179 // loop_header
          %s222 = sphi 0, %s226
          %p223 = scmp.ge.s32.totalorder %s222, 1
          %s227 = sphi %s198, %s198
          %s228 = sphi %s199, %s199
        $region183: #{lstm_forward.1} parent=179 // loop_header_branch
          %225 = sbr.rel (%p223) target = $region187
        $region184: #{lstm_forward.1} parent=179 // loop_body
          %v229 = vld [vmem:[%s227] sm:%s220]
          %230 = vst [vmem:[%s228] sm:%s220] %v229
        $region185: #{lstm_forward.1} parent=179 // loop_footer
          %s226 = sadd.s32 1, %s222
        $region186: #{lstm_forward.1} parent=179 // loop_footer_branch
          %221 = sbr.rel target = $region182
        $region187: #{lstm_forward.1} parent=179 // loop_exit
          _
      $region180: #{lstm_forward.1} parent=164 // pred_fallthru
        _
    $region165: #{lstm_forward.1} parent=1 // pred_fallthru
      _
    // Predicated region
    $region166: #{lstm_forward.1} parent=1 // pred_check
      _
    $region167: #{lstm_forward.1} parent=1 // pred_check_branch
      %204 = sbr.rel (0) target = $region169
    $region168: #{lstm_forward.1} parent=1 // pred_region
      %s206 = ssub.s32 2, 1
      loop: start=0, step=1, limit=1
      $region170: #{lstm_forward.1} parent=168 // loop_pre_header
        _
      $region171: #{lstm_forward.1} parent=168 // loop_header
        %s208 = sphi 0, %s212
        %p209 = scmp.ge.s32.totalorder %s208, 1
        %s213 = sphi %s198, %s198
        %s214 = sphi %s199, %s199
      $region172: #{lstm_forward.1} parent=168 // loop_header_branch
        %211 = sbr.rel (%p209) target = $region176
      $region173: #{lstm_forward.1} parent=168 // loop_body
        %v215 = vld [vmem:[%s213] sm:%s206]
        %216 = vst [vmem:[%s214] sm:%s206] %v215
      $region174: #{lstm_forward.1} parent=168 // loop_footer
        %s212 = sadd.s32 1, %s208
      $region175: #{lstm_forward.1} parent=168 // loop_footer_branch
        %207 = sbr.rel target = $region171
      $region176: #{lstm_forward.1} parent=168 // loop_exit
        _
    $region169: #{lstm_forward.1} parent=1 // pred_fallthru
      _
    // Predicated region
    $region188: #{lstm_forward.1} parent=1 // pred_check
      _
    $region189: #{lstm_forward.1} parent=1 // pred_check_branch
      %233 = sbr.rel (0) target = $region191
    $region190: #{lstm_forward.1} parent=1 // pred_region
      %234 = vsyncadd %s200, 16
    $region191: #{lstm_forward.1} parent=1 // pred_fallthru
      _
    %s235 = sld [smem:[#allocation5 + $0x82]]
    %s236 = scalar_lea.vmem %s1, %s235
    %s237 = scalar_lea.vmem [#allocation2], 17
    %s238 = scalar_lea.sflag [#allocation4], 5
    // Predicated region
    $region192: #{lstm_forward.1} parent=1 // pred_check
      _
    $region193: #{lstm_forward.1} parent=1 // pred_check_branch
      %240 = sbr.rel target = $region195
    $region194: #{lstm_forward.1} parent=1 // pred_region
      // Predicated region
      $region207: #{lstm_forward.1} parent=194 // pred_check
        _
      $region208: #{lstm_forward.1} parent=194 // pred_check_branch
        %256 = sbr.rel (0) target = $region210
      $region209: #{lstm_forward.1} parent=194 // pred_region
        %s258 = ssub.s32 2, 1
        loop: start=0, step=1, limit=1
        $region211: #{lstm_forward.1} parent=209 // loop_pre_header
          _
        $region212: #{lstm_forward.1} parent=209 // loop_header
          %s260 = sphi 0, %s264
          %p261 = scmp.ge.s32.totalorder %s260, 1
          %s265 = sphi %s236, %s236
          %s266 = sphi %s237, %s237
        $region213: #{lstm_forward.1} parent=209 // loop_header_branch
          %263 = sbr.rel (%p261) target = $region217
        $region214: #{lstm_forward.1} parent=209 // loop_body
          %v267 = vld [vmem:[%s265] sm:%s258]
          %268 = vst [vmem:[%s266] sm:%s258] %v267
        $region215: #{lstm_forward.1} parent=209 // loop_footer
          %s264 = sadd.s32 1, %s260
        $region216: #{lstm_forward.1} parent=209 // loop_footer_branch
          %259 = sbr.rel target = $region212
        $region217: #{lstm_forward.1} parent=209 // loop_exit
          _
      $region210: #{lstm_forward.1} parent=194 // pred_fallthru
        _
    $region195: #{lstm_forward.1} parent=1 // pred_fallthru
      _
    // Predicated region
    $region196: #{lstm_forward.1} parent=1 // pred_check
      _
    $region197: #{lstm_forward.1} parent=1 // pred_check_branch
      %242 = sbr.rel (0) target = $region199
    $region198: #{lstm_forward.1} parent=1 // pred_region
      %s244 = ssub.s32 2, 1
      loop: start=0, step=1, limit=1
      $region200: #{lstm_forward.1} parent=198 // loop_pre_header
        _
      $region201: #{lstm_forward.1} parent=198 // loop_header
        %s246 = sphi 0, %s250
        %p247 = scmp.ge.s32.totalorder %s246, 1
        %s251 = sphi %s236, %s236
        %s252 = sphi %s237, %s237
      $region202: #{lstm_forward.1} parent=198 // loop_header_branch
        %249 = sbr.rel (%p247) target = $region206
      $region203: #{lstm_forward.1} parent=198 // loop_body
        %v253 = vld [vmem:[%s251] sm:%s244]
        %254 = vst [vmem:[%s252] sm:%s244] %v253
      $region204: #{lstm_forward.1} parent=198 // loop_footer
        %s250 = sadd.s32 1, %s246
      $region205: #{lstm_forward.1} parent=198 // loop_footer_branch
        %245 = sbr.rel target = $region201
      $region206: #{lstm_forward.1} parent=198 // loop_exit
        _
    $region199: #{lstm_forward.1} parent=1 // pred_fallthru
      _
    // Predicated region
    $region218: #{lstm_forward.1} parent=1 // pred_check
      _
    $region219: #{lstm_forward.1} parent=1 // pred_check_branch
      %271 = sbr.rel (0) target = $region221
    $region220: #{lstm_forward.1} parent=1 // pred_region
      %272 = vsyncadd %s238, 16
    $region221: #{lstm_forward.1} parent=1 // pred_fallthru
      _
    %s273 = sld [smem:[#allocation5 + $0x3]]
    %s274 = scalar_lea.vmem %s1, %s273
    %s275 = scalar_lea.vmem [#allocation2], 24
    %s276 = scalar_lea.sflag [#allocation4], 6
    // Predicated region
    $region222: #{lstm_forward.1} parent=1 // pred_check
      _
    $region223: #{lstm_forward.1} parent=1 // pred_check_branch
      %278 = sbr.rel target = $region225
    $region224: #{lstm_forward.1} parent=1 // pred_region
      // Predicated region
      $region237: #{lstm_forward.1} parent=224 // pred_check
        _
      $region238: #{lstm_forward.1} parent=224 // pred_check_branch
        %294 = sbr.rel (0) target = $region240
      $region239: #{lstm_forward.1} parent=224 // pred_region
        %s296 = ssub.s32 2, 1
        loop: start=0, step=1, limit=1
        $region241: #{lstm_forward.1} parent=239 // loop_pre_header
          _
        $region242: #{lstm_forward.1} parent=239 // loop_header
          %s298 = sphi 0, %s302
          %p299 = scmp.ge.s32.totalorder %s298, 1
          %s303 = sphi %s274, %s274
          %s304 = sphi %s275, %s275
        $region243: #{lstm_forward.1} parent=239 // loop_header_branch
          %301 = sbr.rel (%p299) target = $region247
        $region244: #{lstm_forward.1} parent=239 // loop_body
          %v305 = vld [vmem:[%s303] sm:%s296]
          %306 = vst [vmem:[%s304] sm:%s296] %v305
        $region245: #{lstm_forward.1} parent=239 // loop_footer
          %s302 = sadd.s32 1, %s298
        $region246: #{lstm_forward.1} parent=239 // loop_footer_branch
          %297 = sbr.rel target = $region242
        $region247: #{lstm_forward.1} parent=239 // loop_exit
          _
      $region240: #{lstm_forward.1} parent=224 // pred_fallthru
        _
    $region225: #{lstm_forward.1} parent=1 // pred_fallthru
      _
    // Predicated region
    $region226: #{lstm_forward.1} parent=1 // pred_check
      _
    $region227: #{lstm_forward.1} parent=1 // pred_check_branch
      %280 = sbr.rel (0) target = $region229
    $region228: #{lstm_forward.1} parent=1 // pred_region
      %s282 = ssub.s32 2, 1
      loop: start=0, step=1, limit=1
      $region230: #{lstm_forward.1} parent=228 // loop_pre_header
        _
      $region231: #{lstm_forward.1} parent=228 // loop_header
        %s284 = sphi 0, %s288
        %p285 = scmp.ge.s32.totalorder %s284, 1
        %s289 = sphi %s274, %s274
        %s290 = sphi %s275, %s275
      $region232: #{lstm_forward.1} parent=228 // loop_header_branch
        %287 = sbr.rel (%p285) target = $region236
      $region233: #{lstm_forward.1} parent=228 // loop_body
        %v291 = vld [vmem:[%s289] sm:%s282]
        %292 = vst [vmem:[%s290] sm:%s282] %v291
      $region234: #{lstm_forward.1} parent=228 // loop_footer
        %s288 = sadd.s32 1, %s284
      $region235: #{lstm_forward.1} parent=228 // loop_footer_branch
        %283 = sbr.rel target = $region231
      $region236: #{lstm_forward.1} parent=228 // loop_exit
        _
    $region229: #{lstm_forward.1} parent=1 // pred_fallthru
      _
    // Predicated region
    $region248: #{lstm_forward.1} parent=1 // pred_check
      _
    $region249: #{lstm_forward.1} parent=1 // pred_check_branch
      %309 = sbr.rel (0) target = $region251
    $region250: #{lstm_forward.1} parent=1 // pred_region
      %310 = vsyncadd %s276, 16
    $region251: #{lstm_forward.1} parent=1 // pred_fallthru
      _
    %s311 = sld [smem:[#allocation5 + $0x83]]
    %s312 = scalar_lea.vmem %s1, %s311
    %s313 = scalar_lea.vmem [#allocation2], 25
    %s314 = scalar_lea.sflag [#allocation4], 7
    // Predicated region
    $region252: #{lstm_forward.1} parent=1 // pred_check
      _
    $region253: #{lstm_forward.1} parent=1 // pred_check_branch
      %316 = sbr.rel target = $region255
    $region254: #{lstm_forward.1} parent=1 // pred_region
      // Predicated region
      $region267: #{lstm_forward.1} parent=254 // pred_check
        _
      $region268: #{lstm_forward.1} parent=254 // pred_check_branch
        %332 = sbr.rel (0) target = $region270
      $region269: #{lstm_forward.1} parent=254 // pred_region
        %s334 = ssub.s32 2, 1
        loop: start=0, step=1, limit=1
        $region271: #{lstm_forward.1} parent=269 // loop_pre_header
          _
        $region272: #{lstm_forward.1} parent=269 // loop_header
          %s336 = sphi 0, %s340
          %p337 = scmp.ge.s32.totalorder %s336, 1
          %s341 = sphi %s312, %s312
          %s342 = sphi %s313, %s313
        $region273: #{lstm_forward.1} parent=269 // loop_header_branch
          %339 = sbr.rel (%p337) target = $region277
        $region274: #{lstm_forward.1} parent=269 // loop_body
          %v343 = vld [vmem:[%s341] sm:%s334]
          %344 = vst [vmem:[%s342] sm:%s334] %v343
        $region275: #{lstm_forward.1} parent=269 // loop_footer
          %s340 = sadd.s32 1, %s336
        $region276: #{lstm_forward.1} parent=269 // loop_footer_branch
          %335 = sbr.rel target = $region272
        $region277: #{lstm_forward.1} parent=269 // loop_exit
          _
      $region270: #{lstm_forward.1} parent=254 // pred_fallthru
        _
    $region255: #{lstm_forward.1} parent=1 // pred_fallthru
      _
    // Predicated region
    $region256: #{lstm_forward.1} parent=1 // pred_check
      _
    $region257: #{lstm_forward.1} parent=1 // pred_check_branch
      %318 = sbr.rel (0) target = $region259
    $region258: #{lstm_forward.1} parent=1 // pred_region
      %s320 = ssub.s32 2, 1
      loop: start=0, step=1, limit=1
      $region260: #{lstm_forward.1} parent=258 // loop_pre_header
        _
      $region261: #{lstm_forward.1} parent=258 // loop_header
        %s322 = sphi 0, %s326
        %p323 = scmp.ge.s32.totalorder %s322, 1
        %s327 = sphi %s312, %s312
        %s328 = sphi %s313, %s313
      $region262: #{lstm_forward.1} parent=258 // loop_header_branch
        %325 = sbr.rel (%p323) target = $region266
      $region263: #{lstm_forward.1} parent=258 // loop_body
        %v329 = vld [vmem:[%s327] sm:%s320]
        %330 = vst [vmem:[%s328] sm:%s320] %v329
      $region264: #{lstm_forward.1} parent=258 // loop_footer
        %s326 = sadd.s32 1, %s322
      $region265: #{lstm_forward.1} parent=258 // loop_footer_branch
        %321 = sbr.rel target = $region261
      $region266: #{lstm_forward.1} parent=258 // loop_exit
        _
    $region259: #{lstm_forward.1} parent=1 // pred_fallthru
      _
    // Predicated region
    $region278: #{lstm_forward.1} parent=1 // pred_check
      _
    $region279: #{lstm_forward.1} parent=1 // pred_check_branch
      %347 = sbr.rel (0) target = $region281
    $region280: #{lstm_forward.1} parent=1 // pred_region
      %348 = vsyncadd %s314, 16
    $region281: #{lstm_forward.1} parent=1 // pred_fallthru
      _
    %s349 = sld [smem:[#allocation5 + $0x4]]
    %s350 = scalar_lea.vmem %s1, %s349
    %s351 = scalar_lea.vmem [#allocation2], 32
    %s352 = scalar_lea.sflag [#allocation4], 8
    // Predicated region
    $region282: #{lstm_forward.1} parent=1 // pred_check
      _
    $region283: #{lstm_forward.1} parent=1 // pred_check_branch
      %354 = sbr.rel target = $region285
    $region284: #{lstm_forward.1} parent=1 // pred_region
      // Predicated region
      $region297: #{lstm_forward.1} parent=284 // pred_check
        _
      $region298: #{lstm_forward.1} parent=284 // pred_check_branch
        %370 = sbr.rel (0) target = $region300
      $region299: #{lstm_forward.1} parent=284 // pred_region
        %s372 = ssub.s32 2, 1
        loop: start=0, step=1, limit=1
        $region301: #{lstm_forward.1} parent=299 // loop_pre_header
          _
        $region302: #{lstm_forward.1} parent=299 // loop_header
          %s374 = sphi 0, %s378
          %p375 = scmp.ge.s32.totalorder %s374, 1
          %s379 = sphi %s350, %s350
          %s380 = sphi %s351, %s351
        $region303: #{lstm_forward.1} parent=299 // loop_header_branch
          %377 = sbr.rel (%p375) target = $region307
        $region304: #{lstm_forward.1} parent=299 // loop_body
          %v381 = vld [vmem:[%s379] sm:%s372]
          %382 = vst [vmem:[%s380] sm:%s372] %v381
        $region305: #{lstm_forward.1} parent=299 // loop_footer
          %s378 = sadd.s32 1, %s374
        $region306: #{lstm_forward.1} parent=299 // loop_footer_branch
          %373 = sbr.rel target = $region302
        $region307: #{lstm_forward.1} parent=299 // loop_exit
          _
      $region300: #{lstm_forward.1} parent=284 // pred_fallthru
        _
    $region285: #{lstm_forward.1} parent=1 // pred_fallthru
      _
    // Predicated region
    $region286: #{lstm_forward.1} parent=1 // pred_check
      _
    $region287: #{lstm_forward.1} parent=1 // pred_check_branch
      %356 = sbr.rel (0) target = $region289
    $region288: #{lstm_forward.1} parent=1 // pred_region
      %s358 = ssub.s32 2, 1
      loop: start=0, step=1, limit=1
      $region290: #{lstm_forward.1} parent=288 // loop_pre_header
        _
      $region291: #{lstm_forward.1} parent=288 // loop_header
        %s360 = sphi 0, %s364
        %p361 = scmp.ge.s32.totalorder %s360, 1
        %s365 = sphi %s350, %s350
        %s366 = sphi %s351, %s351
      $region292: #{lstm_forward.1} parent=288 // loop_header_branch
        %363 = sbr.rel (%p361) target = $region296
      $region293: #{lstm_forward.1} parent=288 // loop_body
        %v367 = vld [vmem:[%s365] sm:%s358]
        %368 = vst [vmem:[%s366] sm:%s358] %v367
      $region294: #{lstm_forward.1} parent=288 // loop_footer
        %s364 = sadd.s32 1, %s360
      $region295: #{lstm_forward.1} parent=288 // loop_footer_branch
        %359 = sbr.rel target = $region291
      $region296: #{lstm_forward.1} parent=288 // loop_exit
        _
    $region289: #{lstm_forward.1} parent=1 // pred_fallthru
      _
    // Predicated region
    $region308: #{lstm_forward.1} parent=1 // pred_check
      _
    $region309: #{lstm_forward.1} parent=1 // pred_check_branch
      %385 = sbr.rel (0) target = $region311
    $region310: #{lstm_forward.1} parent=1 // pred_region
      %386 = vsyncadd %s352, 16
    $region311: #{lstm_forward.1} parent=1 // pred_fallthru
      _
    %s387 = sld [smem:[#allocation5 + $0x84]]
    %s388 = scalar_lea.vmem %s1, %s387
    %s389 = scalar_lea.vmem [#allocation2], 33
    %s390 = scalar_lea.sflag [#allocation4], 9
    // Predicated region
    $region312: #{lstm_forward.1} parent=1 // pred_check
      _
    $region313: #{lstm_forward.1} parent=1 // pred_check_branch
      %392 = sbr.rel target = $region315
    $region314: #{lstm_forward.1} parent=1 // pred_region
      // Predicated region
      $region327: #{lstm_forward.1} parent=314 // pred_check
        _
      $region328: #{lstm_forward.1} parent=314 // pred_check_branch
        %408 = sbr.rel (0) target = $region330
      $region329: #{lstm_forward.1} parent=314 // pred_region
        %s410 = ssub.s32 2, 1
        loop: start=0, step=1, limit=1
        $region331: #{lstm_forward.1} parent=329 // loop_pre_header
          _
        $region332: #{lstm_forward.1} parent=329 // loop_header
          %s412 = sphi 0, %s416
          %p413 = scmp.ge.s32.totalorder %s412, 1
          %s417 = sphi %s388, %s388
          %s418 = sphi %s389, %s389
        $region333: #{lstm_forward.1} parent=329 // loop_header_branch
          %415 = sbr.rel (%p413) target = $region337
        $region334: #{lstm_forward.1} parent=329 // loop_body
          %v419 = vld [vmem:[%s417] sm:%s410]
          %420 = vst [vmem:[%s418] sm:%s410] %v419
        $region335: #{lstm_forward.1} parent=329 // loop_footer
          %s416 = sadd.s32 1, %s412
        $region336: #{lstm_forward.1} parent=329 // loop_footer_branch
          %411 = sbr.rel target = $region332
        $region337: #{lstm_forward.1} parent=329 // loop_exit
          _
      $region330: #{lstm_forward.1} parent=314 // pred_fallthru
        _
    $region315: #{lstm_forward.1} parent=1 // pred_fallthru
      _
    // Predicated region
    $region316: #{lstm_forward.1} parent=1 // pred_check
      _
    $region317: #{lstm_forward.1} parent=1 // pred_check_branch
      %394 = sbr.rel (0) target = $region319
    $region318: #{lstm_forward.1} parent=1 // pred_region
      %s396 = ssub.s32 2, 1
      loop: start=0, step=1, limit=1
      $region320: #{lstm_forward.1} parent=318 // loop_pre_header
        _
      $region321: #{lstm_forward.1} parent=318 // loop_header
        %s398 = sphi 0, %s402
        %p399 = scmp.ge.s32.totalorder %s398, 1
        %s403 = sphi %s388, %s388
        %s404 = sphi %s389, %s389
      $region322: #{lstm_forward.1} parent=318 // loop_header_branch
        %401 = sbr.rel (%p399) target = $region326
      $region323: #{lstm_forward.1} parent=318 // loop_body
        %v405 = vld [vmem:[%s403] sm:%s396]
        %406 = vst [vmem:[%s404] sm:%s396] %v405
      $region324: #{lstm_forward.1} parent=318 // loop_footer
        %s402 = sadd.s32 1, %s398
      $region325: #{lstm_forward.1} parent=318 // loop_footer_branch
        %397 = sbr.rel target = $region321
      $region326: #{lstm_forward.1} parent=318 // loop_exit
        _
    $region319: #{lstm_forward.1} parent=1 // pred_fallthru
      _
    // Predicated region
    $region338: #{lstm_forward.1} parent=1 // pred_check
      _
    $region339: #{lstm_forward.1} parent=1 // pred_check_branch
      %423 = sbr.rel (0) target = $region341
    $region340: #{lstm_forward.1} parent=1 // pred_region
      %424 = vsyncadd %s390, 16
    $region341: #{lstm_forward.1} parent=1 // pred_fallthru
      _
    %s425 = sld [smem:[#allocation5 + $0x5]]
    %s426 = scalar_lea.vmem %s1, %s425
    %s427 = scalar_lea.vmem [#allocation2], 40
    %s428 = scalar_lea.sflag [#allocation4], 10
    // Predicated region
    $region342: #{lstm_forward.1} parent=1 // pred_check
      _
    $region343: #{lstm_forward.1} parent=1 // pred_check_branch
      %430 = sbr.rel target = $region345
    $region344: #{lstm_forward.1} parent=1 // pred_region
      // Predicated region
      $region357: #{lstm_forward.1} parent=344 // pred_check
        _
      $region358: #{lstm_forward.1} parent=344 // pred_check_branch
        %446 = sbr.rel (0) target = $region360
      $region359: #{lstm_forward.1} parent=344 // pred_region
        %s448 = ssub.s32 2, 1
        loop: start=0, step=1, limit=1
        $region361: #{lstm_forward.1} parent=359 // loop_pre_header
          _
        $region362: #{lstm_forward.1} parent=359 // loop_header
          %s450 = sphi 0, %s454
          %p451 = scmp.ge.s32.totalorder %s450, 1
          %s455 = sphi %s426, %s426
          %s456 = sphi %s427, %s427
        $region363: #{lstm_forward.1} parent=359 // loop_header_branch
          %453 = sbr.rel (%p451) target = $region367
        $region364: #{lstm_forward.1} parent=359 // loop_body
          %v457 = vld [vmem:[%s455] sm:%s448]
          %458 = vst [vmem:[%s456] sm:%s448] %v457
        $region365: #{lstm_forward.1} parent=359 // loop_footer
          %s454 = sadd.s32 1, %s450
        $region366: #{lstm_forward.1} parent=359 // loop_footer_branch
          %449 = sbr.rel target = $region362
        $region367: #{lstm_forward.1} parent=359 // loop_exit
          _
      $region360: #{lstm_forward.1} parent=344 // pred_fallthru
        _
    $region345: #{lstm_forward.1} parent=1 // pred_fallthru
      _
    // Predicated region
    $region346: #{lstm_forward.1} parent=1 // pred_check
      _
    $region347: #{lstm_forward.1} parent=1 // pred_check_branch
      %432 = sbr.rel (0) target = $region349
    $region348: #{lstm_forward.1} parent=1 // pred_region
      %s434 = ssub.s32 2, 1
      loop: start=0, step=1, limit=1
      $region350: #{lstm_forward.1} parent=348 // loop_pre_header
        _
      $region351: #{lstm_forward.1} parent=348 // loop_header
        %s436 = sphi 0, %s440
        %p437 = scmp.ge.s32.totalorder %s436, 1
        %s441 = sphi %s426, %s426
        %s442 = sphi %s427, %s427
      $region352: #{lstm_forward.1} parent=348 // loop_header_branch
        %439 = sbr.rel (%p437) target = $region356
      $region353: #{lstm_forward.1} parent=348 // loop_body
        %v443 = vld [vmem:[%s441] sm:%s434]
        %444 = vst [vmem:[%s442] sm:%s434] %v443
      $region354: #{lstm_forward.1} parent=348 // loop_footer
        %s440 = sadd.s32 1, %s436
      $region355: #{lstm_forward.1} parent=348 // loop_footer_branch
        %435 = sbr.rel target = $region351
      $region356: #{lstm_forward.1} parent=348 // loop_exit
        _
    $region349: #{lstm_forward.1} parent=1 // pred_fallthru
      _
    // Predicated region
    $region368: #{lstm_forward.1} parent=1 // pred_check
      _
    $region369: #{lstm_forward.1} parent=1 // pred_check_branch
      %461 = sbr.rel (0) target = $region371
    $region370: #{lstm_forward.1} parent=1 // pred_region
      %462 = vsyncadd %s428, 16
    $region371: #{lstm_forward.1} parent=1 // pred_fallthru
      _
    %s463 = sld [smem:[#allocation5 + $0x85]]
    %s464 = scalar_lea.vmem %s1, %s463
    %s465 = scalar_lea.vmem [#allocation2], 41
    %s466 = scalar_lea.sflag [#allocation4], 11
    // Predicated region
    $region372: #{lstm_forward.1} parent=1 // pred_check
      _
    $region373: #{lstm_forward.1} parent=1 // pred_check_branch
      %468 = sbr.rel target = $region375
    $region374: #{lstm_forward.1} parent=1 // pred_region
      // Predicated region
      $region387: #{lstm_forward.1} parent=374 // pred_check
        _
      $region388: #{lstm_forward.1} parent=374 // pred_check_branch
        %484 = sbr.rel (0) target = $region390
      $region389: #{lstm_forward.1} parent=374 // pred_region
        %s486 = ssub.s32 2, 1
        loop: start=0, step=1, limit=1
        $region391: #{lstm_forward.1} parent=389 // loop_pre_header
          _
        $region392: #{lstm_forward.1} parent=389 // loop_header
          %s488 = sphi 0, %s492
          %p489 = scmp.ge.s32.totalorder %s488, 1
          %s493 = sphi %s464, %s464
          %s494 = sphi %s465, %s465
        $region393: #{lstm_forward.1} parent=389 // loop_header_branch
          %491 = sbr.rel (%p489) target = $region397
        $region394: #{lstm_forward.1} parent=389 // loop_body
          %v495 = vld [vmem:[%s493] sm:%s486]
          %496 = vst [vmem:[%s494] sm:%s486] %v495
        $region395: #{lstm_forward.1} parent=389 // loop_footer
          %s492 = sadd.s32 1, %s488
        $region396: #{lstm_forward.1} parent=389 // loop_footer_branch
          %487 = sbr.rel target = $region392
        $region397: #{lstm_forward.1} parent=389 // loop_exit
          _
      $region390: #{lstm_forward.1} parent=374 // pred_fallthru
        _
    $region375: #{lstm_forward.1} parent=1 // pred_fallthru
      _
    // Predicated region
    $region376: #{lstm_forward.1} parent=1 // pred_check
      _
    $region377: #{lstm_forward.1} parent=1 // pred_check_branch
      %470 = sbr.rel (0) target = $region379
    $region378: #{lstm_forward.1} parent=1 // pred_region
      %s472 = ssub.s32 2, 1
      loop: start=0, step=1, limit=1
      $region380: #{lstm_forward.1} parent=378 // loop_pre_header
        _
      $region381: #{lstm_forward.1} parent=378 // loop_header
        %s474 = sphi 0, %s478
        %p475 = scmp.ge.s32.totalorder %s474, 1
        %s479 = sphi %s464, %s464
        %s480 = sphi %s465, %s465
      $region382: #{lstm_forward.1} parent=378 // loop_header_branch
        %477 = sbr.rel (%p475) target = $region386
      $region383: #{lstm_forward.1} parent=378 // loop_body
        %v481 = vld [vmem:[%s479] sm:%s472]
        %482 = vst [vmem:[%s480] sm:%s472] %v481
      $region384: #{lstm_forward.1} parent=378 // loop_footer
        %s478 = sadd.s32 1, %s474
      $region385: #{lstm_forward.1} parent=378 // loop_footer_branch
        %473 = sbr.rel target = $region381
      $region386: #{lstm_forward.1} parent=378 // loop_exit
        _
    $region379: #{lstm_forward.1} parent=1 // pred_fallthru
      _
    // Predicated region
    $region398: #{lstm_forward.1} parent=1 // pred_check
      _
    $region399: #{lstm_forward.1} parent=1 // pred_check_branch
      %499 = sbr.rel (0) target = $region401
    $region400: #{lstm_forward.1} parent=1 // pred_region
      %500 = vsyncadd %s466, 16
    $region401: #{lstm_forward.1} parent=1 // pred_fallthru
      _
    %s501 = sld [smem:[#allocation5 + $0x6]]
    %s502 = scalar_lea.vmem %s1, %s501
    %s503 = scalar_lea.vmem [#allocation2], 48
    %s504 = scalar_lea.sflag [#allocation4], 12
    // Predicated region
    $region402: #{lstm_forward.1} parent=1 // pred_check
      _
    $region403: #{lstm_forward.1} parent=1 // pred_check_branch
      %506 = sbr.rel target = $region405
    $region404: #{lstm_forward.1} parent=1 // pred_region
      // Predicated region
      $region417: #{lstm_forward.1} parent=404 // pred_check
        _
      $region418: #{lstm_forward.1} parent=404 // pred_check_branch
        %522 = sbr.rel (0) target = $region420
      $region419: #{lstm_forward.1} parent=404 // pred_region
        %s524 = ssub.s32 2, 1
        loop: start=0, step=1, limit=1
        $region421: #{lstm_forward.1} parent=419 // loop_pre_header
          _
        $region422: #{lstm_forward.1} parent=419 // loop_header
          %s526 = sphi 0, %s530
          %p527 = scmp.ge.s32.totalorder %s526, 1
          %s531 = sphi %s502, %s502
          %s532 = sphi %s503, %s503
        $region423: #{lstm_forward.1} parent=419 // loop_header_branch
          %529 = sbr.rel (%p527) target = $region427
        $region424: #{lstm_forward.1} parent=419 // loop_body
          %v533 = vld [vmem:[%s531] sm:%s524]
          %534 = vst [vmem:[%s532] sm:%s524] %v533
        $region425: #{lstm_forward.1} parent=419 // loop_footer
          %s530 = sadd.s32 1, %s526
        $region426: #{lstm_forward.1} parent=419 // loop_footer_branch
          %525 = sbr.rel target = $region422
        $region427: #{lstm_forward.1} parent=419 // loop_exit
          _
      $region420: #{lstm_forward.1} parent=404 // pred_fallthru
        _
    $region405: #{lstm_forward.1} parent=1 // pred_fallthru
      _
    // Predicated region
    $region406: #{lstm_forward.1} parent=1 // pred_check
      _
    $region407: #{lstm_forward.1} parent=1 // pred_check_branch
      %508 = sbr.rel (0) target = $region409
    $region408: #{lstm_forward.1} parent=1 // pred_region
      %s510 = ssub.s32 2, 1
      loop: start=0, step=1, limit=1
      $region410: #{lstm_forward.1} parent=408 // loop_pre_header
        _
      $region411: #{lstm_forward.1} parent=408 // loop_header
        %s512 = sphi 0, %s516
        %p513 = scmp.ge.s32.totalorder %s512, 1
        %s517 = sphi %s502, %s502
        %s518 = sphi %s503, %s503
      $region412: #{lstm_forward.1} parent=408 // loop_header_branch
        %515 = sbr.rel (%p513) target = $region416
      $region413: #{lstm_forward.1} parent=408 // loop_body
        %v519 = vld [vmem:[%s517] sm:%s510]
        %520 = vst [vmem:[%s518] sm:%s510] %v519
      $region414: #{lstm_forward.1} parent=408 // loop_footer
        %s516 = sadd.s32 1, %s512
      $region415: #{lstm_forward.1} parent=408 // loop_footer_branch
        %511 = sbr.rel target = $region411
      $region416: #{lstm_forward.1} parent=408 // loop_exit
        _
    $region409: #{lstm_forward.1} parent=1 // pred_fallthru
      _
    // Predicated region
    $region428: #{lstm_forward.1} parent=1 // pred_check
      _
    $region429: #{lstm_forward.1} parent=1 // pred_check_branch
      %537 = sbr.rel (0) target = $region431
    $region430: #{lstm_forward.1} parent=1 // pred_region
      %538 = vsyncadd %s504, 16
    $region431: #{lstm_forward.1} parent=1 // pred_fallthru
      _
    %s539 = sld [smem:[#allocation5 + $0x86]]
    %s540 = scalar_lea.vmem %s1, %s539
    %s541 = scalar_lea.vmem [#allocation2], 49
    %s542 = scalar_lea.sflag [#allocation4], 13
    // Predicated region
    $region432: #{lstm_forward.1} parent=1 // pred_check
      _
    $region433: #{lstm_forward.1} parent=1 // pred_check_branch
      %544 = sbr.rel target = $region435
    $region434: #{lstm_forward.1} parent=1 // pred_region
      // Predicated region
      $region447: #{lstm_forward.1} parent=434 // pred_check
        _
      $region448: #{lstm_forward.1} parent=434 // pred_check_branch
        %560 = sbr.rel (0) target = $region450
      $region449: #{lstm_forward.1} parent=434 // pred_region
        %s562 = ssub.s32 2, 1
        loop: start=0, step=1, limit=1
        $region451: #{lstm_forward.1} parent=449 // loop_pre_header
          _
        $region452: #{lstm_forward.1} parent=449 // loop_header
          %s564 = sphi 0, %s568
          %p565 = scmp.ge.s32.totalorder %s564, 1
          %s569 = sphi %s540, %s540
          %s570 = sphi %s541, %s541
        $region453: #{lstm_forward.1} parent=449 // loop_header_branch
          %567 = sbr.rel (%p565) target = $region457
        $region454: #{lstm_forward.1} parent=449 // loop_body
          %v571 = vld [vmem:[%s569] sm:%s562]
          %572 = vst [vmem:[%s570] sm:%s562] %v571
        $region455: #{lstm_forward.1} parent=449 // loop_footer
          %s568 = sadd.s32 1, %s564
        $region456: #{lstm_forward.1} parent=449 // loop_footer_branch
          %563 = sbr.rel target = $region452
        $region457: #{lstm_forward.1} parent=449 // loop_exit
          _
      $region450: #{lstm_forward.1} parent=434 // pred_fallthru
        _
    $region435: #{lstm_forward.1} parent=1 // pred_fallthru
      _
    // Predicated region
    $region436: #{lstm_forward.1} parent=1 // pred_check
      _
    $region437: #{lstm_forward.1} parent=1 // pred_check_branch
      %546 = sbr.rel (0) target = $region439
    $region438: #{lstm_forward.1} parent=1 // pred_region
      %s548 = ssub.s32 2, 1
      loop: start=0, step=1, limit=1
      $region440: #{lstm_forward.1} parent=438 // loop_pre_header
        _
      $region441: #{lstm_forward.1} parent=438 // loop_header
        %s550 = sphi 0, %s554
        %p551 = scmp.ge.s32.totalorder %s550, 1
        %s555 = sphi %s540, %s540
        %s556 = sphi %s541, %s541
      $region442: #{lstm_forward.1} parent=438 // loop_header_branch
        %553 = sbr.rel (%p551) target = $region446
      $region443: #{lstm_forward.1} parent=438 // loop_body
        %v557 = vld [vmem:[%s555] sm:%s548]
        %558 = vst [vmem:[%s556] sm:%s548] %v557
      $region444: #{lstm_forward.1} parent=438 // loop_footer
        %s554 = sadd.s32 1, %s550
      $region445: #{lstm_forward.1} parent=438 // loop_footer_branch
        %549 = sbr.rel target = $region441
      $region446: #{lstm_forward.1} parent=438 // loop_exit
        _
    $region439: #{lstm_forward.1} parent=1 // pred_fallthru
      _
    // Predicated region
    $region458: #{lstm_forward.1} parent=1 // pred_check
      _
    $region459: #{lstm_forward.1} parent=1 // pred_check_branch
      %575 = sbr.rel (0) target = $region461
    $region460: #{lstm_forward.1} parent=1 // pred_region
      %576 = vsyncadd %s542, 16
    $region461: #{lstm_forward.1} parent=1 // pred_fallthru
      _
    %s577 = sld [smem:[#allocation5 + $0x7]]
    %s578 = scalar_lea.vmem %s1, %s577
    %s579 = scalar_lea.vmem [#allocation2], 56
    %s580 = scalar_lea.sflag [#allocation4], 14
    // Predicated region
    $region462: #{lstm_forward.1} parent=1 // pred_check
      _
    $region463: #{lstm_forward.1} parent=1 // pred_check_branch
      %582 = sbr.rel target = $region465
    $region464: #{lstm_forward.1} parent=1 // pred_region
      // Predicated region
      $region477: #{lstm_forward.1} parent=464 // pred_check
        _
      $region478: #{lstm_forward.1} parent=464 // pred_check_branch
        %598 = sbr.rel (0) target = $region480
      $region479: #{lstm_forward.1} parent=464 // pred_region
        %s600 = ssub.s32 2, 1
        loop: start=0, step=1, limit=1
        $region481: #{lstm_forward.1} parent=479 // loop_pre_header
          _
        $region482: #{lstm_forward.1} parent=479 // loop_header
          %s602 = sphi 0, %s606
          %p603 = scmp.ge.s32.totalorder %s602, 1
          %s607 = sphi %s578, %s578
          %s608 = sphi %s579, %s579
        $region483: #{lstm_forward.1} parent=479 // loop_header_branch
          %605 = sbr.rel (%p603) target = $region487
        $region484: #{lstm_forward.1} parent=479 // loop_body
          %v609 = vld [vmem:[%s607] sm:%s600]
          %610 = vst [vmem:[%s608] sm:%s600] %v609
        $region485: #{lstm_forward.1} parent=479 // loop_footer
          %s606 = sadd.s32 1, %s602
        $region486: #{lstm_forward.1} parent=479 // loop_footer_branch
          %601 = sbr.rel target = $region482
        $region487: #{lstm_forward.1} parent=479 // loop_exit
          _
      $region480: #{lstm_forward.1} parent=464 // pred_fallthru
        _
    $region465: #{lstm_forward.1} parent=1 // pred_fallthru
      _
    // Predicated region
    $region466: #{lstm_forward.1} parent=1 // pred_check
      _
    $region467: #{lstm_forward.1} parent=1 // pred_check_branch
      %584 = sbr.rel (0) target = $region469
    $region468: #{lstm_forward.1} parent=1 // pred_region
      %s586 = ssub.s32 2, 1
      loop: start=0, step=1, limit=1
      $region470: #{lstm_forward.1} parent=468 // loop_pre_header
        _
      $region471: #{lstm_forward.1} parent=468 // loop_header
        %s588 = sphi 0, %s592
        %p589 = scmp.ge.s32.totalorder %s588, 1
        %s593 = sphi %s578, %s578
        %s594 = sphi %s579, %s579
      $region472: #{lstm_forward.1} parent=468 // loop_header_branch
        %591 = sbr.rel (%p589) target = $region476
      $region473: #{lstm_forward.1} parent=468 // loop_body
        %v595 = vld [vmem:[%s593] sm:%s586]
        %596 = vst [vmem:[%s594] sm:%s586] %v595
      $region474: #{lstm_forward.1} parent=468 // loop_footer
        %s592 = sadd.s32 1, %s588
      $region475: #{lstm_forward.1} parent=468 // loop_footer_branch
        %587 = sbr.rel target = $region471
      $region476: #{lstm_forward.1} parent=468 // loop_exit
        _
    $region469: #{lstm_forward.1} parent=1 // pred_fallthru
      _
    // Predicated region
    $region488: #{lstm_forward.1} parent=1 // pred_check
      _
    $region489: #{lstm_forward.1} parent=1 // pred_check_branch
      %613 = sbr.rel (0) target = $region491
    $region490: #{lstm_forward.1} parent=1 // pred_region
      %614 = vsyncadd %s580, 16
    $region491: #{lstm_forward.1} parent=1 // pred_fallthru
      _
    %s615 = sld [smem:[#allocation5 + $0x87]]
    %s616 = scalar_lea.vmem %s1, %s615
    %s617 = scalar_lea.vmem [#allocation2], 57
    %s618 = scalar_lea.sflag [#allocation4], 15
    // Predicated region
    $region492: #{lstm_forward.1} parent=1 // pred_check
      _
    $region493: #{lstm_forward.1} parent=1 // pred_check_branch
      %620 = sbr.rel target = $region495
    $region494: #{lstm_forward.1} parent=1 // pred_region
      // Predicated region
      $region507: #{lstm_forward.1} parent=494 // pred_check
        _
      $region508: #{lstm_forward.1} parent=494 // pred_check_branch
        %636 = sbr.rel (0) target = $region510
      $region509: #{lstm_forward.1} parent=494 // pred_region
        %s638 = ssub.s32 2, 1
        loop: start=0, step=1, limit=1
        $region511: #{lstm_forward.1} parent=509 // loop_pre_header
          _
        $region512: #{lstm_forward.1} parent=509 // loop_header
          %s640 = sphi 0, %s644
          %p641 = scmp.ge.s32.totalorder %s640, 1
          %s645 = sphi %s616, %s616
          %s646 = sphi %s617, %s617
        $region513: #{lstm_forward.1} parent=509 // loop_header_branch
          %643 = sbr.rel (%p641) target = $region517
        $region514: #{lstm_forward.1} parent=509 // loop_body
          %v647 = vld [vmem:[%s645] sm:%s638]
          %648 = vst [vmem:[%s646] sm:%s638] %v647
        $region515: #{lstm_forward.1} parent=509 // loop_footer
          %s644 = sadd.s32 1, %s640
        $region516: #{lstm_forward.1} parent=509 // loop_footer_branch
          %639 = sbr.rel target = $region512
        $region517: #{lstm_forward.1} parent=509 // loop_exit
          _
      $region510: #{lstm_forward.1} parent=494 // pred_fallthru
        _
    $region495: #{lstm_forward.1} parent=1 // pred_fallthru
      _
    // Predicated region
    $region496: #{lstm_forward.1} parent=1 // pred_check
      _
    $region497: #{lstm_forward.1} parent=1 // pred_check_branch
      %622 = sbr.rel (0) target = $region499
    $region498: #{lstm_forward.1} parent=1 // pred_region
      %s624 = ssub.s32 2, 1
      loop: start=0, step=1, limit=1
      $region500: #{lstm_forward.1} parent=498 // loop_pre_header
        _
      $region501: #{lstm_forward.1} parent=498 // loop_header
        %s626 = sphi 0, %s630
        %p627 = scmp.ge.s32.totalorder %s626, 1
        %s631 = sphi %s616, %s616
        %s632 = sphi %s617, %s617
      $region502: #{lstm_forward.1} parent=498 // loop_header_branch
        %629 = sbr.rel (%p627) target = $region506
      $region503: #{lstm_forward.1} parent=498 // loop_body
        %v633 = vld [vmem:[%s631] sm:%s624]
        %634 = vst [vmem:[%s632] sm:%s624] %v633
      $region504: #{lstm_forward.1} parent=498 // loop_footer
        %s630 = sadd.s32 1, %s626
      $region505: #{lstm_forward.1} parent=498 // loop_footer_branch
        %625 = sbr.rel target = $region501
      $region506: #{lstm_forward.1} parent=498 // loop_exit
        _
    $region499: #{lstm_forward.1} parent=1 // pred_fallthru
      _
    // Predicated region
    $region518: #{lstm_forward.1} parent=1 // pred_check
      _
    $region519: #{lstm_forward.1} parent=1 // pred_check_branch
      %651 = sbr.rel (0) target = $region521
    $region520: #{lstm_forward.1} parent=1 // pred_region
      %652 = vsyncadd %s618, 16
    $region521: #{lstm_forward.1} parent=1 // pred_fallthru
      _
    %s653 = smul.u32 1, 1
    %s654 = sshll.u32 %s653, 4
    %655 = dma.done [#allocation4], %s654
    %s656 = sshll.u32 %s653, 4
    %657 = dma.done %s86, %s656
    %s658 = sshll.u32 %s653, 4
    %659 = dma.done %s124, %s658
    %s660 = sshll.u32 %s653, 4
    %661 = dma.done %s162, %s660
    %s662 = sshll.u32 %s653, 4
    %663 = dma.done %s200, %s662
    %s664 = sshll.u32 %s653, 4
    %665 = dma.done %s238, %s664
    %s666 = sshll.u32 %s653, 4
    %667 = dma.done %s276, %s666
    %s668 = sshll.u32 %s653, 4
    %669 = dma.done %s314, %s668
    %s670 = sshll.u32 %s653, 4
    %671 = dma.done %s352, %s670
    %s672 = sshll.u32 %s653, 4
    %673 = dma.done %s390, %s672
    %s674 = sshll.u32 %s653, 4
    %675 = dma.done %s428, %s674
    %s676 = sshll.u32 %s653, 4
    %677 = dma.done %s466, %s676
    %s678 = sshll.u32 %s653, 4
    %679 = dma.done %s504, %s678
    %s680 = sshll.u32 %s653, 4
    %681 = dma.done %s542, %s680
    %s682 = sshll.u32 %s653, 4
    %683 = dma.done %s580, %s682
    %s684 = sshll.u32 %s653, 4
    %685 = dma.done %s618, %s684
    %v686 = vld [vmem:[%s3] sm:$0xf]
    %v687 = vld [vmem:[%s3 + $0x4] sm:$0xf]
    %v688 = vld [vmem:[%s3 + $0x8] sm:$0xf]
    %v689 = vld [vmem:[%s3 + $0xc] sm:$0xf]
    %v690 = vld [vmem:[%s6] sm:$0xf]
    %v691 = vld [vmem:[%s6 + $0x4] sm:$0xf]
    %v692 = vld [vmem:[%s6 + $0x8] sm:$0xf]
    %v693 = vld [vmem:[%s6 + $0xc] sm:$0xf]
    %v694 = vld [vmem:[#allocation2] sm:$0xff]
    %v695 = vld [vmem:[#allocation2 + $0x8] sm:$0xff]
    %v696 = vld [vmem:[#allocation2 + $0x10] sm:$0xff]
    %v697 = vld [vmem:[#allocation2 + $0x18] sm:$0xff]
    %v698 = vld [vmem:[#allocation2 + $0x20] sm:$0xff]
    %v699 = vld [vmem:[#allocation2 + $0x28] sm:$0xff]
    %v700 = vld [vmem:[#allocation2 + $0x30] sm:$0xff]
    %v701 = vld [vmem:[#allocation2 + $0x38] sm:$0xff]
    %v702 = vpack.c.bf16 %v695, %v694
    %v703 = vpack.c.bf16 %v697, %v696
    %v704 = vpack.c.bf16 %v699, %v698
    %v705 = vpack.c.bf16 %v701, %v700
    %v706 = vld [vmem:[%s2] sm:$0xf]
    %v707 = vld [vmem:[%s2 + $0x4] sm:$0xf]
    %v708 = vld [vmem:[%s2 + $0x8] sm:$0xf]
    %v709 = vld [vmem:[%s2 + $0xc] sm:$0xf]
    %v710 = vld [vmem:[%s2 + $0x10] sm:$0xf]
    %v711 = vld [vmem:[%s2 + $0x14] sm:$0xf]
    %v712 = vld [vmem:[%s2 + $0x18] sm:$0xf]
    %v713 = vld [vmem:[%s2 + $0x1c] sm:$0xf]
    %v714 = vld [vmem:[%s4] sm:$0x1]
    %v716 = vperm.slane %v714, 0
    %v726 = vunpack.c.l.b16 %v706
    %v727 = vunpack.c.l.b16 %v707
    %v728 = vunpack.c.l.b16 %v708
    %v729 = vunpack.c.l.b16 %v709
    %v730 = vunpack.c.l.b16 %v710
    %v731 = vunpack.c.l.b16 %v711
    %v732 = vunpack.c.l.b16 %v712
    %v733 = vunpack.c.l.b16 %v713
    %v734 = vpack.c.b16 %v727, %v726
    %v735 = vpack.c.b16 %v729, %v728
    %v736 = vpack.c.b16 %v731, %v730
    %v737 = vpack.c.b16 %v733, %v732
    %vm742 = vcmask 523264
    %v744 = vsel %vm742, %v702, 0
    %v747 = vsel %vm742, %v703, 0
    %v750 = vsel %vm742, %v704, 0
    %v753 = vsel %vm742, %v705, 0
    %755 = vmatpush.bf16.msra.mxu0 0
    %756 = vmatpush.bf16.msra.mxu0 0
    %757 = vmatpush.bf16.msra.mxu0 0
    %758 = vmatpush.bf16.msra.mxu0 0
    %759 = vmatpush.bf16.msra.mxu0 %v737
    %760 = vmatpush.bf16.msra.mxu0 %v736
    %761 = vmatpush.bf16.msra.mxu0 %v735
    %762 = vmatpush.bf16.msra.mxu0 %v734
    %763 = vmatmul.bf16.gmra.mxu0 %v744
    %v764 = vpop.f32.mrf.mxu0
    %v765 = vadd.f32 %v716, %v764
    %v766 = vpop.f32.mrf.mxu0
    %v767 = vadd.f32 %v716, %v766
    %768 = vmatmul.bf16.gmra.mxu0 %v747
    %v769 = vpop.f32.mrf.mxu0
    %v770 = vadd.f32 %v716, %v769
    %v771 = vpop.f32.mrf.mxu0
    %v772 = vadd.f32 %v716, %v771
    %773 = vmatmul.bf16.gmra.mxu0 %v750
    %v774 = vpop.f32.mrf.mxu0
    %v775 = vadd.f32 %v716, %v774
    %v776 = vpop.f32.mrf.mxu0
    %v777 = vadd.f32 %v716, %v776
    %778 = vmatmul.bf16.gmra.mxu0 %v753
    %v779 = vpop.f32.mrf.mxu0
    %v780 = vadd.f32 %v716, %v779
    %v781 = vpop.f32.mrf.mxu0
    %v782 = vadd.f32 %v716, %v781
    %783 = vdwg.mxu0
    %v788 = vunpack.c.l.b16 %v686
    %v789 = vunpack.c.l.b16 %v687
    %v790 = vunpack.c.l.b16 %v688
    %v791 = vunpack.c.l.b16 %v689
    %v792 = vpack.c.b16 %v789, %v788
    %v793 = vpack.c.b16 %v791, %v790
    %vm796 = vcmask 261120
    %v798 = vsel %vm796, 0, 0
    %800 = vmatpush.bf16.msra.mxu0 0
    %801 = vmatpush.bf16.msra.mxu0 0
    %802 = vmatpush.bf16.msra.mxu0 0
    %803 = vmatpush.bf16.msra.mxu0 0
    %804 = vmatpush.bf16.msra.mxu0 0
    %805 = vmatpush.bf16.msra.mxu0 0
    %806 = vmatpush.bf16.msra.mxu0 %v793
    %807 = vmatpush.bf16.msra.mxu0 %v792
    %808 = vmatmul.bf16.gmra.mxu0 %v798
    %v809 = vpop.f32.mrf.mxu0
    %v810 = vadd.f32 0.0, %v809
    %v811 = vpop.f32.mrf.mxu0
    %812 = vdwg.mxu0
    %v813 = vadd.f32 %v765, %v810
    %v814 = vmul.f32 %v813, 0.5
    %v815 = vtanh.pop %v814
    %v816 = vadd.f32 %v815, 1.0
    %v817 = vmul.f32 %v816, 0.5
    %v818 = vtanh.pop %v813
    %v819 = vmul.f32 %v817, 0.0
    %821 = vrot.lane.b32.xlu0 %v818, 64
    %v822 = vpop.permute.xlu0 %821
    %v824 = vmul.f32 %v817, %v822
    %826 = vrot.lane.b32.xlu0 %v824, 32
    %v827 = vpop.permute.xlu0 %826
    %v829 = vadd.f32 %v819, %v827
    %v830 = vtanh.pop %v829
    %832 = vrot.lane.b32.xlu0 %v830, 64
    %v833 = vpop.permute.xlu0 %832
    %v835 = vmul.f32 %v817, %v833
    %837 = vrot.lane.b32.xlu0 %v835, 32
    %v838 = vpop.permute.xlu0 %837
    %840 = vst.msk [vmem:[#allocation3] sm:$0xff] %vm796, %v838
    %v841 = vpack.c.bf16 %v835, %v835
    %843 = vrot.lane.b32.xlu0 %v841, 32
    %v844 = vpop.permute.xlu0 %843
    %v846 = vsel %vm796, %v844, 0
    %848 = vmatpush.bf16.msra.mxu0 0
    %849 = vmatpush.bf16.msra.mxu0 0
    %850 = vmatpush.bf16.msra.mxu0 0
    %851 = vmatpush.bf16.msra.mxu0 0
    %852 = vmatpush.bf16.msra.mxu0 0
    %853 = vmatpush.bf16.msra.mxu0 0
    %854 = vmatpush.bf16.msra.mxu0 %v793
    %855 = vmatpush.bf16.msra.mxu0 %v792
    %856 = vmatmul.bf16.gmra.mxu0 %v846
    %v857 = vpop.f32.mrf.mxu0
    %v858 = vadd.f32 0.0, %v857
    %v859 = vpop.f32.mrf.mxu0
    %860 = vdwg.mxu0
    %v861 = vadd.f32 %v767, %v858
    %v862 = vmul.f32 %v861, 0.5
    %v863 = vtanh.pop %v862
    %v864 = vadd.f32 %v863, 1.0
    %v865 = vmul.f32 %v864, 0.5
    %v866 = vtanh.pop %v861
    %v867 = vmul.f32 %v865, %v829
    %869 = vrot.lane.b32.xlu0 %v866, 64
    %v870 = vpop.permute.xlu0 %869
    %v872 = vmul.f32 %v865, %v870
    %874 = vrot.lane.b32.xlu0 %v872, 32
    %v875 = vpop.permute.xlu0 %874
    %v877 = vadd.f32 %v867, %v875
    %v878 = vtanh.pop %v877
    %880 = vrot.lane.b32.xlu0 %v878, 64
    %v881 = vpop.permute.xlu0 %880
    %v883 = vmul.f32 %v865, %v881
    %885 = vrot.lane.b32.xlu0 %v883, 32
    %v886 = vpop.permute.xlu0 %885
    %888 = vst.msk [vmem:[#allocation3 + $0x8] sm:$0xff] %vm796, %v886
    %v889 = vpack.c.bf16 %v883, %v883
    %891 = vrot.lane.b32.xlu0 %v889, 32
    %v892 = vpop.permute.xlu0 %891
    %v894 = vsel %vm796, %v892, 0
    %896 = vmatpush.bf16.msra.mxu0 0
    %897 = vmatpush.bf16.msra.mxu0 0
    %898 = vmatpush.bf16.msra.mxu0 0
    %899 = vmatpush.bf16.msra.mxu0 0
    %900 = vmatpush.bf16.msra.mxu0 0
    %901 = vmatpush.bf16.msra.mxu0 0
    %902 = vmatpush.bf16.msra.mxu0 %v793
    %903 = vmatpush.bf16.msra.mxu0 %v792
    %904 = vmatmul.bf16.gmra.mxu0 %v894
    %v905 = vpop.f32.mrf.mxu0
    %v906 = vadd.f32 0.0, %v905
    %v907 = vpop.f32.mrf.mxu0
    %908 = vdwg.mxu0
    %v909 = vadd.f32 %v770, %v906
    %v910 = vmul.f32 %v909, 0.5
    %v911 = vtanh.pop %v910
    %v912 = vadd.f32 %v911, 1.0
    %v913 = vmul.f32 %v912, 0.5
    %v914 = vtanh.pop %v909
    %v915 = vmul.f32 %v913, %v877
    %917 = vrot.lane.b32.xlu0 %v914, 64
    %v918 = vpop.permute.xlu0 %917
    %v920 = vmul.f32 %v913, %v918
    %922 = vrot.lane.b32.xlu0 %v920, 32
    %v923 = vpop.permute.xlu0 %922
    %v925 = vadd.f32 %v915, %v923
    %v926 = vtanh.pop %v925
    %928 = vrot.lane.b32.xlu0 %v926, 64
    %v929 = vpop.permute.xlu0 %928
    %v931 = vmul.f32 %v913, %v929
    %933 = vrot.lane.b32.xlu0 %v931, 32
    %v934 = vpop.permute.xlu0 %933
    %936 = vst.msk [vmem:[#allocation3 + $0x10] sm:$0xff] %vm796, %v934
    %v937 = vpack.c.bf16 %v931, %v931
    %939 = vrot.lane.b32.xlu0 %v937, 32
    %v940 = vpop.permute.xlu0 %939
    %v942 = vsel %vm796, %v940, 0
    %944 = vmatpush.bf16.msra.mxu0 0
    %945 = vmatpush.bf16.msra.mxu0 0
    %946 = vmatpush.bf16.msra.mxu0 0
    %947 = vmatpush.bf16.msra.mxu0 0
    %948 = vmatpush.bf16.msra.mxu0 0
    %949 = vmatpush.bf16.msra.mxu0 0
    %950 = vmatpush.bf16.msra.mxu0 %v793
    %951 = vmatpush.bf16.msra.mxu0 %v792
    %952 = vmatmul.bf16.gmra.mxu0 %v942
    %v953 = vpop.f32.mrf.mxu0
    %v954 = vadd.f32 0.0, %v953
    %v955 = vpop.f32.mrf.mxu0
    %956 = vdwg.mxu0
    %v957 = vadd.f32 %v772, %v954
    %v958 = vmul.f32 %v957, 0.5
    %v959 = vtanh.pop %v958
    %v960 = vadd.f32 %v959, 1.0
    %v961 = vmul.f32 %v960, 0.5
    %v962 = vtanh.pop %v957
    %v963 = vmul.f32 %v961, %v925
    %965 = vrot.lane.b32.xlu0 %v962, 64
    %v966 = vpop.permute.xlu0 %965
    %v968 = vmul.f32 %v961, %v966
    %970 = vrot.lane.b32.xlu0 %v968, 32
    %v971 = vpop.permute.xlu0 %970
    %v973 = vadd.f32 %v963, %v971
    %v974 = vtanh.pop %v973
    %976 = vrot.lane.b32.xlu0 %v974, 64
    %v977 = vpop.permute.xlu0 %976
    %v979 = vmul.f32 %v961, %v977
    %981 = vrot.lane.b32.xlu0 %v979, 32
    %v982 = vpop.permute.xlu0 %981
    %984 = vst.msk [vmem:[#allocation3 + $0x18] sm:$0xff] %vm796, %v982
    %v985 = vpack.c.bf16 %v979, %v979
    %987 = vrot.lane.b32.xlu0 %v985, 32
    %v988 = vpop.permute.xlu0 %987
    %v990 = vsel %vm796, %v988, 0
    %992 = vmatpush.bf16.msra.mxu0 0
    %993 = vmatpush.bf16.msra.mxu0 0
    %994 = vmatpush.bf16.msra.mxu0 0
    %995 = vmatpush.bf16.msra.mxu0 0
    %996 = vmatpush.bf16.msra.mxu0 0
    %997 = vmatpush.bf16.msra.mxu0 0
    %998 = vmatpush.bf16.msra.mxu0 %v793
    %999 = vmatpush.bf16.msra.mxu0 %v792
    %1000 = vmatmul.bf16.gmra.mxu0 %v990
    %v1001 = vpop.f32.mrf.mxu0
    %v1002 = vadd.f32 0.0, %v1001
    %v1003 = vpop.f32.mrf.mxu0
    %1004 = vdwg.mxu0
    %v1005 = vadd.f32 %v775, %v1002
    %v1006 = vmul.f32 %v1005, 0.5
    %v1007 = vtanh.pop %v1006
    %v1008 = vadd.f32 %v1007, 1.0
    %v1009 = vmul.f32 %v1008, 0.5
    %v1010 = vtanh.pop %v1005
    %v1011 = vmul.f32 %v1009, %v973
    %1013 = vrot.lane.b32.xlu0 %v1010, 64
    %v1014 = vpop.permute.xlu0 %1013
    %v1016 = vmul.f32 %v1009, %v1014
    %1018 = vrot.lane.b32.xlu0 %v1016, 32
    %v1019 = vpop.permute.xlu0 %1018
    %v1021 = vadd.f32 %v1011, %v1019
    %v1022 = vtanh.pop %v1021
    %1024 = vrot.lane.b32.xlu0 %v1022, 64
    %v1025 = vpop.permute.xlu0 %1024
    %v1027 = vmul.f32 %v1009, %v1025
    %1029 = vrot.lane.b32.xlu0 %v1027, 32
    %v1030 = vpop.permute.xlu0 %1029
    %1032 = vst.msk [vmem:[#allocation3 + $0x20] sm:$0xff] %vm796, %v1030
    %v1033 = vpack.c.bf16 %v1027, %v1027
    %1035 = vrot.lane.b32.xlu0 %v1033, 32
    %v1036 = vpop.permute.xlu0 %1035
    %v1038 = vsel %vm796, %v1036, 0
    %1040 = vmatpush.bf16.msra.mxu0 0
    %1041 = vmatpush.bf16.msra.mxu0 0
    %1042 = vmatpush.bf16.msra.mxu0 0
    %1043 = vmatpush.bf16.msra.mxu0 0
    %1044 = vmatpush.bf16.msra.mxu0 0
    %1045 = vmatpush.bf16.msra.mxu0 0
    %1046 = vmatpush.bf16.msra.mxu0 %v793
    %1047 = vmatpush.bf16.msra.mxu0 %v792
    %1048 = vmatmul.bf16.gmra.mxu0 %v1038
    %v1049 = vpop.f32.mrf.mxu0
    %v1050 = vadd.f32 0.0, %v1049
    %v1051 = vpop.f32.mrf.mxu0
    %1052 = vdwg.mxu0
    %v1053 = vadd.f32 %v777, %v1050
    %v1054 = vmul.f32 %v1053, 0.5
    %v1055 = vtanh.pop %v1054
    %v1056 = vadd.f32 %v1055, 1.0
    %v1057 = vmul.f32 %v1056, 0.5
    %v1058 = vtanh.pop %v1053
    %v1059 = vmul.f32 %v1057, %v1021
    %1061 = vrot.lane.b32.xlu0 %v1058, 64
    %v1062 = vpop.permute.xlu0 %1061
    %v1064 = vmul.f32 %v1057, %v1062
    %1066 = vrot.lane.b32.xlu0 %v1064, 32
    %v1067 = vpop.permute.xlu0 %1066
    %v1069 = vadd.f32 %v1059, %v1067
    %v1070 = vtanh.pop %v1069
    %1072 = vrot.lane.b32.xlu0 %v1070, 64
    %v1073 = vpop.permute.xlu0 %1072
    %v1075 = vmul.f32 %v1057, %v1073
    %1077 = vrot.lane.b32.xlu0 %v1075, 32
    %v1078 = vpop.permute.xlu0 %1077
    %1080 = vst.msk [vmem:[#allocation3 + $0x28] sm:$0xff] %vm796, %v1078
    %v1081 = vpack.c.bf16 %v1075, %v1075
    %1083 = vrot.lane.b32.xlu0 %v1081, 32
    %v1084 = vpop.permute.xlu0 %1083
    %v1086 = vsel %vm796, %v1084, 0
    %1088 = vmatpush.bf16.msra.mxu0 0
    %1089 = vmatpush.bf16.msra.mxu0 0
    %1090 = vmatpush.bf16.msra.mxu0 0
    %1091 = vmatpush.bf16.msra.mxu0 0
    %1092 = vmatpush.bf16.msra.mxu0 0
    %1093 = vmatpush.bf16.msra.mxu0 0
    %1094 = vmatpush.bf16.msra.mxu0 %v793
    %1095 = vmatpush.bf16.msra.mxu0 %v792
    %1096 = vmatmul.bf16.gmra.mxu0 %v1086
    %v1097 = vpop.f32.mrf.mxu0
    %v1098 = vadd.f32 0.0, %v1097
    %v1099 = vpop.f32.mrf.mxu0
    %1100 = vdwg.mxu0
    %v1101 = vadd.f32 %v780, %v1098
    %v1102 = vmul.f32 %v1101, 0.5
    %v1103 = vtanh.pop %v1102
    %v1104 = vadd.f32 %v1103, 1.0
    %v1105 = vmul.f32 %v1104, 0.5
    %v1106 = vtanh.pop %v1101
    %v1107 = vmul.f32 %v1105, %v1069
    %1109 = vrot.lane.b32.xlu0 %v1106, 64
    %v1110 = vpop.permute.xlu0 %1109
    %v1112 = vmul.f32 %v1105, %v1110
    %1114 = vrot.lane.b32.xlu0 %v1112, 32
    %v1115 = vpop.permute.xlu0 %1114
    %v1117 = vadd.f32 %v1107, %v1115
    %v1118 = vtanh.pop %v1117
    %1120 = vrot.lane.b32.xlu0 %v1118, 64
    %v1121 = vpop.permute.xlu0 %1120
    %v1123 = vmul.f32 %v1105, %v1121
    %1125 = vrot.lane.b32.xlu0 %v1123, 32
    %v1126 = vpop.permute.xlu0 %1125
    %1128 = vst.msk [vmem:[#allocation3 + $0x30] sm:$0xff] %vm796, %v1126
    %v1129 = vpack.c.bf16 %v1123, %v1123
    %1131 = vrot.lane.b32.xlu0 %v1129, 32
    %v1132 = vpop.permute.xlu0 %1131
    %v1134 = vsel %vm796, %v1132, 0
    %1136 = vmatpush.bf16.msra.mxu0 0
    %1137 = vmatpush.bf16.msra.mxu0 0
    %1138 = vmatpush.bf16.msra.mxu0 0
    %1139 = vmatpush.bf16.msra.mxu0 0
    %1140 = vmatpush.bf16.msra.mxu0 0
    %1141 = vmatpush.bf16.msra.mxu0 0
    %1142 = vmatpush.bf16.msra.mxu0 %v793
    %1143 = vmatpush.bf16.msra.mxu0 %v792
    %1144 = vmatmul.bf16.gmra.mxu0 %v1134
    %v1145 = vpop.f32.mrf.mxu0
    %v1146 = vadd.f32 0.0, %v1145
    %v1147 = vpop.f32.mrf.mxu0
    %1148 = vdwg.mxu0
    %v1149 = vadd.f32 %v782, %v1146
    %v1150 = vmul.f32 %v1149, 0.5
    %v1151 = vtanh.pop %v1150
    %v1152 = vadd.f32 %v1151, 1.0
    %v1153 = vmul.f32 %v1152, 0.5
    %v1154 = vtanh.pop %v1149
    %v1155 = vmul.f32 %v1153, %v1117
    %1157 = vrot.lane.b32.xlu0 %v1154, 64
    %v1158 = vpop.permute.xlu0 %1157
    %v1160 = vmul.f32 %v1153, %v1158
    %1162 = vrot.lane.b32.xlu0 %v1160, 32
    %v1163 = vpop.permute.xlu0 %1162
    %v1165 = vadd.f32 %v1155, %v1163
    %v1166 = vtanh.pop %v1165
    %1168 = vrot.lane.b32.xlu0 %v1166, 64
    %v1169 = vpop.permute.xlu0 %1168
    %v1171 = vmul.f32 %v1153, %v1169
    %1173 = vrot.lane.b32.xlu0 %v1171, 32
    %v1174 = vpop.permute.xlu0 %1173
    %1176 = vst.msk [vmem:[#allocation3 + $0x38] sm:$0xff] %vm796, %v1174
    %v1177 = vld [vmem:[#allocation3] sm:$0xff]
    %v1178 = vld [vmem:[#allocation3 + $0x8] sm:$0xff]
    %v1179 = vld [vmem:[#allocation3 + $0x10] sm:$0xff]
    %v1180 = vld [vmem:[#allocation3 + $0x18] sm:$0xff]
    %v1181 = vld [vmem:[#allocation3 + $0x20] sm:$0xff]
    %v1182 = vld [vmem:[#allocation3 + $0x28] sm:$0xff]
    %v1183 = vld [vmem:[#allocation3 + $0x30] sm:$0xff]
    %v1184 = vld [vmem:[#allocation3 + $0x38] sm:$0xff]
    %v1185 = vpack.c.bf16 %v1178, %v1177
    %v1186 = vpack.c.bf16 %v1180, %v1179
    %v1187 = vpack.c.bf16 %v1182, %v1181
    %v1188 = vpack.c.bf16 %v1184, %v1183
    %v1189 = vld [vmem:[%s5] sm:$0xf]
    %v1190 = vld [vmem:[%s5 + $0x4] sm:$0xf]
    %v1191 = vld [vmem:[%s5 + $0x8] sm:$0xf]
    %v1192 = vld [vmem:[%s5 + $0xc] sm:$0xf]
    %v1193 = vld [vmem:[%s7] sm:$0x1]
    %v1195 = vperm.slane %v1193, 0
    %v1201 = vunpack.c.l.b16 %v1189
    %v1202 = vunpack.c.l.b16 %v1190
    %v1203 = vunpack.c.l.b16 %v1191
    %v1204 = vunpack.c.l.b16 %v1192
    %v1205 = vpack.c.b16 %v1202, %v1201
    %v1206 = vpack.c.b16 %v1204, %v1203
    %v1210 = vsel %vm796, %v1185, 0
    %v1213 = vsel %vm796, %v1186, 0
    %v1216 = vsel %vm796, %v1187, 0
    %v1219 = vsel %vm796, %v1188, 0
    %1221 = vmatpush.bf16.msra.mxu0 0
    %1222 = vmatpush.bf16.msra.mxu0 0
    %1223 = vmatpush.bf16.msra.mxu0 0
    %1224 = vmatpush.bf16.msra.mxu0 0
    %1225 = vmatpush.bf16.msra.mxu0 0
    %1226 = vmatpush.bf16.msra.mxu0 0
    %1227 = vmatpush.bf16.msra.mxu0 %v1206
    %1228 = vmatpush.bf16.msra.mxu0 %v1205
    %1229 = vmatmul.bf16.gmra.mxu0 %v1210
    %v1230 = vpop.f32.mrf.mxu0
    %v1231 = vadd.f32 %v1195, %v1230
    %v1232 = vpop.f32.mrf.mxu0
    %v1233 = vadd.f32 %v1195, %v1232
    %1234 = vmatmul.bf16.gmra.mxu0 %v1213
    %v1235 = vpop.f32.mrf.mxu0
    %v1236 = vadd.f32 %v1195, %v1235
    %v1237 = vpop.f32.mrf.mxu0
    %v1238 = vadd.f32 %v1195, %v1237
    %1239 = vmatmul.bf16.gmra.mxu0 %v1216
    %v1240 = vpop.f32.mrf.mxu0
    %v1241 = vadd.f32 %v1195, %v1240
    %v1242 = vpop.f32.mrf.mxu0
    %v1243 = vadd.f32 %v1195, %v1242
    %1244 = vmatmul.bf16.gmra.mxu0 %v1219
    %v1245 = vpop.f32.mrf.mxu0
    %v1246 = vadd.f32 %v1195, %v1245
    %v1247 = vpop.f32.mrf.mxu0
    %v1248 = vadd.f32 %v1195, %v1247
    %1249 = vdwg.mxu0
    %v1254 = vunpack.c.l.b16 %v690
    %v1255 = vunpack.c.l.b16 %v691
    %v1256 = vunpack.c.l.b16 %v692
    %v1257 = vunpack.c.l.b16 %v693
    %v1258 = vpack.c.b16 %v1255, %v1254
    %v1259 = vpack.c.b16 %v1257, %v1256
    %1262 = vmatpush.bf16.msra.mxu0 0
    %1263 = vmatpush.bf16.msra.mxu0 0
    %1264 = vmatpush.bf16.msra.mxu0 0
    %1265 = vmatpush.bf16.msra.mxu0 0
    %1266 = vmatpush.bf16.msra.mxu0 0
    %1267 = vmatpush.bf16.msra.mxu0 0
    %1268 = vmatpush.bf16.msra.mxu0 %v1259
    %1269 = vmatpush.bf16.msra.mxu0 %v1258
    %1270 = vmatmul.bf16.gmra.mxu0 %v798
    %v1271 = vpop.f32.mrf.mxu0
    %v1272 = vadd.f32 0.0, %v1271
    %v1273 = vpop.f32.mrf.mxu0
    %1274 = vdwg.mxu0
    %v1275 = vadd.f32 %v1231, %v1272
    %v1276 = vmul.f32 %v1275, 0.5
    %v1277 = vtanh.pop %v1276
    %v1278 = vadd.f32 %v1277, 1.0
    %v1279 = vmul.f32 %v1278, 0.5
    %v1280 = vtanh.pop %v1275
    %v1281 = vmul.f32 %v1279, 0.0
    %1283 = vrot.lane.b32.xlu0 %v1280, 64
    %v1284 = vpop.permute.xlu0 %1283
    %v1286 = vmul.f32 %v1279, %v1284
    %1288 = vrot.lane.b32.xlu0 %v1286, 32
    %v1289 = vpop.permute.xlu0 %1288
    %v1291 = vadd.f32 %v1281, %v1289
    %v1292 = vtanh.pop %v1291
    %1294 = vrot.lane.b32.xlu0 %v1292, 64
    %v1295 = vpop.permute.xlu0 %1294
    %v1297 = vmul.f32 %v1279, %v1295
    %v1298 = vpack.c.bf16 %v1297, %v1297
    %1300 = vrot.lane.b32.xlu0 %v1298, 32
    %v1301 = vpop.permute.xlu0 %1300
    %v1303 = vsel %vm796, %v1301, 0
    %1305 = vmatpush.bf16.msra.mxu0 0
    %1306 = vmatpush.bf16.msra.mxu0 0
    %1307 = vmatpush.bf16.msra.mxu0 0
    %1308 = vmatpush.bf16.msra.mxu0 0
    %1309 = vmatpush.bf16.msra.mxu0 0
    %1310 = vmatpush.bf16.msra.mxu0 0
    %1311 = vmatpush.bf16.msra.mxu0 %v1259
    %1312 = vmatpush.bf16.msra.mxu0 %v1258
    %1313 = vmatmul.bf16.gmra.mxu0 %v1303
    %v1314 = vpop.f32.mrf.mxu0
    %v1315 = vadd.f32 0.0, %v1314
    %v1316 = vpop.f32.mrf.mxu0
    %1317 = vdwg.mxu0
    %v1318 = vadd.f32 %v1233, %v1315
    %v1319 = vmul.f32 %v1318, 0.5
    %v1320 = vtanh.pop %v1319
    %v1321 = vadd.f32 %v1320, 1.0
    %v1322 = vmul.f32 %v1321, 0.5
    %v1323 = vtanh.pop %v1318
    %v1324 = vmul.f32 %v1322, %v1291
    %1326 = vrot.lane.b32.xlu0 %v1323, 64
    %v1327 = vpop.permute.xlu0 %1326
    %v1329 = vmul.f32 %v1322, %v1327
    %1331 = vrot.lane.b32.xlu0 %v1329, 32
    %v1332 = vpop.permute.xlu0 %1331
    %v1334 = vadd.f32 %v1324, %v1332
    %v1335 = vtanh.pop %v1334
    %1337 = vrot.lane.b32.xlu0 %v1335, 64
    %v1338 = vpop.permute.xlu0 %1337
    %v1340 = vmul.f32 %v1322, %v1338
    %v1341 = vpack.c.bf16 %v1340, %v1340
    %1343 = vrot.lane.b32.xlu0 %v1341, 32
    %v1344 = vpop.permute.xlu0 %1343
    %v1346 = vsel %vm796, %v1344, 0
    %1348 = vmatpush.bf16.msra.mxu0 0
    %1349 = vmatpush.bf16.msra.mxu0 0
    %1350 = vmatpush.bf16.msra.mxu0 0
    %1351 = vmatpush.bf16.msra.mxu0 0
    %1352 = vmatpush.bf16.msra.mxu0 0
    %1353 = vmatpush.bf16.msra.mxu0 0
    %1354 = vmatpush.bf16.msra.mxu0 %v1259
    %1355 = vmatpush.bf16.msra.mxu0 %v1258
    %1356 = vmatmul.bf16.gmra.mxu0 %v1346
    %v1357 = vpop.f32.mrf.mxu0
    %v1358 = vadd.f32 0.0, %v1357
    %v1359 = vpop.f32.mrf.mxu0
    %1360 = vdwg.mxu0
    %v1361 = vadd.f32 %v1236, %v1358
    %v1362 = vmul.f32 %v1361, 0.5
    %v1363 = vtanh.pop %v1362
    %v1364 = vadd.f32 %v1363, 1.0
    %v1365 = vmul.f32 %v1364, 0.5
    %v1366 = vtanh.pop %v1361
    %v1367 = vmul.f32 %v1365, %v1334
    %1369 = vrot.lane.b32.xlu0 %v1366, 64
    %v1370 = vpop.permute.xlu0 %1369
    %v1372 = vmul.f32 %v1365, %v1370
    %1374 = vrot.lane.b32.xlu0 %v1372, 32
    %v1375 = vpop.permute.xlu0 %1374
    %v1377 = vadd.f32 %v1367, %v1375
    %v1378 = vtanh.pop %v1377
    %1380 = vrot.lane.b32.xlu0 %v1378, 64
    %v1381 = vpop.permute.xlu0 %1380
    %v1383 = vmul.f32 %v1365, %v1381
    %v1384 = vpack.c.bf16 %v1383, %v1383
    %1386 = vrot.lane.b32.xlu0 %v1384, 32
    %v1387 = vpop.permute.xlu0 %1386
    %v1389 = vsel %vm796, %v1387, 0
    %1391 = vmatpush.bf16.msra.mxu0 0
    %1392 = vmatpush.bf16.msra.mxu0 0
    %1393 = vmatpush.bf16.msra.mxu0 0
    %1394 = vmatpush.bf16.msra.mxu0 0
    %1395 = vmatpush.bf16.msra.mxu0 0
    %1396 = vmatpush.bf16.msra.mxu0 0
    %1397 = vmatpush.bf16.msra.mxu0 %v1259
    %1398 = vmatpush.bf16.msra.mxu0 %v1258
    %1399 = vmatmul.bf16.gmra.mxu0 %v1389
    %v1400 = vpop.f32.mrf.mxu0
    %v1401 = vadd.f32 0.0, %v1400
    %v1402 = vpop.f32.mrf.mxu0
    %1403 = vdwg.mxu0
    %v1404 = vadd.f32 %v1238, %v1401
    %v1405 = vmul.f32 %v1404, 0.5
    %v1406 = vtanh.pop %v1405
    %v1407 = vadd.f32 %v1406, 1.0
    %v1408 = vmul.f32 %v1407, 0.5
    %v1409 = vtanh.pop %v1404
    %v1410 = vmul.f32 %v1408, %v1377
    %1412 = vrot.lane.b32.xlu0 %v1409, 64
    %v1413 = vpop.permute.xlu0 %1412
    %v1415 = vmul.f32 %v1408, %v1413
    %1417 = vrot.lane.b32.xlu0 %v1415, 32
    %v1418 = vpop.permute.xlu0 %1417
    %v1420 = vadd.f32 %v1410, %v1418
    %v1421 = vtanh.pop %v1420
    %1423 = vrot.lane.b32.xlu0 %v1421, 64
    %v1424 = vpop.permute.xlu0 %1423
    %v1426 = vmul.f32 %v1408, %v1424
    %v1427 = vpack.c.bf16 %v1426, %v1426
    %1429 = vrot.lane.b32.xlu0 %v1427, 32
    %v1430 = vpop.permute.xlu0 %1429
    %v1432 = vsel %vm796, %v1430, 0
    %1434 = vmatpush.bf16.msra.mxu0 0
    %1435 = vmatpush.bf16.msra.mxu0 0
    %1436 = vmatpush.bf16.msra.mxu0 0
    %1437 = vmatpush.bf16.msra.mxu0 0
    %1438 = vmatpush.bf16.msra.mxu0 0
    %1439 = vmatpush.bf16.msra.mxu0 0
    %1440 = vmatpush.bf16.msra.mxu0 %v1259
    %1441 = vmatpush.bf16.msra.mxu0 %v1258
    %1442 = vmatmul.bf16.gmra.mxu0 %v1432
    %v1443 = vpop.f32.mrf.mxu0
    %v1444 = vadd.f32 0.0, %v1443
    %v1445 = vpop.f32.mrf.mxu0
    %1446 = vdwg.mxu0
    %v1447 = vadd.f32 %v1241, %v1444
    %v1448 = vmul.f32 %v1447, 0.5
    %v1449 = vtanh.pop %v1448
    %v1450 = vadd.f32 %v1449, 1.0
    %v1451 = vmul.f32 %v1450, 0.5
    %v1452 = vtanh.pop %v1447
    %v1453 = vmul.f32 %v1451, %v1420
    %1455 = vrot.lane.b32.xlu0 %v1452, 64
    %v1456 = vpop.permute.xlu0 %1455
    %v1458 = vmul.f32 %v1451, %v1456
    %1460 = vrot.lane.b32.xlu0 %v1458, 32
    %v1461 = vpop.permute.xlu0 %1460
    %v1463 = vadd.f32 %v1453, %v1461
    %v1464 = vtanh.pop %v1463
    %1466 = vrot.lane.b32.xlu0 %v1464, 64
    %v1467 = vpop.permute.xlu0 %1466
    %v1469 = vmul.f32 %v1451, %v1467
    %v1470 = vpack.c.bf16 %v1469, %v1469
    %1472 = vrot.lane.b32.xlu0 %v1470, 32
    %v1473 = vpop.permute.xlu0 %1472
    %v1475 = vsel %vm796, %v1473, 0
    %1477 = vmatpush.bf16.msra.mxu0 0
    %1478 = vmatpush.bf16.msra.mxu0 0
    %1479 = vmatpush.bf16.msra.mxu0 0
    %1480 = vmatpush.bf16.msra.mxu0 0
    %1481 = vmatpush.bf16.msra.mxu0 0
    %1482 = vmatpush.bf16.msra.mxu0 0
    %1483 = vmatpush.bf16.msra.mxu0 %v1259
    %1484 = vmatpush.bf16.msra.mxu0 %v1258
    %1485 = vmatmul.bf16.gmra.mxu0 %v1475
    %v1486 = vpop.f32.mrf.mxu0
    %v1487 = vadd.f32 0.0, %v1486
    %v1488 = vpop.f32.mrf.mxu0
    %1489 = vdwg.mxu0
    %v1490 = vadd.f32 %v1243, %v1487
    %v1491 = vmul.f32 %v1490, 0.5
    %v1492 = vtanh.pop %v1491
    %v1493 = vadd.f32 %v1492, 1.0
    %v1494 = vmul.f32 %v1493, 0.5
    %v1495 = vtanh.pop %v1490
    %v1496 = vmul.f32 %v1494, %v1463
    %1498 = vrot.lane.b32.xlu0 %v1495, 64
    %v1499 = vpop.permute.xlu0 %1498
    %v1501 = vmul.f32 %v1494, %v1499
    %1503 = vrot.lane.b32.xlu0 %v1501, 32
    %v1504 = vpop.permute.xlu0 %1503
    %v1506 = vadd.f32 %v1496, %v1504
    %v1507 = vtanh.pop %v1506
    %1509 = vrot.lane.b32.xlu0 %v1507, 64
    %v1510 = vpop.permute.xlu0 %1509
    %v1512 = vmul.f32 %v1494, %v1510
    %v1513 = vpack.c.bf16 %v1512, %v1512
    %1515 = vrot.lane.b32.xlu0 %v1513, 32
    %v1516 = vpop.permute.xlu0 %1515
    %v1518 = vsel %vm796, %v1516, 0
    %1520 = vmatpush.bf16.msra.mxu0 0
    %1521 = vmatpush.bf16.msra.mxu0 0
    %1522 = vmatpush.bf16.msra.mxu0 0
    %1523 = vmatpush.bf16.msra.mxu0 0
    %1524 = vmatpush.bf16.msra.mxu0 0
    %1525 = vmatpush.bf16.msra.mxu0 0
    %1526 = vmatpush.bf16.msra.mxu0 %v1259
    %1527 = vmatpush.bf16.msra.mxu0 %v1258
    %1528 = vmatmul.bf16.gmra.mxu0 %v1518
    %v1529 = vpop.f32.mrf.mxu0
    %v1530 = vadd.f32 0.0, %v1529
    %v1531 = vpop.f32.mrf.mxu0
    %1532 = vdwg.mxu0
    %v1533 = vadd.f32 %v1246, %v1530
    %v1534 = vmul.f32 %v1533, 0.5
    %v1535 = vtanh.pop %v1534
    %v1536 = vadd.f32 %v1535, 1.0
    %v1537 = vmul.f32 %v1536, 0.5
    %v1538 = vtanh.pop %v1533
    %v1539 = vmul.f32 %v1537, %v1506
    %1541 = vrot.lane.b32.xlu0 %v1538, 64
    %v1542 = vpop.permute.xlu0 %1541
    %v1544 = vmul.f32 %v1537, %v1542
    %1546 = vrot.lane.b32.xlu0 %v1544, 32
    %v1547 = vpop.permute.xlu0 %1546
    %v1549 = vadd.f32 %v1539, %v1547
    %v1550 = vtanh.pop %v1549
    %1552 = vrot.lane.b32.xlu0 %v1550, 64
    %v1553 = vpop.permute.xlu0 %1552
    %v1555 = vmul.f32 %v1537, %v1553
    %v1556 = vpack.c.bf16 %v1555, %v1555
    %1558 = vrot.lane.b32.xlu0 %v1556, 32
    %v1559 = vpop.permute.xlu0 %1558
    %v1561 = vsel %vm796, %v1559, 0
    %1563 = vmatpush.bf16.msra.mxu0 0
    %1564 = vmatpush.bf16.msra.mxu0 0
    %1565 = vmatpush.bf16.msra.mxu0 0
    %1566 = vmatpush.bf16.msra.mxu0 0
    %1567 = vmatpush.bf16.msra.mxu0 0
    %1568 = vmatpush.bf16.msra.mxu0 0
    %1569 = vmatpush.bf16.msra.mxu0 %v1259
    %1570 = vmatpush.bf16.msra.mxu0 %v1258
    %1571 = vmatmul.bf16.gmra.mxu0 %v1561
    %v1572 = vpop.f32.mrf.mxu0
    %v1573 = vadd.f32 0.0, %v1572
    %v1574 = vpop.f32.mrf.mxu0
    %1575 = vdwg.mxu0
    %v1576 = vadd.f32 %v1248, %v1573
    %v1577 = vmul.f32 %v1576, 0.5
    %v1578 = vtanh.pop %v1577
    %v1579 = vadd.f32 %v1578, 1.0
    %v1580 = vmul.f32 %v1579, 0.5
    %v1581 = vtanh.pop %v1576
    %v1582 = vmul.f32 %v1580, %v1549
    %1584 = vrot.lane.b32.xlu0 %v1581, 64
    %v1585 = vpop.permute.xlu0 %1584
    %v1587 = vmul.f32 %v1580, %v1585
    %1589 = vrot.lane.b32.xlu0 %v1587, 32
    %v1590 = vpop.permute.xlu0 %1589
    %v1592 = vadd.f32 %v1582, %v1590
    %v1593 = vtanh.pop %v1592
    %1595 = vrot.lane.b32.xlu0 %v1593, 64
    %v1596 = vpop.permute.xlu0 %1595
    %v1598 = vmul.f32 %v1580, %v1596
    %v1599 = vpack.c.bf16 %v1598, %v1598
    %v1600 = vld [vmem:[%s8] sm:$0xf]
    %v1601 = vld [vmem:[%s8 + $0x4] sm:$0xf]
    %v1602 = vld [vmem:[%s8 + $0x8] sm:$0xf]
    %v1603 = vld [vmem:[%s8 + $0xc] sm:$0xf]
    %v1604 = vld [vmem:[%s9] sm:$0x1]
    %v1606 = vperm.slane %v1604, 0
    %1609 = vrot.lane.b32.xlu0 %v1599, 32
    %v1610 = vpop.permute.xlu0 %1609
    %v1615 = vunpack.c.l.b16 %v1600
    %v1616 = vunpack.c.l.b16 %v1601
    %v1617 = vunpack.c.l.b16 %v1602
    %v1618 = vunpack.c.l.b16 %v1603
    %v1619 = vpack.c.b16 %v1616, %v1615
    %v1620 = vpack.c.b16 %v1618, %v1617
    %v1624 = vsel %vm796, %v1610, 0
    %1626 = vmatpush.bf16.msra.mxu0 0
    %1627 = vmatpush.bf16.msra.mxu0 0
    %1628 = vmatpush.bf16.msra.mxu0 0
    %1629 = vmatpush.bf16.msra.mxu0 0
    %1630 = vmatpush.bf16.msra.mxu0 0
    %1631 = vmatpush.bf16.msra.mxu0 0
    %1632 = vmatpush.bf16.msra.mxu0 %v1620
    %1633 = vmatpush.bf16.msra.mxu0 %v1619
    %1634 = vmatmul.bf16.gmra.mxu0 %v1624
    %v1635 = vpop.f32.mrf.mxu0
    %v1636 = vadd.f32 %v1606, %v1635
    %v1637 = vpop.f32.mrf.mxu0
    %1638 = vdwg.mxu0
    %vm1639 = vcmask 64512
    %v1640 = vsel %vm1639, %v1636, -inf
    %1641 = vmax.xlane.f32.xlu0 %v1640
    %v1642 = vpop.xlane.xlu0 %1641
    %v1643 = vsub.f32 %v1636, %v1642
    %v1644 = vmul.f32 %v1643, 1.442695
    %v1645 = vpow.pop %v1644
    %v1646 = vsel %vm1639, %v1645, 0.0
    %1647 = vadd.xlane.f32.xlu0 %v1646
    %v1648 = vpop.xlane.xlu0 %1647
    %v1649 = vlog2.pop %v1648
    %v1650 = vmul.f32 %v1649, 0.6931472
    %v1651 = vsub.f32 %v1643, %v1650
    %1652 = vst.msk [vmem:[%s10] sm:$0xff] %vm1639, %v1651
    // Predicated region
    $region522: #{lstm_forward.1} parent=1 // pred_check
      _
    $region523: #{lstm_forward.1} parent=1 // pred_check_branch
      %1654 = sbr.rel (0) target = $region525
    $region524: #{lstm_forward.1} parent=1 // pred_region
      _
    $region525: #{lstm_forward.1} parent=1 // pred_fallthru
      _
    // Predicated region
    $region526: #{lstm_forward.1} parent=1 // pred_check
      _
    $region527: #{lstm_forward.1} parent=1 // pred_check_branch
      %1656 = sbr.rel (0) target = $region529
    $region528: #{lstm_forward.1} parent=1 // pred_region
      _
    $region529: #{lstm_forward.1} parent=1 // pred_fallthru
      _
    %1657 = vsyncpa [#allocation6], 1
  %1658 = vsyncmov [#allocation4]
  %s1659 = vpop.sfrf %1658
  %p1660 = scmp.eq.s32.totalorder %s1659, 0
  %p1661 = pneg %p1660
  %1663 = shalt.err (%p1661)
  %s1664 = scalar_lea.sflag [#allocation4], 1
  %1665 = vsyncmov %s1664
  %s1666 = vpop.sfrf %1665
  %p1667 = scmp.eq.s32.totalorder %s1666, 0
  %p1668 = pneg %p1667
  %1670 = shalt.err (%p1668)
  %s1671 = scalar_lea.sflag [#allocation4], 2
  %1672 = vsyncmov %s1671
  %s1673 = vpop.sfrf %1672
  %p1674 = scmp.eq.s32.totalorder %s1673, 0
  %p1675 = pneg %p1674
  %1677 = shalt.err (%p1675)
  %s1678 = scalar_lea.sflag [#allocation4], 3
  %1679 = vsyncmov %s1678
  %s1680 = vpop.sfrf %1679
  %p1681 = scmp.eq.s32.totalorder %s1680, 0
  %p1682 = pneg %p1681
  %1684 = shalt.err (%p1682)
  %s1685 = scalar_lea.sflag [#allocation4], 4
  %1686 = vsyncmov %s1685
  %s1687 = vpop.sfrf %1686
  %p1688 = scmp.eq.s32.totalorder %s1687, 0
  %p1689 = pneg %p1688
  %1691 = shalt.err (%p1689)
  %s1692 = scalar_lea.sflag [#allocation4], 5
  %1693 = vsyncmov %s1692
  %s1694 = vpop.sfrf %1693
  %p1695 = scmp.eq.s32.totalorder %s1694, 0
  %p1696 = pneg %p1695
  %1698 = shalt.err (%p1696)
  %s1699 = scalar_lea.sflag [#allocation4], 6
  %1700 = vsyncmov %s1699
  %s1701 = vpop.sfrf %1700
  %p1702 = scmp.eq.s32.totalorder %s1701, 0
  %p1703 = pneg %p1702
  %1705 = shalt.err (%p1703)
  %s1706 = scalar_lea.sflag [#allocation4], 7
  %1707 = vsyncmov %s1706
  %s1708 = vpop.sfrf %1707
  %p1709 = scmp.eq.s32.totalorder %s1708, 0
  %p1710 = pneg %p1709
  %1712 = shalt.err (%p1710)
  %s1713 = scalar_lea.sflag [#allocation4], 8
  %1714 = vsyncmov %s1713
  %s1715 = vpop.sfrf %1714
  %p1716 = scmp.eq.s32.totalorder %s1715, 0
  %p1717 = pneg %p1716
  %1719 = shalt.err (%p1717)
  %s1720 = scalar_lea.sflag [#allocation4], 9
  %1721 = vsyncmov %s1720
  %s1722 = vpop.sfrf %1721
  %p1723 = scmp.eq.s32.totalorder %s1722, 0
  %p1724 = pneg %p1723
  %1726 = shalt.err (%p1724)
  %s1727 = scalar_lea.sflag [#allocation4], 10
  %1728 = vsyncmov %s1727
  %s1729 = vpop.sfrf %1728
  %p1730 = scmp.eq.s32.totalorder %s1729, 0
  %p1731 = pneg %p1730
  %1733 = shalt.err (%p1731)
  %s1734 = scalar_lea.sflag [#allocation4], 11
  %1735 = vsyncmov %s1734
  %s1736 = vpop.sfrf %1735
  %p1737 = scmp.eq.s32.totalorder %s1736, 0
  %p1738 = pneg %p1737
  %1740 = shalt.err (%p1738)
  %s1741 = scalar_lea.sflag [#allocation4], 12
  %1742 = vsyncmov %s1741
  %s1743 = vpop.sfrf %1742
  %p1744 = scmp.eq.s32.totalorder %s1743, 0
  %p1745 = pneg %p1744
  %1747 = shalt.err (%p1745)
  %s1748 = scalar_lea.sflag [#allocation4], 13
  %1749 = vsyncmov %s1748
  %s1750 = vpop.sfrf %1749
  %p1751 = scmp.eq.s32.totalorder %s1750, 0
  %p1752 = pneg %p1751
  %1754 = shalt.err (%p1752)
  %s1755 = scalar_lea.sflag [#allocation4], 14
  %1756 = vsyncmov %s1755
  %s1757 = vpop.sfrf %1756
  %p1758 = scmp.eq.s32.totalorder %s1757, 0
  %p1759 = pneg %p1758
  %1761 = shalt.err (%p1759)
  %s1762 = scalar_lea.sflag [#allocation4], 15
  %1763 = vsyncmov %s1762
  %s1764 = vpop.sfrf %1763
  %p1765 = scmp.eq.s32.totalorder %s1764, 0
  %p1766 = pneg %p1765
  %1768 = shalt.err (%p1766)

</llo_original>
